<compile_context>
chip_gen: v6e
topology: v6e:2x2x1
jax: 0.10.0
libtpu: 0.0.40
codegen_flags: <defaults>
</compile_context>

<pallas_src>
import functools

import jax
import jax.numpy as jnp
from jax.experimental import pallas as pl
from jax.experimental.pallas import tpu as pltpu

_VMEM_LIMIT = 32 * 1024 * 1024


def _round_up(x, m):
    return (x + m - 1) // m * m


# ----------------------------- Pallas kernels ------------------------------

def _conv_taps_kernel(x_ref, w_ref, b_ref, o_ref, *, R, OWp, M, slope):
    """Stride-1 conv as a sum of R row-tap matmuls, accumulated in f32.

    x_ref: (Hi*OWp, K)  bf16  -- W-window-expanded rows of one image
    w_ref: (R, K, OCp)  bf16  -- per-row-tap weight matrices
    b_ref: (1, OCp)     f32
    o_ref: (M, OCp)           -- M = OH * OWp flattened output rows
    """
    acc = jnp.dot(x_ref[pl.ds(0, M), :], w_ref[0],
                  preferred_element_type=jnp.float32)
    for a in range(1, R):
        acc = acc + jnp.dot(x_ref[pl.ds(a * OWp, M), :], w_ref[a],
                            preferred_element_type=jnp.float32)
    acc = acc + b_ref[...]
    if slope is not None:            # fused LeakyReLU(negative_slope=slope)
        acc = jnp.where(acc > 0, acc, slope * acc)
    o_ref[...] = acc.astype(o_ref.dtype)


def _inorm_lrelu_kernel(x_ref, o_ref, *, eps, slope):
    """InstanceNorm2d(affine=False) + LeakyReLU for one (image, channel-tile).

    x_ref/o_ref: (HW, tc); per-channel mean/var over HW (one pass, biased).
    """
    x = x_ref[...].astype(jnp.float32)
    mean = jnp.mean(x, axis=0, keepdims=True)
    var = jnp.maximum(jnp.mean(x * x, axis=0, keepdims=True) - mean * mean, 0.0)
    y = (x - mean) * jax.lax.rsqrt(var + eps)
    o_ref[...] = jnp.where(y > 0, y, slope * y).astype(o_ref.dtype)


# ------------------------------ layer wrappers ------------------------------

def conv2d(x, w, b, stride, slope=None, out_dtype=jnp.bfloat16):
    """4x4 conv, padding=1, stride in {1,2}.  x: (N,H,W,C), w: (4,4,C,OC)."""
    N, H, W, C = x.shape
    KH, KW, IC, OC = w.shape
    assert (KH, KW) == (4, 4) and IC == C

    xp = jnp.pad(x, ((0, 0), (1, 1), (1, 1), (0, 0)))
    if stride == 2:
        # Space-to-depth(2): 4x4/stride-2 conv == 2x2/stride-1 conv on 4*C
        # channels.  Pure reshape/transpose, no HBM expansion.
        assert H % 2 == 0 and W % 2 == 0, "stride-2 layers require even H, W"
        Hp, Wp = H + 2, W + 2
        x1 = xp.reshape(N, Hp // 2, 2, Wp // 2, 2, C)
        x1 = x1.transpose(0, 1, 3, 2, 4, 5).reshape(N, Hp // 2, Wp // 2, 4 * C)
        wg = w.reshape(2, 2, 2, 2, IC, OC).transpose(0, 2, 1, 3, 4, 5)
        wg = wg.reshape(2, 2, 4 * IC, OC)
        R = S = 2
    else:
        x1, wg, R, S = xp, w, 4, 4

    _, Hi, Wi, Ci = x1.shape
    OH, OW = Hi - R + 1, Wi - S + 1
    OWp = _round_up(OW, 8)        # 8-aligned in-kernel row taps, unmasked sublanes
    OCp = _round_up(OC, 128)      # lane-dense output stores
    K = S * Ci
    M = OH * OWp

    # W-direction window expansion (S contiguous shifts, channel order (kw,c));
    # the R row (H) shifts are taken inside the kernel from one VMEM block.
    xw = jnp.concatenate([x1[:, :, kw:kw + OW, :] for kw in range(S)], axis=-1)
    xw = jnp.pad(xw, ((0, 0), (0, 0), (0, OWp - OW), (0, 0)))
    xw = xw.astype(jnp.bfloat16).reshape(N, Hi * OWp, K)

    wk = jnp.pad(wg.reshape(R, K, OC).astype(jnp.bfloat16),
                 ((0, 0), (0, 0), (0, OCp - OC)))
    bk = jnp.pad(b.astype(jnp.float32), (0, OCp - OC)).reshape(1, OCp)

    out = pl.pallas_call(
        functools.partial(_conv_taps_kernel, R=R, OWp=OWp, M=M, slope=slope),
        out_shape=jax.ShapeDtypeStruct((N, M, OCp), out_dtype),
        grid=(N,),
        in_specs=[
            pl.BlockSpec((None, Hi * OWp, K), lambda n: (n, 0, 0)),
            pl.BlockSpec((R, K, OCp), lambda n: (0, 0, 0)),
            pl.BlockSpec((1, OCp), lambda n: (0, 0)),
        ],
        out_specs=pl.BlockSpec((None, M, OCp), lambda n: (n, 0, 0)),
        compiler_params=pltpu.CompilerParams(
            dimension_semantics=("parallel",),
            vmem_limit_bytes=_VMEM_LIMIT),
    )(xw, wk, bk)

    # TODO(synk): for very large images add halo row-band tiling (pl.Element or
    # manual DMA) instead of one full-image block per sample.
    return out.reshape(N, OH, OWp, OCp)[:, :, :OW, :OC]


def instance_norm_lrelu(x_nhwc, eps=1e-5, slope=0.2, out_dtype=jnp.bfloat16):
    N, H, W, C = x_nhwc.shape
    HW = H * W
    x = x_nhwc.reshape(N, HW, C)
    tc = 128 if C % 128 == 0 else C
    out = pl.pallas_call(
        functools.partial(_inorm_lrelu_kernel, eps=eps, slope=slope),
        out_shape=jax.ShapeDtypeStruct((N, HW, C), out_dtype),
        grid=(N, C // tc),
        in_specs=[pl.BlockSpec((None, HW, tc), lambda n, c: (n, 0, c))],
        out_specs=pl.BlockSpec((None, HW, tc), lambda n, c: (n, 0, c)),
        compiler_params=pltpu.CompilerParams(
            dimension_semantics=("parallel", "parallel"),
            vmem_limit_bytes=_VMEM_LIMIT),
    )(x)
    return out.reshape(N, H, W, C)


# ------------------------------ Discriminator -------------------------------

def init_discriminator_params(key, in_channels, out_features=64):
    # (in_c, out_c, stride) matching networks.Discriminator.__init__
    specs = []
    c, f = in_channels, out_features
    specs.append((c, f, 2))            # conv1 (no norm) + LeakyReLU
    c = f
    for _ in range(1, 3):              # num_layers = 3
        specs.append((c, c * 2, 2))    # conv + InstanceNorm + LeakyReLU
        c *= 2
    specs.append((c, c * 2, 1))        # stride-1 conv + InstanceNorm + LeakyReLU
    c *= 2
    specs.append((c, 1, 1))            # final 1-channel conv
    params = []
    for ic, oc, stride in specs:
        key, k_w, k_b = jax.random.split(key, 3)
        fan_in = ic * 4 * 4
        w = jax.random.normal(k_w, (4, 4, ic, oc), jnp.float32) / jnp.sqrt(fan_in)
        b = jax.random.normal(k_b, (oc,), jnp.float32) * 0.01
        params.append((w, b, stride))
    return params


def discriminator_forward(params, x_nchw):
    x = jnp.transpose(x_nchw, (0, 2, 3, 1)).astype(jnp.float32)   # NCHW -> NHWC
    w, b, s = params[0]
    x = conv2d(x, w, b, s, slope=0.2, out_dtype=jnp.bfloat16)     # fused LReLU
    for w, b, s in params[1:4]:                                   # conv -> IN -> LReLU
        x = conv2d(x, w, b, s, slope=None, out_dtype=jnp.bfloat16)
        x = instance_norm_lrelu(x, eps=1e-5, slope=0.2, out_dtype=jnp.bfloat16)
    w, b, s = params[4]                                           # final conv
    x = conv2d(x, w, b, s, slope=None, out_dtype=jnp.float32)
    return jnp.transpose(x, (0, 3, 1, 2))                         # NHWC -> NCHW


# ------------------------- pure-JAX f32 reference ---------------------------

def _ref_conv2d(x, w, b, stride):
    KH, KW, IC, OC = w.shape
    xp = jnp.pad(x, ((0, 0), (1, 1), (1, 1), (0, 0)))
    N, Hp, Wp, C = xp.shape
    OH = (Hp - KH) // stride + 1
    OW = (Wp - KW) // stride + 1
    cols = [xp[:, i:i + stride * OH:stride, j:j + stride * OW:stride, :]
            for i in range(KH) for j in range(KW)]
    p = jnp.stack(cols, axis=3).reshape(N, OH, OW, KH * KW * C)
    return p @ w.reshape(KH * KW * IC, OC) + b


def _ref_forward(params, x_nchw):
    x = jnp.transpose(x_nchw, (0, 2, 3, 1)).astype(jnp.float32)
    lrelu = lambda v: jnp.where(v > 0, v, 0.2 * v)
    w, b, s = params[0]
    x = lrelu(_ref_conv2d(x, w, b, s))
    for w, b, s in params[1:4]:
        x = _ref_conv2d(x, w, b, s)
        mean = x.mean(axis=(1, 2), keepdims=True)
        var = ((x - mean) ** 2).mean(axis=(1, 2), keepdims=True)
        x = lrelu((x - mean) * jax.lax.rsqrt(var + 1e-5))
    w, b, s = params[4]
    x = _ref_conv2d(x, w, b, s)
    return jnp.transpose(x, (0, 3, 1, 2))


if __name__ == "__main__":
    key = jax.random.PRNGKey(0)
    kx, kp = jax.random.split(key)
    in_channels, out_features = 3, 8          # small but structurally faithful
    x = jax.random.normal(kx, (2, in_channels, 32, 32), jnp.float32)
    params = init_discriminator_params(kp, in_channels, out_features)

    fwd = jax.jit(lambda inp: discriminator_forward(params, inp))
    y = fwd(x)
    jax.block_until_ready(y)

    # 32 -> 16 -> 8 -> 4 (stride-2 convs) -> 3 -> 2 (stride-1 convs)
    assert y.shape == (2, 1, 2, 2), y.shape
    assert y.dtype == jnp.float32
    assert bool(jnp.all(jnp.isfinite(y)))

    # numerical check vs. pure-JAX reference (bf16 MXU path -> loose tolerance)
    y_ref = _ref_forward(params, x)
    err = float(jnp.max(jnp.abs(y - y_ref)))
    assert err < 0.35, f"max abs err vs reference: {err}"
    print("KERNEL_OK")
</pallas_src>

<mosaic_0001>
module attributes {stable_mosaic.version = 11 : i64} {
  func.func @_conv_taps_kernel(%arg0: i32, %arg1: memref<1x272x24xbf16, #tpu.memory_space<vmem>>, %arg2: memref<2x24x128xbf16, #tpu.memory_space<vmem>>, %arg3: memref<1x128xf32, #tpu.memory_space<vmem>>, %arg4: memref<1x256x128xbf16, #tpu.memory_space<vmem>>) attributes {dimension_semantics = [#tpu.dimension_semantics<parallel>], iteration_bounds = array<i64: 2>, scalar_prefetch = 0 : i64, scratch_operands = 0 : i64, tpu.core_type = #tpu.core_type<tc>, window_params = [{transform_indices = @transform_0, window_bounds = array<i64: 1, 272, 24>}, {pipeline_mode = #tpu.pipeline_mode<synchronous>, transform_indices = @transform_1, window_bounds = array<i64: 2, 24, 128>}, {pipeline_mode = #tpu.pipeline_mode<synchronous>, transform_indices = @transform_2, window_bounds = array<i64: 1, 128>}, {transform_indices = @transform_3, window_bounds = array<i64: 1, 256, 128>}]} {
    %c0 = arith.constant 0 : index
    %c0_0 = arith.constant 0 : index
    %c0_1 = arith.constant 0 : index
    %0 = vector.load %arg1[%c0, %c0_0, %c0_1] : memref<1x272x24xbf16, #tpu.memory_space<vmem>>, vector<1x256x24xbf16>
    %1 = vector.shape_cast %0 : vector<1x256x24xbf16> to vector<256x24xbf16>
    %c0_2 = arith.constant 0 : index
    %c0_3 = arith.constant 0 : index
    %c0_4 = arith.constant 0 : index
    %2 = vector.load %arg2[%c0_2, %c0_3, %c0_4] : memref<2x24x128xbf16, #tpu.memory_space<vmem>>, vector<1x24x128xbf16>
    %3 = vector.shape_cast %2 : vector<1x24x128xbf16> to vector<24x128xbf16>
    %cst = arith.constant dense<0.000000e+00> : vector<256x128xf32>
    %4 = tpu.matmul %1, %3, %cst {dimension_numbers = #tpu.dot_dimension_numbers<[1], [0], [0], [1], [0, 0, 1, 1], [], []>} : vector<256x24xbf16>, vector<24x128xbf16>, vector<256x128xf32> -> vector<256x128xf32>
    %c0_5 = arith.constant 0 : index
    %c16 = arith.constant 16 : index
    %c0_6 = arith.constant 0 : index
    %5 = vector.load %arg1[%c0_5, %c16, %c0_6] : memref<1x272x24xbf16, #tpu.memory_space<vmem>>, vector<1x256x24xbf16>
    %6 = vector.shape_cast %5 : vector<1x256x24xbf16> to vector<256x24xbf16>
    %c1 = arith.constant 1 : index
    %c0_7 = arith.constant 0 : index
    %c0_8 = arith.constant 0 : index
    %7 = vector.load %arg2[%c1, %c0_7, %c0_8] : memref<2x24x128xbf16, #tpu.memory_space<vmem>>, vector<1x24x128xbf16>
    %8 = vector.shape_cast %7 : vector<1x24x128xbf16> to vector<24x128xbf16>
    %cst_9 = arith.constant dense<0.000000e+00> : vector<256x128xf32>
    %9 = tpu.matmul %6, %8, %cst_9 {dimension_numbers = #tpu.dot_dimension_numbers<[1], [0], [0], [1], [0, 0, 1, 1], [], []>} : vector<256x24xbf16>, vector<24x128xbf16>, vector<256x128xf32> -> vector<256x128xf32>
    %10 = arith.addf %4, %9 : vector<256x128xf32>
    %c0_10 = arith.constant 0 : index
    %c0_11 = arith.constant 0 : index
    %11 = vector.load %arg3[%c0_10, %c0_11] : memref<1x128xf32, #tpu.memory_space<vmem>>, vector<1x128xf32>
    %12 = vector.broadcast %11 : vector<1x128xf32> to vector<256x128xf32>
    %13 = arith.addf %10, %12 : vector<256x128xf32>
    %cst_12 = arith.constant 0.000000e+00 : f32
    %14 = vector.broadcast %cst_12 : f32 to vector<256x128xf32>
    %15 = arith.cmpf ogt, %13, %14 : vector<256x128xf32>
    %cst_13 = arith.constant 2.000000e-01 : f32
    %16 = vector.broadcast %cst_13 : f32 to vector<256x128xf32>
    %17 = arith.mulf %16, %13 : vector<256x128xf32>
    %18 = arith.select %15, %13, %17 : vector<256x128xi1>, vector<256x128xf32>
    %19 = arith.truncf %18 : vector<256x128xf32> to vector<256x128xbf16>
    %c0_14 = arith.constant 0 : index
    %c0_15 = arith.constant 0 : index
    %c0_16 = arith.constant 0 : index
    %20 = vector.load %arg4[%c0_14, %c0_15, %c0_16] : memref<1x256x128xbf16, #tpu.memory_space<vmem>>, vector<1x256x128xbf16>
    %21 = vector.shape_cast %20 : vector<1x256x128xbf16> to vector<256x128xbf16>
    %22 = vector.shape_cast %19 : vector<256x128xbf16> to vector<1x256x128xbf16>
    tpu.vector_store %arg4[%c0_14, %c0_15, %c0_16], %22 {strides = array<i32>} : memref<1x256x128xbf16, #tpu.memory_space<vmem>>, vector<1x256x128xbf16>,
    return
  }
  func.func @transform_0(%arg0: i32) -> (i32, i32, i32) {
    %c0_i32 = arith.constant 0 : i32
    %c0_i32_0 = arith.constant 0 : i32
    %c0_i32_1 = arith.constant 0 : i32
    return %arg0, %c0_i32, %c0_i32_0 : i32, i32, i32
  }
  func.func @transform_1(%arg0: i32) -> (i32, i32, i32) {
    %c0_i32 = arith.constant 0 : i32
    %c0_i32_0 = arith.constant 0 : i32
    %c0_i32_1 = arith.constant 0 : i32
    %c0_i32_2 = arith.constant 0 : i32
    return %c0_i32, %c0_i32_0, %c0_i32_1 : i32, i32, i32
  }
  func.func @transform_2(%arg0: i32) -> (i32, i32) {
    %c0_i32 = arith.constant 0 : i32
    %c0_i32_0 = arith.constant 0 : i32
    %c0_i32_1 = arith.constant 0 : i32
    return %c0_i32, %c0_i32_0 : i32, i32
  }
  func.func @transform_3(%arg0: i32) -> (i32, i32, i32) {
    %c0_i32 = arith.constant 0 : i32
    %c0_i32_0 = arith.constant 0 : i32
    %c0_i32_1 = arith.constant 0 : i32
    return %arg0, %c0_i32, %c0_i32_0 : i32, i32, i32
  }
}

module attributes {stable_mosaic.version = 11 : i64} {
  func.func @_conv_taps_kernel(%arg0: i32, %arg1: memref<1x72x64xbf16, #tpu.memory_space<vmem>>, %arg2: memref<2x64x128xbf16, #tpu.memory_space<vmem>>, %arg3: memref<1x128xf32, #tpu.memory_space<vmem>>, %arg4: memref<1x64x128xbf16, #tpu.memory_space<vmem>>) attributes {dimension_semantics = [#tpu.dimension_semantics<parallel>], iteration_bounds = array<i64: 2>, scalar_prefetch = 0 : i64, scratch_operands = 0 : i64, tpu.core_type = #tpu.core_type<tc>, window_params = [{transform_indices = @transform_0, window_bounds = array<i64: 1, 72, 64>}, {pipeline_mode = #tpu.pipeline_mode<synchronous>, transform_indices = @transform_1, window_bounds = array<i64: 2, 64, 128>}, {pipeline_mode = #tpu.pipeline_mode<synchronous>, transform_indices = @transform_2, window_bounds = array<i64: 1, 128>}, {transform_indices = @transform_3, window_bounds = array<i64: 1, 64, 128>}]} {
    %c0 = arith.constant 0 : index
    %c0_0 = arith.constant 0 : index
    %c0_1 = arith.constant 0 : index
    %0 = vector.load %arg1[%c0, %c0_0, %c0_1] : memref<1x72x64xbf16, #tpu.memory_space<vmem>>, vector<1x64x64xbf16>
    %1 = vector.shape_cast %0 : vector<1x64x64xbf16> to vector<64x64xbf16>
    %c0_2 = arith.constant 0 : index
    %c0_3 = arith.constant 0 : index
    %c0_4 = arith.constant 0 : index
    %2 = vector.load %arg2[%c0_2, %c0_3, %c0_4] : memref<2x64x128xbf16, #tpu.memory_space<vmem>>, vector<1x64x128xbf16>
    %3 = vector.shape_cast %2 : vector<1x64x128xbf16> to vector<64x128xbf16>
    %cst = arith.constant dense<0.000000e+00> : vector<64x128xf32>
    %4 = tpu.matmul %1, %3, %cst {dimension_numbers = #tpu.dot_dimension_numbers<[1], [0], [0], [1], [0, 0, 1, 1], [], []>} : vector<64x64xbf16>, vector<64x128xbf16>, vector<64x128xf32> -> vector<64x128xf32>
    %c0_5 = arith.constant 0 : index
    %c8 = arith.constant 8 : index
    %c0_6 = arith.constant 0 : index
    %5 = vector.load %arg1[%c0_5, %c8, %c0_6] : memref<1x72x64xbf16, #tpu.memory_space<vmem>>, vector<1x64x64xbf16>
    %6 = vector.shape_cast %5 : vector<1x64x64xbf16> to vector<64x64xbf16>
    %c1 = arith.constant 1 : index
    %c0_7 = arith.constant 0 : index
    %c0_8 = arith.constant 0 : index
    %7 = vector.load %arg2[%c1, %c0_7, %c0_8] : memref<2x64x128xbf16, #tpu.memory_space<vmem>>, vector<1x64x128xbf16>
    %8 = vector.shape_cast %7 : vector<1x64x128xbf16> to vector<64x128xbf16>
    %cst_9 = arith.constant dense<0.000000e+00> : vector<64x128xf32>
    %9 = tpu.matmul %6, %8, %cst_9 {dimension_numbers = #tpu.dot_dimension_numbers<[1], [0], [0], [1], [0, 0, 1, 1], [], []>} : vector<64x64xbf16>, vector<64x128xbf16>, vector<64x128xf32> -> vector<64x128xf32>
    %10 = arith.addf %4, %9 : vector<64x128xf32>
    %c0_10 = arith.constant 0 : index
    %c0_11 = arith.constant 0 : index
    %11 = vector.load %arg3[%c0_10, %c0_11] : memref<1x128xf32, #tpu.memory_space<vmem>>, vector<1x128xf32>
    %12 = vector.broadcast %11 : vector<1x128xf32> to vector<64x128xf32>
    %13 = arith.addf %10, %12 : vector<64x128xf32>
    %14 = arith.truncf %13 : vector<64x128xf32> to vector<64x128xbf16>
    %c0_12 = arith.constant 0 : index
    %c0_13 = arith.constant 0 : index
    %c0_14 = arith.constant 0 : index
    %15 = vector.load %arg4[%c0_12, %c0_13, %c0_14] : memref<1x64x128xbf16, #tpu.memory_space<vmem>>, vector<1x64x128xbf16>
    %16 = vector.shape_cast %15 : vector<1x64x128xbf16> to vector<64x128xbf16>
    %17 = vector.shape_cast %14 : vector<64x128xbf16> to vector<1x64x128xbf16>
    tpu.vector_store %arg4[%c0_12, %c0_13, %c0_14], %17 {strides = array<i32>} : memref<1x64x128xbf16, #tpu.memory_space<vmem>>, vector<1x64x128xbf16>,
    return
  }
  func.func @transform_0(%arg0: i32) -> (i32, i32, i32) {
    %c0_i32 = arith.constant 0 : i32
    %c0_i32_0 = arith.constant 0 : i32
    %c0_i32_1 = arith.constant 0 : i32
    return %arg0, %c0_i32, %c0_i32_0 : i32, i32, i32
  }
  func.func @transform_1(%arg0: i32) -> (i32, i32, i32) {
    %c0_i32 = arith.constant 0 : i32
    %c0_i32_0 = arith.constant 0 : i32
    %c0_i32_1 = arith.constant 0 : i32
    %c0_i32_2 = arith.constant 0 : i32
    return %c0_i32, %c0_i32_0, %c0_i32_1 : i32, i32, i32
  }
  func.func @transform_2(%arg0: i32) -> (i32, i32) {
    %c0_i32 = arith.constant 0 : i32
    %c0_i32_0 = arith.constant 0 : i32
    %c0_i32_1 = arith.constant 0 : i32
    return %c0_i32, %c0_i32_0 : i32, i32
  }
  func.func @transform_3(%arg0: i32) -> (i32, i32, i32) {
    %c0_i32 = arith.constant 0 : i32
    %c0_i32_0 = arith.constant 0 : i32
    %c0_i32_1 = arith.constant 0 : i32
    return %arg0, %c0_i32, %c0_i32_0 : i32, i32, i32
  }
}

module attributes {stable_mosaic.version = 11 : i64} {
  func.func @_inorm_lrelu_kernel(%arg0: i32, %arg1: i32, %arg2: memref<1x64x16xbf16, #tpu.memory_space<vmem>>, %arg3: memref<1x64x16xbf16, #tpu.memory_space<vmem>>) attributes {dimension_semantics = [#tpu.dimension_semantics<parallel>, #tpu.dimension_semantics<parallel>], iteration_bounds = array<i64: 2, 1>, scalar_prefetch = 0 : i64, scratch_operands = 0 : i64, tpu.core_type = #tpu.core_type<tc>, window_params = [{transform_indices = @transform_0, window_bounds = array<i64: 1, 64, 16>}, {transform_indices = @transform_1, window_bounds = array<i64: 1, 64, 16>}]} {
    %c0 = arith.constant 0 : index
    %c0_0 = arith.constant 0 : index
    %c0_1 = arith.constant 0 : index
    %0 = vector.load %arg2[%c0, %c0_0, %c0_1] : memref<1x64x16xbf16, #tpu.memory_space<vmem>>, vector<1x64x16xbf16>
    %1 = vector.shape_cast %0 : vector<1x64x16xbf16> to vector<64x16xbf16>
    %2 = arith.extf %1 : vector<64x16xbf16> to vector<64x16xf32>
    %cst = arith.constant dense<0.000000e+00> : vector<16xf32>
    %3 = vector.multi_reduction <add>, %2, %cst [0] : vector<64x16xf32> to vector<16xf32>
    %4 = vector.shape_cast %3 : vector<16xf32> to vector<1x16xf32>
    %cst_2 = arith.constant 6.400000e+01 : f32
    %5 = vector.broadcast %cst_2 : f32 to vector<1x16xf32>
    %6 = arith.divf %4, %5 : vector<1x16xf32>
    %7 = arith.mulf %2, %2 : vector<64x16xf32>
    %cst_3 = arith.constant dense<0.000000e+00> : vector<16xf32>
    %8 = vector.multi_reduction <add>, %7, %cst_3 [0] : vector<64x16xf32> to vector<16xf32>
    %9 = vector.shape_cast %8 : vector<16xf32> to vector<1x16xf32>
    %cst_4 = arith.constant 6.400000e+01 : f32
    %10 = vector.broadcast %cst_4 : f32 to vector<1x16xf32>
    %11 = arith.divf %9, %10 : vector<1x16xf32>
    %12 = arith.mulf %6, %6 : vector<1x16xf32>
    %13 = arith.subf %11, %12 : vector<1x16xf32>
    %cst_5 = arith.constant 0.000000e+00 : f32
    %14 = vector.broadcast %cst_5 : f32 to vector<1x16xf32>
    %15 = arith.maximumf %13, %14 : vector<1x16xf32>
    %16 = vector.broadcast %6 : vector<1x16xf32> to vector<64x16xf32>
    %17 = arith.subf %2, %16 : vector<64x16xf32>
    %cst_6 = arith.constant 9.99999974E-6 : f32
    %18 = vector.broadcast %cst_6 : f32 to vector<1x16xf32>
    %19 = arith.addf %15, %18 : vector<1x16xf32>
    %20 = math.rsqrt %19 : vector<1x16xf32>
    %21 = vector.broadcast %20 : vector<1x16xf32> to vector<64x16xf32>
    %22 = arith.mulf %17, %21 : vector<64x16xf32>
    %cst_7 = arith.constant 0.000000e+00 : f32
    %23 = vector.broadcast %cst_7 : f32 to vector<64x16xf32>
    %24 = arith.cmpf ogt, %22, %23 : vector<64x16xf32>
    %cst_8 = arith.constant 2.000000e-01 : f32
    %25 = vector.broadcast %cst_8 : f32 to vector<64x16xf32>
    %26 = arith.mulf %25, %22 : vector<64x16xf32>
    %27 = arith.select %24, %22, %26 : vector<64x16xi1>, vector<64x16xf32>
    %28 = arith.truncf %27 : vector<64x16xf32> to vector<64x16xbf16>
    %c0_9 = arith.constant 0 : index
    %c0_10 = arith.constant 0 : index
    %c0_11 = arith.constant 0 : index
    %29 = vector.load %arg3[%c0_9, %c0_10, %c0_11] : memref<1x64x16xbf16, #tpu.memory_space<vmem>>, vector<1x64x16xbf16>
    %30 = vector.shape_cast %29 : vector<1x64x16xbf16> to vector<64x16xbf16>
    %31 = vector.shape_cast %28 : vector<64x16xbf16> to vector<1x64x16xbf16>
    tpu.vector_store %arg3[%c0_9, %c0_10, %c0_11], %31 {strides = array<i32>} : memref<1x64x16xbf16, #tpu.memory_space<vmem>>, vector<1x64x16xbf16>,
    return
  }
  func.func @transform_0(%arg0: i32, %arg1: i32) -> (i32, i32, i32) {
    %c0_i32 = arith.constant 0 : i32
    %c0_i32_0 = arith.constant 0 : i32
    return %arg0, %c0_i32, %arg1 : i32, i32, i32
  }
  func.func @transform_1(%arg0: i32, %arg1: i32) -> (i32, i32, i32) {
    %c0_i32 = arith.constant 0 : i32
    %c0_i32_0 = arith.constant 0 : i32
    return %arg0, %c0_i32, %arg1 : i32, i32, i32
  }
}

module attributes {stable_mosaic.version = 11 : i64} {
  func.func @_conv_taps_kernel(%arg0: i32, %arg1: memref<1x40x128xbf16, #tpu.memory_space<vmem>>, %arg2: memref<2x128x128xbf16, #tpu.memory_space<vmem>>, %arg3: memref<1x128xf32, #tpu.memory_space<vmem>>, %arg4: memref<1x32x128xbf16, #tpu.memory_space<vmem>>) attributes {dimension_semantics = [#tpu.dimension_semantics<parallel>], iteration_bounds = array<i64: 2>, scalar_prefetch = 0 : i64, scratch_operands = 0 : i64, tpu.core_type = #tpu.core_type<tc>, window_params = [{transform_indices = @transform_0, window_bounds = array<i64: 1, 40, 128>}, {pipeline_mode = #tpu.pipeline_mode<synchronous>, transform_indices = @transform_1, window_bounds = array<i64: 2, 128, 128>}, {pipeline_mode = #tpu.pipeline_mode<synchronous>, transform_indices = @transform_2, window_bounds = array<i64: 1, 128>}, {transform_indices = @transform_3, window_bounds = array<i64: 1, 32, 128>}]} {
    %c0 = arith.constant 0 : index
    %c0_0 = arith.constant 0 : index
    %c0_1 = arith.constant 0 : index
    %0 = vector.load %arg1[%c0, %c0_0, %c0_1] : memref<1x40x128xbf16, #tpu.memory_space<vmem>>, vector<1x32x128xbf16>
    %1 = vector.shape_cast %0 : vector<1x32x128xbf16> to vector<32x128xbf16>
    %c0_2 = arith.constant 0 : index
    %c0_3 = arith.constant 0 : index
    %c0_4 = arith.constant 0 : index
    %2 = vector.load %arg2[%c0_2, %c0_3, %c0_4] : memref<2x128x128xbf16, #tpu.memory_space<vmem>>, vector<1x128x128xbf16>
    %3 = vector.shape_cast %2 : vector<1x128x128xbf16> to vector<128x128xbf16>
    %cst = arith.constant dense<0.000000e+00> : vector<32x128xf32>
    %4 = tpu.matmul %1, %3, %cst {dimension_numbers = #tpu.dot_dimension_numbers<[1], [0], [0], [1], [0, 0, 1, 1], [], []>} : vector<32x128xbf16>, vector<128x128xbf16>, vector<32x128xf32> -> vector<32x128xf32>
    %c0_5 = arith.constant 0 : index
    %c8 = arith.constant 8 : index
    %c0_6 = arith.constant 0 : index
    %5 = vector.load %arg1[%c0_5, %c8, %c0_6] : memref<1x40x128xbf16, #tpu.memory_space<vmem>>, vector<1x32x128xbf16>
    %6 = vector.shape_cast %5 : vector<1x32x128xbf16> to vector<32x128xbf16>
    %c1 = arith.constant 1 : index
    %c0_7 = arith.constant 0 : index
    %c0_8 = arith.constant 0 : index
    %7 = vector.load %arg2[%c1, %c0_7, %c0_8] : memref<2x128x128xbf16, #tpu.memory_space<vmem>>, vector<1x128x128xbf16>
    %8 = vector.shape_cast %7 : vector<1x128x128xbf16> to vector<128x128xbf16>
    %cst_9 = arith.constant dense<0.000000e+00> : vector<32x128xf32>
    %9 = tpu.matmul %6, %8, %cst_9 {dimension_numbers = #tpu.dot_dimension_numbers<[1], [0], [0], [1], [0, 0, 1, 1], [], []>} : vector<32x128xbf16>, vector<128x128xbf16>, vector<32x128xf32> -> vector<32x128xf32>
    %10 = arith.addf %4, %9 : vector<32x128xf32>
    %c0_10 = arith.constant 0 : index
    %c0_11 = arith.constant 0 : index
    %11 = vector.load %arg3[%c0_10, %c0_11] : memref<1x128xf32, #tpu.memory_space<vmem>>, vector<1x128xf32>
    %12 = vector.broadcast %11 : vector<1x128xf32> to vector<32x128xf32>
    %13 = arith.addf %10, %12 : vector<32x128xf32>
    %14 = arith.truncf %13 : vector<32x128xf32> to vector<32x128xbf16>
    %c0_12 = arith.constant 0 : index
    %c0_13 = arith.constant 0 : index
    %c0_14 = arith.constant 0 : index
    %15 = vector.load %arg4[%c0_12, %c0_13, %c0_14] : memref<1x32x128xbf16, #tpu.memory_space<vmem>>, vector<1x32x128xbf16>
    %16 = vector.shape_cast %15 : vector<1x32x128xbf16> to vector<32x128xbf16>
    %17 = vector.shape_cast %14 : vector<32x128xbf16> to vector<1x32x128xbf16>
    tpu.vector_store %arg4[%c0_12, %c0_13, %c0_14], %17 {strides = array<i32>} : memref<1x32x128xbf16, #tpu.memory_space<vmem>>, vector<1x32x128xbf16>,
    return
  }
  func.func @transform_0(%arg0: i32) -> (i32, i32, i32) {
    %c0_i32 = arith.constant 0 : i32
    %c0_i32_0 = arith.constant 0 : i32
    %c0_i32_1 = arith.constant 0 : i32
    return %arg0, %c0_i32, %c0_i32_0 : i32, i32, i32
  }
  func.func @transform_1(%arg0: i32) -> (i32, i32, i32) {
    %c0_i32 = arith.constant 0 : i32
    %c0_i32_0 = arith.constant 0 : i32
    %c0_i32_1 = arith.constant 0 : i32
    %c0_i32_2 = arith.constant 0 : i32
    return %c0_i32, %c0_i32_0, %c0_i32_1 : i32, i32, i32
  }
  func.func @transform_2(%arg0: i32) -> (i32, i32) {
    %c0_i32 = arith.constant 0 : i32
    %c0_i32_0 = arith.constant 0 : i32
    %c0_i32_1 = arith.constant 0 : i32
    return %c0_i32, %c0_i32_0 : i32, i32
  }
  func.func @transform_3(%arg0: i32) -> (i32, i32, i32) {
    %c0_i32 = arith.constant 0 : i32
    %c0_i32_0 = arith.constant 0 : i32
    %c0_i32_1 = arith.constant 0 : i32
    return %arg0, %c0_i32, %c0_i32_0 : i32, i32, i32
  }
}

module attributes {stable_mosaic.version = 11 : i64} {
  func.func @_inorm_lrelu_kernel(%arg0: i32, %arg1: i32, %arg2: memref<1x16x32xbf16, #tpu.memory_space<vmem>>, %arg3: memref<1x16x32xbf16, #tpu.memory_space<vmem>>) attributes {dimension_semantics = [#tpu.dimension_semantics<parallel>, #tpu.dimension_semantics<parallel>], iteration_bounds = array<i64: 2, 1>, scalar_prefetch = 0 : i64, scratch_operands = 0 : i64, tpu.core_type = #tpu.core_type<tc>, window_params = [{transform_indices = @transform_0, window_bounds = array<i64: 1, 16, 32>}, {transform_indices = @transform_1, window_bounds = array<i64: 1, 16, 32>}]} {
    %c0 = arith.constant 0 : index
    %c0_0 = arith.constant 0 : index
    %c0_1 = arith.constant 0 : index
    %0 = vector.load %arg2[%c0, %c0_0, %c0_1] : memref<1x16x32xbf16, #tpu.memory_space<vmem>>, vector<1x16x32xbf16>
    %1 = vector.shape_cast %0 : vector<1x16x32xbf16> to vector<16x32xbf16>
    %2 = arith.extf %1 : vector<16x32xbf16> to vector<16x32xf32>
    %cst = arith.constant dense<0.000000e+00> : vector<32xf32>
    %3 = vector.multi_reduction <add>, %2, %cst [0] : vector<16x32xf32> to vector<32xf32>
    %4 = vector.shape_cast %3 : vector<32xf32> to vector<1x32xf32>
    %cst_2 = arith.constant 1.600000e+01 : f32
    %5 = vector.broadcast %cst_2 : f32 to vector<1x32xf32>
    %6 = arith.divf %4, %5 : vector<1x32xf32>
    %7 = arith.mulf %2, %2 : vector<16x32xf32>
    %cst_3 = arith.constant dense<0.000000e+00> : vector<32xf32>
    %8 = vector.multi_reduction <add>, %7, %cst_3 [0] : vector<16x32xf32> to vector<32xf32>
    %9 = vector.shape_cast %8 : vector<32xf32> to vector<1x32xf32>
    %cst_4 = arith.constant 1.600000e+01 : f32
    %10 = vector.broadcast %cst_4 : f32 to vector<1x32xf32>
    %11 = arith.divf %9, %10 : vector<1x32xf32>
    %12 = arith.mulf %6, %6 : vector<1x32xf32>
    %13 = arith.subf %11, %12 : vector<1x32xf32>
    %cst_5 = arith.constant 0.000000e+00 : f32
    %14 = vector.broadcast %cst_5 : f32 to vector<1x32xf32>
    %15 = arith.maximumf %13, %14 : vector<1x32xf32>
    %16 = vector.broadcast %6 : vector<1x32xf32> to vector<16x32xf32>
    %17 = arith.subf %2, %16 : vector<16x32xf32>
    %cst_6 = arith.constant 9.99999974E-6 : f32
    %18 = vector.broadcast %cst_6 : f32 to vector<1x32xf32>
    %19 = arith.addf %15, %18 : vector<1x32xf32>
    %20 = math.rsqrt %19 : vector<1x32xf32>
    %21 = vector.broadcast %20 : vector<1x32xf32> to vector<16x32xf32>
    %22 = arith.mulf %17, %21 : vector<16x32xf32>
    %cst_7 = arith.constant 0.000000e+00 : f32
    %23 = vector.broadcast %cst_7 : f32 to vector<16x32xf32>
    %24 = arith.cmpf ogt, %22, %23 : vector<16x32xf32>
    %cst_8 = arith.constant 2.000000e-01 : f32
    %25 = vector.broadcast %cst_8 : f32 to vector<16x32xf32>
    %26 = arith.mulf %25, %22 : vector<16x32xf32>
    %27 = arith.select %24, %22, %26 : vector<16x32xi1>, vector<16x32xf32>
    %28 = arith.truncf %27 : vector<16x32xf32> to vector<16x32xbf16>
    %c0_9 = arith.constant 0 : index
    %c0_10 = arith.constant 0 : index
    %c0_11 = arith.constant 0 : index
    %29 = vector.load %arg3[%c0_9, %c0_10, %c0_11] : memref<1x16x32xbf16, #tpu.memory_space<vmem>>, vector<1x16x32xbf16>
    %30 = vector.shape_cast %29 : vector<1x16x32xbf16> to vector<16x32xbf16>
    %31 = vector.shape_cast %28 : vector<16x32xbf16> to vector<1x16x32xbf16>
    tpu.vector_store %arg3[%c0_9, %c0_10, %c0_11], %31 {strides = array<i32>} : memref<1x16x32xbf16, #tpu.memory_space<vmem>>, vector<1x16x32xbf16>,
    return
  }
  func.func @transform_0(%arg0: i32, %arg1: i32) -> (i32, i32, i32) {
    %c0_i32 = arith.constant 0 : i32
    %c0_i32_0 = arith.constant 0 : i32
    return %arg0, %c0_i32, %arg1 : i32, i32, i32
  }
  func.func @transform_1(%arg0: i32, %arg1: i32) -> (i32, i32, i32) {
    %c0_i32 = arith.constant 0 : i32
    %c0_i32_0 = arith.constant 0 : i32
    return %arg0, %c0_i32, %arg1 : i32, i32, i32
  }
}

module attributes {stable_mosaic.version = 11 : i64} {
  func.func @_conv_taps_kernel(%arg0: i32, %arg1: memref<1x48x128xbf16, #tpu.memory_space<vmem>>, %arg2: memref<4x128x128xbf16, #tpu.memory_space<vmem>>, %arg3: memref<1x128xf32, #tpu.memory_space<vmem>>, %arg4: memref<1x24x128xbf16, #tpu.memory_space<vmem>>) attributes {dimension_semantics = [#tpu.dimension_semantics<parallel>], iteration_bounds = array<i64: 2>, scalar_prefetch = 0 : i64, scratch_operands = 0 : i64, tpu.core_type = #tpu.core_type<tc>, window_params = [{transform_indices = @transform_0, window_bounds = array<i64: 1, 48, 128>}, {pipeline_mode = #tpu.pipeline_mode<synchronous>, transform_indices = @transform_1, window_bounds = array<i64: 4, 128, 128>}, {pipeline_mode = #tpu.pipeline_mode<synchronous>, transform_indices = @transform_2, window_bounds = array<i64: 1, 128>}, {transform_indices = @transform_3, window_bounds = array<i64: 1, 24, 128>}]} {
    %c0 = arith.constant 0 : index
    %c0_0 = arith.constant 0 : index
    %c0_1 = arith.constant 0 : index
    %0 = vector.load %arg1[%c0, %c0_0, %c0_1] : memref<1x48x128xbf16, #tpu.memory_space<vmem>>, vector<1x24x128xbf16>
    %1 = vector.shape_cast %0 : vector<1x24x128xbf16> to vector<24x128xbf16>
    %c0_2 = arith.constant 0 : index
    %c0_3 = arith.constant 0 : index
    %c0_4 = arith.constant 0 : index
    %2 = vector.load %arg2[%c0_2, %c0_3, %c0_4] : memref<4x128x128xbf16, #tpu.memory_space<vmem>>, vector<1x128x128xbf16>
    %3 = vector.shape_cast %2 : vector<1x128x128xbf16> to vector<128x128xbf16>
    %cst = arith.constant dense<0.000000e+00> : vector<24x128xf32>
    %4 = tpu.matmul %1, %3, %cst {dimension_numbers = #tpu.dot_dimension_numbers<[1], [0], [0], [1], [0, 0, 1, 1], [], []>} : vector<24x128xbf16>, vector<128x128xbf16>, vector<24x128xf32> -> vector<24x128xf32>
    %c0_5 = arith.constant 0 : index
    %c8 = arith.constant 8 : index
    %c0_6 = arith.constant 0 : index
    %5 = vector.load %arg1[%c0_5, %c8, %c0_6] : memref<1x48x128xbf16, #tpu.memory_space<vmem>>, vector<1x24x128xbf16>
    %6 = vector.shape_cast %5 : vector<1x24x128xbf16> to vector<24x128xbf16>
    %c1 = arith.constant 1 : index
    %c0_7 = arith.constant 0 : index
    %c0_8 = arith.constant 0 : index
    %7 = vector.load %arg2[%c1, %c0_7, %c0_8] : memref<4x128x128xbf16, #tpu.memory_space<vmem>>, vector<1x128x128xbf16>
    %8 = vector.shape_cast %7 : vector<1x128x128xbf16> to vector<128x128xbf16>
    %cst_9 = arith.constant dense<0.000000e+00> : vector<24x128xf32>
    %9 = tpu.matmul %6, %8, %cst_9 {dimension_numbers = #tpu.dot_dimension_numbers<[1], [0], [0], [1], [0, 0, 1, 1], [], []>} : vector<24x128xbf16>, vector<128x128xbf16>, vector<24x128xf32> -> vector<24x128xf32>
    %10 = arith.addf %4, %9 : vector<24x128xf32>
    %c0_10 = arith.constant 0 : index
    %c16 = arith.constant 16 : index
    %c0_11 = arith.constant 0 : index
    %11 = vector.load %arg1[%c0_10, %c16, %c0_11] : memref<1x48x128xbf16, #tpu.memory_space<vmem>>, vector<1x24x128xbf16>
    %12 = vector.shape_cast %11 : vector<1x24x128xbf16> to vector<24x128xbf16>
    %c2 = arith.constant 2 : index
    %c0_12 = arith.constant 0 : index
    %c0_13 = arith.constant 0 : index
    %13 = vector.load %arg2[%c2, %c0_12, %c0_13] : memref<4x128x128xbf16, #tpu.memory_space<vmem>>, vector<1x128x128xbf16>
    %14 = vector.shape_cast %13 : vector<1x128x128xbf16> to vector<128x128xbf16>
    %cst_14 = arith.constant dense<0.000000e+00> : vector<24x128xf32>
    %15 = tpu.matmul %12, %14, %cst_14 {dimension_numbers = #tpu.dot_dimension_numbers<[1], [0], [0], [1], [0, 0, 1, 1], [], []>} : vector<24x128xbf16>, vector<128x128xbf16>, vector<24x128xf32> -> vector<24x128xf32>
    %16 = arith.addf %10, %15 : vector<24x128xf32>
    %c0_15 = arith.constant 0 : index
    %c24 = arith.constant 24 : index
    %c0_16 = arith.constant 0 : index
    %17 = vector.load %arg1[%c0_15, %c24, %c0_16] : memref<1x48x128xbf16, #tpu.memory_space<vmem>>, vector<1x24x128xbf16>
    %18 = vector.shape_cast %17 : vector<1x24x128xbf16> to vector<24x128xbf16>
    %c3 = arith.constant 3 : index
    %c0_17 = arith.constant 0 : index
    %c0_18 = arith.constant 0 : index
    %19 = vector.load %arg2[%c3, %c0_17, %c0_18] : memref<4x128x128xbf16, #tpu.memory_space<vmem>>, vector<1x128x128xbf16>
    %20 = vector.shape_cast %19 : vector<1x128x128xbf16> to vector<128x128xbf16>
    %cst_19 = arith.constant dense<0.000000e+00> : vector<24x128xf32>
    %21 = tpu.matmul %18, %20, %cst_19 {dimension_numbers = #tpu.dot_dimension_numbers<[1], [0], [0], [1], [0, 0, 1, 1], [], []>} : vector<24x128xbf16>, vector<128x128xbf16>, vector<24x128xf32> -> vector<24x128xf32>
    %22 = arith.addf %16, %21 : vector<24x128xf32>
    %c0_20 = arith.constant 0 : index
    %c0_21 = arith.constant 0 : index
    %23 = vector.load %arg3[%c0_20, %c0_21] : memref<1x128xf32, #tpu.memory_space<vmem>>, vector<1x128xf32>
    %24 = vector.broadcast %23 : vector<1x128xf32> to vector<24x128xf32>
    %25 = arith.addf %22, %24 : vector<24x128xf32>
    %26 = arith.truncf %25 : vector<24x128xf32> to vector<24x128xbf16>
    %c0_22 = arith.constant 0 : index
    %c0_23 = arith.constant 0 : index
    %c0_24 = arith.constant 0 : index
    %27 = vector.load %arg4[%c0_22, %c0_23, %c0_24] : memref<1x24x128xbf16, #tpu.memory_space<vmem>>, vector<1x24x128xbf16>
    %28 = vector.shape_cast %27 : vector<1x24x128xbf16> to vector<24x128xbf16>
    %29 = vector.shape_cast %26 : vector<24x128xbf16> to vector<1x24x128xbf16>
    tpu.vector_store %arg4[%c0_22, %c0_23, %c0_24], %29 {strides = array<i32>} : memref<1x24x128xbf16, #tpu.memory_space<vmem>>, vector<1x24x128xbf16>,
    return
  }
  func.func @transform_0(%arg0: i32) -> (i32, i32, i32) {
    %c0_i32 = arith.constant 0 : i32
    %c0_i32_0 = arith.constant 0 : i32
    %c0_i32_1 = arith.constant 0 : i32
    return %arg0, %c0_i32, %c0_i32_0 : i32, i32, i32
  }
  func.func @transform_1(%arg0: i32) -> (i32, i32, i32) {
    %c0_i32 = arith.constant 0 : i32
    %c0_i32_0 = arith.constant 0 : i32
    %c0_i32_1 = arith.constant 0 : i32
    %c0_i32_2 = arith.constant 0 : i32
    return %c0_i32, %c0_i32_0, %c0_i32_1 : i32, i32, i32
  }
  func.func @transform_2(%arg0: i32) -> (i32, i32) {
    %c0_i32 = arith.constant 0 : i32
    %c0_i32_0 = arith.constant 0 : i32
    %c0_i32_1 = arith.constant 0 : i32
    return %c0_i32, %c0_i32_0 : i32, i32
  }
  func.func @transform_3(%arg0: i32) -> (i32, i32, i32) {
    %c0_i32 = arith.constant 0 : i32
    %c0_i32_0 = arith.constant 0 : i32
    %c0_i32_1 = arith.constant 0 : i32
    return %arg0, %c0_i32, %c0_i32_0 : i32, i32, i32
  }
}

module attributes {stable_mosaic.version = 11 : i64} {
  func.func @_inorm_lrelu_kernel(%arg0: i32, %arg1: i32, %arg2: memref<1x9x64xbf16, #tpu.memory_space<vmem>>, %arg3: memref<1x9x64xbf16, #tpu.memory_space<vmem>>) attributes {dimension_semantics = [#tpu.dimension_semantics<parallel>, #tpu.dimension_semantics<parallel>], iteration_bounds = array<i64: 2, 1>, scalar_prefetch = 0 : i64, scratch_operands = 0 : i64, tpu.core_type = #tpu.core_type<tc>, window_params = [{transform_indices = @transform_0, window_bounds = array<i64: 1, 9, 64>}, {transform_indices = @transform_1, window_bounds = array<i64: 1, 9, 64>}]} {
    %c0 = arith.constant 0 : index
    %c0_0 = arith.constant 0 : index
    %c0_1 = arith.constant 0 : index
    %0 = vector.load %arg2[%c0, %c0_0, %c0_1] : memref<1x9x64xbf16, #tpu.memory_space<vmem>>, vector<1x9x64xbf16>
    %1 = vector.shape_cast %0 : vector<1x9x64xbf16> to vector<9x64xbf16>
    %2 = arith.extf %1 : vector<9x64xbf16> to vector<9x64xf32>
    %cst = arith.constant dense<0.000000e+00> : vector<64xf32>
    %3 = vector.multi_reduction <add>, %2, %cst [0] : vector<9x64xf32> to vector<64xf32>
    %4 = vector.shape_cast %3 : vector<64xf32> to vector<1x64xf32>
    %cst_2 = arith.constant 9.000000e+00 : f32
    %5 = vector.broadcast %cst_2 : f32 to vector<1x64xf32>
    %6 = arith.divf %4, %5 : vector<1x64xf32>
    %7 = arith.mulf %2, %2 : vector<9x64xf32>
    %cst_3 = arith.constant dense<0.000000e+00> : vector<64xf32>
    %8 = vector.multi_reduction <add>, %7, %cst_3 [0] : vector<9x64xf32> to vector<64xf32>
    %9 = vector.shape_cast %8 : vector<64xf32> to vector<1x64xf32>
    %cst_4 = arith.constant 9.000000e+00 : f32
    %10 = vector.broadcast %cst_4 : f32 to vector<1x64xf32>
    %11 = arith.divf %9, %10 : vector<1x64xf32>
    %12 = arith.mulf %6, %6 : vector<1x64xf32>
    %13 = arith.subf %11, %12 : vector<1x64xf32>
    %cst_5 = arith.constant 0.000000e+00 : f32
    %14 = vector.broadcast %cst_5 : f32 to vector<1x64xf32>
    %15 = arith.maximumf %13, %14 : vector<1x64xf32>
    %16 = vector.broadcast %6 : vector<1x64xf32> to vector<9x64xf32>
    %17 = arith.subf %2, %16 : vector<9x64xf32>
    %cst_6 = arith.constant 9.99999974E-6 : f32
    %18 = vector.broadcast %cst_6 : f32 to vector<1x64xf32>
    %19 = arith.addf %15, %18 : vector<1x64xf32>
    %20 = math.rsqrt %19 : vector<1x64xf32>
    %21 = vector.broadcast %20 : vector<1x64xf32> to vector<9x64xf32>
    %22 = arith.mulf %17, %21 : vector<9x64xf32>
    %cst_7 = arith.constant 0.000000e+00 : f32
    %23 = vector.broadcast %cst_7 : f32 to vector<9x64xf32>
    %24 = arith.cmpf ogt, %22, %23 : vector<9x64xf32>
    %cst_8 = arith.constant 2.000000e-01 : f32
    %25 = vector.broadcast %cst_8 : f32 to vector<9x64xf32>
    %26 = arith.mulf %25, %22 : vector<9x64xf32>
    %27 = arith.select %24, %22, %26 : vector<9x64xi1>, vector<9x64xf32>
    %28 = arith.truncf %27 : vector<9x64xf32> to vector<9x64xbf16>
    %c0_9 = arith.constant 0 : index
    %c0_10 = arith.constant 0 : index
    %c0_11 = arith.constant 0 : index
    %29 = vector.load %arg3[%c0_9, %c0_10, %c0_11] : memref<1x9x64xbf16, #tpu.memory_space<vmem>>, vector<1x9x64xbf16>
    %30 = vector.shape_cast %29 : vector<1x9x64xbf16> to vector<9x64xbf16>
    %31 = vector.shape_cast %28 : vector<9x64xbf16> to vector<1x9x64xbf16>
    tpu.vector_store %arg3[%c0_9, %c0_10, %c0_11], %31 {strides = array<i32>} : memref<1x9x64xbf16, #tpu.memory_space<vmem>>, vector<1x9x64xbf16>,
    return
  }
  func.func @transform_0(%arg0: i32, %arg1: i32) -> (i32, i32, i32) {
    %c0_i32 = arith.constant 0 : i32
    %c0_i32_0 = arith.constant 0 : i32
    return %arg0, %c0_i32, %arg1 : i32, i32, i32
  }
  func.func @transform_1(%arg0: i32, %arg1: i32) -> (i32, i32, i32) {
    %c0_i32 = arith.constant 0 : i32
    %c0_i32_0 = arith.constant 0 : i32
    return %arg0, %c0_i32, %arg1 : i32, i32, i32
  }
}

module attributes {stable_mosaic.version = 11 : i64} {
  func.func @_conv_taps_kernel(%arg0: i32, %arg1: memref<1x40x256xbf16, #tpu.memory_space<vmem>>, %arg2: memref<4x256x128xbf16, #tpu.memory_space<vmem>>, %arg3: memref<1x128xf32, #tpu.memory_space<vmem>>, %arg4: memref<1x16x128xf32, #tpu.memory_space<vmem>>) attributes {dimension_semantics = [#tpu.dimension_semantics<parallel>], iteration_bounds = array<i64: 2>, scalar_prefetch = 0 : i64, scratch_operands = 0 : i64, tpu.core_type = #tpu.core_type<tc>, window_params = [{transform_indices = @transform_0, window_bounds = array<i64: 1, 40, 256>}, {pipeline_mode = #tpu.pipeline_mode<synchronous>, transform_indices = @transform_1, window_bounds = array<i64: 4, 256, 128>}, {pipeline_mode = #tpu.pipeline_mode<synchronous>, transform_indices = @transform_2, window_bounds = array<i64: 1, 128>}, {transform_indices = @transform_3, window_bounds = array<i64: 1, 16, 128>}]} {
    %c0 = arith.constant 0 : index
    %c0_0 = arith.constant 0 : index
    %c0_1 = arith.constant 0 : index
    %0 = vector.load %arg1[%c0, %c0_0, %c0_1] : memref<1x40x256xbf16, #tpu.memory_space<vmem>>, vector<1x16x256xbf16>
    %1 = vector.shape_cast %0 : vector<1x16x256xbf16> to vector<16x256xbf16>
    %c0_2 = arith.constant 0 : index
    %c0_3 = arith.constant 0 : index
    %c0_4 = arith.constant 0 : index
    %2 = vector.load %arg2[%c0_2, %c0_3, %c0_4] : memref<4x256x128xbf16, #tpu.memory_space<vmem>>, vector<1x256x128xbf16>
    %3 = vector.shape_cast %2 : vector<1x256x128xbf16> to vector<256x128xbf16>
    %cst = arith.constant dense<0.000000e+00> : vector<16x128xf32>
    %4 = tpu.matmul %1, %3, %cst {dimension_numbers = #tpu.dot_dimension_numbers<[1], [0], [0], [1], [0, 0, 1, 1], [], []>} : vector<16x256xbf16>, vector<256x128xbf16>, vector<16x128xf32> -> vector<16x128xf32>
    %c0_5 = arith.constant 0 : index
    %c8 = arith.constant 8 : index
    %c0_6 = arith.constant 0 : index
    %5 = vector.load %arg1[%c0_5, %c8, %c0_6] : memref<1x40x256xbf16, #tpu.memory_space<vmem>>, vector<1x16x256xbf16>
    %6 = vector.shape_cast %5 : vector<1x16x256xbf16> to vector<16x256xbf16>
    %c1 = arith.constant 1 : index
    %c0_7 = arith.constant 0 : index
    %c0_8 = arith.constant 0 : index
    %7 = vector.load %arg2[%c1, %c0_7, %c0_8] : memref<4x256x128xbf16, #tpu.memory_space<vmem>>, vector<1x256x128xbf16>
    %8 = vector.shape_cast %7 : vector<1x256x128xbf16> to vector<256x128xbf16>
    %cst_9 = arith.constant dense<0.000000e+00> : vector<16x128xf32>
    %9 = tpu.matmul %6, %8, %cst_9 {dimension_numbers = #tpu.dot_dimension_numbers<[1], [0], [0], [1], [0, 0, 1, 1], [], []>} : vector<16x256xbf16>, vector<256x128xbf16>, vector<16x128xf32> -> vector<16x128xf32>
    %10 = arith.addf %4, %9 : vector<16x128xf32>
    %c0_10 = arith.constant 0 : index
    %c16 = arith.constant 16 : index
    %c0_11 = arith.constant 0 : index
    %11 = vector.load %arg1[%c0_10, %c16, %c0_11] : memref<1x40x256xbf16, #tpu.memory_space<vmem>>, vector<1x16x256xbf16>
    %12 = vector.shape_cast %11 : vector<1x16x256xbf16> to vector<16x256xbf16>
    %c2 = arith.constant 2 : index
    %c0_12 = arith.constant 0 : index
    %c0_13 = arith.constant 0 : index
    %13 = vector.load %arg2[%c2, %c0_12, %c0_13] : memref<4x256x128xbf16, #tpu.memory_space<vmem>>, vector<1x256x128xbf16>
    %14 = vector.shape_cast %13 : vector<1x256x128xbf16> to vector<256x128xbf16>
    %cst_14 = arith.constant dense<0.000000e+00> : vector<16x128xf32>
    %15 = tpu.matmul %12, %14, %cst_14 {dimension_numbers = #tpu.dot_dimension_numbers<[1], [0], [0], [1], [0, 0, 1, 1], [], []>} : vector<16x256xbf16>, vector<256x128xbf16>, vector<16x128xf32> -> vector<16x128xf32>
    %16 = arith.addf %10, %15 : vector<16x128xf32>
    %c0_15 = arith.constant 0 : index
    %c24 = arith.constant 24 : index
    %c0_16 = arith.constant 0 : index
    %17 = vector.load %arg1[%c0_15, %c24, %c0_16] : memref<1x40x256xbf16, #tpu.memory_space<vmem>>, vector<1x16x256xbf16>
    %18 = vector.shape_cast %17 : vector<1x16x256xbf16> to vector<16x256xbf16>
    %c3 = arith.constant 3 : index
    %c0_17 = arith.constant 0 : index
    %c0_18 = arith.constant 0 : index
    %19 = vector.load %arg2[%c3, %c0_17, %c0_18] : memref<4x256x128xbf16, #tpu.memory_space<vmem>>, vector<1x256x128xbf16>
    %20 = vector.shape_cast %19 : vector<1x256x128xbf16> to vector<256x128xbf16>
    %cst_19 = arith.constant dense<0.000000e+00> : vector<16x128xf32>
    %21 = tpu.matmul %18, %20, %cst_19 {dimension_numbers = #tpu.dot_dimension_numbers<[1], [0], [0], [1], [0, 0, 1, 1], [], []>} : vector<16x256xbf16>, vector<256x128xbf16>, vector<16x128xf32> -> vector<16x128xf32>
    %22 = arith.addf %16, %21 : vector<16x128xf32>
    %c0_20 = arith.constant 0 : index
    %c0_21 = arith.constant 0 : index
    %23 = vector.load %arg3[%c0_20, %c0_21] : memref<1x128xf32, #tpu.memory_space<vmem>>, vector<1x128xf32>
    %24 = vector.broadcast %23 : vector<1x128xf32> to vector<16x128xf32>
    %25 = arith.addf %22, %24 : vector<16x128xf32>
    %c0_22 = arith.constant 0 : index
    %c0_23 = arith.constant 0 : index
    %c0_24 = arith.constant 0 : index
    %26 = vector.load %arg4[%c0_22, %c0_23, %c0_24] : memref<1x16x128xf32, #tpu.memory_space<vmem>>, vector<1x16x128xf32>
    %27 = vector.shape_cast %26 : vector<1x16x128xf32> to vector<16x128xf32>
    %28 = vector.shape_cast %25 : vector<16x128xf32> to vector<1x16x128xf32>
    tpu.vector_store %arg4[%c0_22, %c0_23, %c0_24], %28 {strides = array<i32>} : memref<1x16x128xf32, #tpu.memory_space<vmem>>, vector<1x16x128xf32>,
    return
  }
  func.func @transform_0(%arg0: i32) -> (i32, i32, i32) {
    %c0_i32 = arith.constant 0 : i32
    %c0_i32_0 = arith.constant 0 : i32
    %c0_i32_1 = arith.constant 0 : i32
    return %arg0, %c0_i32, %c0_i32_0 : i32, i32, i32
  }
  func.func @transform_1(%arg0: i32) -> (i32, i32, i32) {
    %c0_i32 = arith.constant 0 : i32
    %c0_i32_0 = arith.constant 0 : i32
    %c0_i32_1 = arith.constant 0 : i32
    %c0_i32_2 = arith.constant 0 : i32
    return %c0_i32, %c0_i32_0, %c0_i32_1 : i32, i32, i32
  }
  func.func @transform_2(%arg0: i32) -> (i32, i32) {
    %c0_i32 = arith.constant 0 : i32
    %c0_i32_0 = arith.constant 0 : i32
    %c0_i32_1 = arith.constant 0 : i32
    return %c0_i32, %c0_i32_0 : i32, i32
  }
  func.func @transform_3(%arg0: i32) -> (i32, i32, i32) {
    %c0_i32 = arith.constant 0 : i32
    %c0_i32_0 = arith.constant 0 : i32
    %c0_i32_1 = arith.constant 0 : i32
    return %arg0, %c0_i32, %c0_i32_0 : i32, i32, i32
  }
}

</mosaic_0001>

<llo_original>
// kernel: _lambda_.8
$region0: #{_lambda_.8}
  #allocation0 [shape = 'u32[]', space=smem, size = 0x4, offset = 0x4, fixed_abs, tag = 'smem constant byte address 0x4 - core index']
  #allocation1 [shape = 'u32[144,128]{1,0:T(1,128)}', space=vmem, size = 0x12000, scoped, tag = 'internal scratch']
  %s0 = inlined_call_operand.vmem [shape: bf16[2,272,24], index: 0, kind: input, shape index: {}]
  %s1 = inlined_call_operand.vmem [shape: bf16[2,24,128], index: 1, kind: input, shape index: {}]
  %s2 = inlined_call_operand.vmem [shape: f32[1,128], index: 2, kind: input, shape index: {}]
  %s3 = inlined_call_operand.vmem [shape: bf16[2,256,128], index: 3, kind: output, shape index: {}]
  %s4 = sld [smem:[#allocation0]]
  $region45: #{_lambda_.8} parent=0
    _
  %s6 = ssub.s32 1, %s4
  %s7 = scalar_select 0, %s6, %s4
  loop: start=0, step=1, limit=4
  $region2: #{_lambda_.8} parent=0 // loop_pre_header
    _
  $region3: #{_lambda_.8} parent=0 // loop_header
    %s9 = sphi 0, %s13
    %p10 = scmp.ge.s32.totalorder %s9, 4
    %s19 = sphi 0, %s21
    %s22 = sphi 0, %s19
    %s23 = sphi 0, %s22
    %s39 = sphi 0, %s23
    %s43 = sphi 0, %s43
    %s45 = sphi 0, %s43
    %s46 = sphi 0, %s45
    %s60 = sphi 0, %s46
    %s64 = sphi 0, %s64
    %s66 = sphi 0, %s64
    %s67 = sphi 0, %s66
    %s81 = sphi 0, %s67
    %s87 = sphi 0, %s89
    %s90 = sphi 0, %s87
    %s91 = sphi 0, %s90
    %s107 = sphi 0, %s91
  $region4: #{_lambda_.8} parent=0 // loop_header_branch
    %12 = sbr.rel (%p10) target = $region8
  $region5: #{_lambda_.8} parent=0 // loop_body
    %s14 = ssub.s32 %s9, 1
    %s15 = ssub.s32 %s9, 2
    %s16 = sadd.s32 %s9, 1
    %s17 = ssub.s32 %s9, %s16
    %p18 = scmp.eq.s32.totalorder %s17, 0
    %s20 = sadd.s32 %s19, 1
    %s21 = scalar_select %p18, %s19, %s20
    %p24 = pneg %p18
    %p25 = scmp.eq.s32.totalorder %s9, 1
    %p26 = por %p24, %p25
    %p27 = scmp.ne.s32.totalorder %s19, %s22
    %p28 = scmp.eq.s32.totalorder %s9, 0
    %p29 = por %p27, %p28
    %p30 = scmp.ne.s32.totalorder %s19, %s22
    %p31 = scmp.eq.s32.totalorder %s14, 1
    %p32 = por %p30, %p31
    %p33 = scmp.ne.s32.totalorder %s22, %s23
    %p34 = scmp.eq.s32.totalorder %s14, 0
    %p35 = por %p33, %p34
    %p36 = scmp.ne.s32.totalorder %s22, %s23
    %p37 = scmp.eq.s32.totalorder %s15, 1
    %p38 = por %p36, %p37
    %p40 = scmp.ne.s32.totalorder %s23, %s39
    %p41 = scmp.eq.s32.totalorder %s15, 0
    %p42 = por %p40, %p41
    %s44 = sadd.s32 %s43, 1
    %p47 = scmp.eq.s32.totalorder %s9, 1
    %p48 = scmp.ne.s32.totalorder %s43, %s45
    %p49 = scmp.eq.s32.totalorder %s9, 0
    %p50 = por %p48, %p49
    %p51 = scmp.ne.s32.totalorder %s43, %s45
    %p52 = scmp.eq.s32.totalorder %s14, 1
    %p53 = por %p51, %p52
    %p54 = scmp.ne.s32.totalorder %s45, %s46
    %p55 = scmp.eq.s32.totalorder %s14, 0
    %p56 = por %p54, %p55
    %p57 = scmp.ne.s32.totalorder %s45, %s46
    %p58 = scmp.eq.s32.totalorder %s15, 1
    %p59 = por %p57, %p58
    %p61 = scmp.ne.s32.totalorder %s46, %s60
    %p62 = scmp.eq.s32.totalorder %s15, 0
    %p63 = por %p61, %p62
    %s65 = sadd.s32 %s64, 1
    %p68 = scmp.eq.s32.totalorder %s9, 1
    %p69 = scmp.ne.s32.totalorder %s64, %s66
    %p70 = scmp.eq.s32.totalorder %s9, 0
    %p71 = por %p69, %p70
    %p72 = scmp.ne.s32.totalorder %s64, %s66
    %p73 = scmp.eq.s32.totalorder %s14, 1
    %p74 = por %p72, %p73
    %p75 = scmp.ne.s32.totalorder %s66, %s67
    %p76 = scmp.eq.s32.totalorder %s14, 0
    %p77 = por %p75, %p76
    %p78 = scmp.ne.s32.totalorder %s66, %s67
    %p79 = scmp.eq.s32.totalorder %s15, 1
    %p80 = por %p78, %p79
    %p82 = scmp.ne.s32.totalorder %s67, %s81
    %p83 = scmp.eq.s32.totalorder %s15, 0
    %p84 = por %p82, %p83
    %s85 = ssub.s32 %s9, %s16
    %p86 = scmp.eq.s32.totalorder %s85, 0
    %s88 = sadd.s32 %s87, 1
    %s89 = scalar_select %p86, %s87, %s88
    %p92 = pneg %p86
    %p93 = scmp.eq.s32.totalorder %s9, 1
    %p94 = por %p92, %p93
    %p95 = scmp.ne.s32.totalorder %s87, %s90
    %p96 = scmp.eq.s32.totalorder %s9, 0
    %p97 = por %p95, %p96
    %p98 = scmp.ne.s32.totalorder %s87, %s90
    %p99 = scmp.eq.s32.totalorder %s14, 1
    %p100 = por %p98, %p99
    %p101 = scmp.ne.s32.totalorder %s90, %s91
    %p102 = scmp.eq.s32.totalorder %s14, 0
    %p103 = por %p101, %p102
    %p104 = scmp.ne.s32.totalorder %s90, %s91
    %p105 = scmp.eq.s32.totalorder %s15, 1
    %p106 = por %p104, %p105
    %p108 = scmp.ne.s32.totalorder %s91, %s107
    %p109 = scmp.eq.s32.totalorder %s15, 0
    %p110 = por %p108, %p109
    %p111 = scmp.le.s32.totalorder 1, %s9
    %p112 = scmp.lt.s32.totalorder %s9, 3
    %p113 = pnand %p111, %p112
    %p114 = pneg %p113
    // Predicated region
    $region9: #{_lambda_.8} parent=5 // pred_check
      _
    $region10: #{_lambda_.8} parent=5 // pred_check_branch
      %116 = sbr.rel (%p113) target = $region12
    $region11: #{_lambda_.8} parent=5 // pred_region
      %s117 = ssub.s32 %s9, 1
      // Predicated region
      $region13: #{_lambda_.8} parent=11 // pred_check
        %p118 = pneg %p56
      $region14: #{_lambda_.8} parent=11 // pred_check_branch
        %120 = sbr.rel (%p118) target = $region16
      $region15: #{_lambda_.8} parent=11 // pred_region
        _
      $region16: #{_lambda_.8} parent=11 // pred_fallthru
        _
      // Predicated region
      $region17: #{_lambda_.8} parent=11 // pred_check
        %p121 = pneg %p77
      $region18: #{_lambda_.8} parent=11 // pred_check_branch
        %123 = sbr.rel (%p121) target = $region20
      $region19: #{_lambda_.8} parent=11 // pred_region
        _
      $region20: #{_lambda_.8} parent=11 // pred_fallthru
        _
    $region12: #{_lambda_.8} parent=5 // pred_fallthru
      _
    %p124 = scmp.lt.s32.totalorder %s9, 2
    // Predicated region
    $region21: #{_lambda_.8} parent=5 // pred_check
      %p125 = pneg %p124
    $region22: #{_lambda_.8} parent=5 // pred_check_branch
      %127 = sbr.rel (%p125) target = $region24
    $region23: #{_lambda_.8} parent=5 // pred_region
      // Predicated region
      $region25: #{_lambda_.8} parent=23 // pred_check
        %p128 = pneg %p29
      $region26: #{_lambda_.8} parent=23 // pred_check_branch
        %130 = sbr.rel (%p128) target = $region28
      $region27: #{_lambda_.8} parent=23 // pred_region
        %p131 = scmp.lt.s32.totalorder %s9, 1
        %s132 = scalar_select %p131, %s9, 1
        %s133 = smul.addr %s132, 34
        %s134 = smul.addr %s133, 4
        %s135 = scalar_lea.vmem %s0, %s134
      $region28: #{_lambda_.8} parent=23 // pred_fallthru
        _
    $region24: #{_lambda_.8} parent=5 // pred_fallthru
      _
    %p136 = scmp.le.s32.totalorder 1, %s9
    %p137 = scmp.lt.s32.totalorder %s9, 3
    %p138 = pnand %p136, %p137
    %p139 = pneg %p138
    // Predicated region
    $region29: #{_lambda_.8} parent=5 // pred_check
      _
    $region30: #{_lambda_.8} parent=5 // pred_check_branch
      %141 = sbr.rel (%p138) target = $region32
    $region31: #{_lambda_.8} parent=5 // pred_region
      %s142 = ssub.s32 %s9, 1
      %p143 = scmp.lt.s32.totalorder %s14, 1
      %s144 = scalar_select %p143, %s14, 1
      %s145 = smul.addr %s144, 34
      %s146 = smul.addr %s145, 4
      %s147 = scalar_lea.vmem %s0, %s146
      %p148 = pneg %p35
      %p149 = pneg %p32
      %p150 = pneg %p56
      %p151 = pneg %p53
      %p152 = pneg %p77
      %p153 = pneg %p74
      %p154 = pneg %p103
      %p155 = pneg %p100
      %p156 = scmp.lt.s32.totalorder %s14, 1
      %s157 = scalar_select %p156, %s14, 1
      %s158 = smul.addr %s157, 32
      %s159 = smul.addr %s158, 4
      %s160 = scalar_lea.vmem %s3, %s159
      %p161 = scmp.lt.s32.totalorder %s14, 1
      %s162 = scalar_select %p161, %s14, 1
      %s163 = smul.addr %s162, 34
      %s164 = smul.addr %s163, 4
      %s165 = scalar_lea.vmem %s0, %s164
      %p166 = scmp.lt.s32.totalorder %s14, 1
      %s167 = scalar_select %p166, %s14, 1
      %s168 = smul.addr %s167, 32
      %s169 = smul.addr %s168, 4
      %s170 = scalar_lea.vmem %s3, %s169
      %v172 = vld [vmem:[%s165] sm:$0xf]
      %v173 = vld [vmem:[%s165 + $0x4] sm:$0xf]
      %v174 = vld [vmem:[%s165 + $0x8] sm:$0xf]
      %v175 = vld [vmem:[%s165 + $0xc] sm:$0xf]
      %v176 = vld [vmem:[%s165 + $0x10] sm:$0xf]
      %v177 = vld [vmem:[%s165 + $0x14] sm:$0xf]
      %v178 = vld [vmem:[%s165 + $0x18] sm:$0xf]
      %v179 = vld [vmem:[%s165 + $0x1c] sm:$0xf]
      %v180 = vld [vmem:[%s165 + $0x20] sm:$0xf]
      %v181 = vld [vmem:[%s165 + $0x24] sm:$0xf]
      %v182 = vld [vmem:[%s165 + $0x28] sm:$0xf]
      %v183 = vld [vmem:[%s165 + $0x2c] sm:$0xf]
      %v184 = vld [vmem:[%s165 + $0x30] sm:$0xf]
      %v185 = vld [vmem:[%s165 + $0x34] sm:$0xf]
      %v186 = vld [vmem:[%s165 + $0x38] sm:$0xf]
      %v187 = vld [vmem:[%s165 + $0x3c] sm:$0xf]
      %v188 = vld [vmem:[%s165 + $0x40] sm:$0xf]
      %v189 = vld [vmem:[%s165 + $0x44] sm:$0xf]
      %v190 = vld [vmem:[%s165 + $0x48] sm:$0xf]
      %v191 = vld [vmem:[%s165 + $0x4c] sm:$0xf]
      %v192 = vld [vmem:[%s165 + $0x50] sm:$0xf]
      %v193 = vld [vmem:[%s165 + $0x54] sm:$0xf]
      %v194 = vld [vmem:[%s165 + $0x58] sm:$0xf]
      %v195 = vld [vmem:[%s165 + $0x5c] sm:$0xf]
      %v196 = vld [vmem:[%s165 + $0x60] sm:$0xf]
      %v197 = vld [vmem:[%s165 + $0x64] sm:$0xf]
      %v198 = vld [vmem:[%s165 + $0x68] sm:$0xf]
      %v199 = vld [vmem:[%s165 + $0x6c] sm:$0xf]
      %v200 = vld [vmem:[%s165 + $0x70] sm:$0xf]
      %v201 = vld [vmem:[%s165 + $0x74] sm:$0xf]
      %v202 = vld [vmem:[%s165 + $0x78] sm:$0xf]
      %v203 = vld [vmem:[%s165 + $0x7c] sm:$0xf]
      %v204 = vld [vmem:[%s1] sm:$0xf]
      %v205 = vld [vmem:[%s1 + $0x4] sm:$0xf]
      %v206 = vld [vmem:[%s1 + $0x8] sm:$0xf]
      %v207 = vld [vmem:[%s165 + $0x80] sm:$0xf]
      %v208 = vld [vmem:[%s165 + $0x84] sm:$0xf]
      %s209 = scalar_lea.vmem %s1, 12
      %v210 = vld [vmem:[%s209] sm:$0xf]
      %v211 = vld [vmem:[%s209 + $0x4] sm:$0xf]
      %v212 = vld [vmem:[%s209 + $0x8] sm:$0xf]
      %v245 = vunpack.c.l.b16 %v174
      %v246 = vunpack.c.l.b16 %v175
      %v247 = vunpack.c.l.b16 %v176
      %v248 = vunpack.c.l.b16 %v177
      %v249 = vunpack.c.l.b16 %v178
      %v250 = vunpack.c.l.b16 %v179
      %v251 = vunpack.c.l.b16 %v180
      %v252 = vunpack.c.l.b16 %v181
      %v253 = vunpack.c.l.b16 %v182
      %v254 = vunpack.c.l.b16 %v183
      %v255 = vunpack.c.l.b16 %v184
      %v256 = vunpack.c.l.b16 %v185
      %v257 = vunpack.c.l.b16 %v186
      %v258 = vunpack.c.l.b16 %v187
      %v259 = vunpack.c.l.b16 %v188
      %v260 = vunpack.c.l.b16 %v189
      %v261 = vunpack.c.l.b16 %v190
      %v262 = vunpack.c.l.b16 %v191
      %v263 = vunpack.c.l.b16 %v192
      %v264 = vunpack.c.l.b16 %v193
      %v265 = vunpack.c.l.b16 %v194
      %v266 = vunpack.c.l.b16 %v195
      %v267 = vunpack.c.l.b16 %v196
      %v268 = vunpack.c.l.b16 %v197
      %v269 = vunpack.c.l.b16 %v198
      %v270 = vunpack.c.l.b16 %v199
      %v271 = vunpack.c.l.b16 %v200
      %v272 = vunpack.c.l.b16 %v201
      %v273 = vunpack.c.l.b16 %v202
      %v274 = vunpack.c.l.b16 %v203
      %v275 = vunpack.c.l.b16 %v207
      %v276 = vunpack.c.l.b16 %v208
      %v277 = vpack.c.b16 %v246, %v245
      %v278 = vpack.c.b16 %v248, %v247
      %v279 = vpack.c.b16 %v250, %v249
      %v280 = vpack.c.b16 %v252, %v251
      %v281 = vpack.c.b16 %v254, %v253
      %v282 = vpack.c.b16 %v256, %v255
      %v283 = vpack.c.b16 %v258, %v257
      %v284 = vpack.c.b16 %v260, %v259
      %v285 = vpack.c.b16 %v262, %v261
      %v286 = vpack.c.b16 %v264, %v263
      %v287 = vpack.c.b16 %v266, %v265
      %v288 = vpack.c.b16 %v268, %v267
      %v289 = vpack.c.b16 %v270, %v269
      %v290 = vpack.c.b16 %v272, %v271
      %v291 = vpack.c.b16 %v274, %v273
      %v292 = vpack.c.b16 %v276, %v275
      %v296 = vunpack.c.l.b16 %v210
      %v297 = vunpack.c.l.b16 %v211
      %v298 = vunpack.c.l.b16 %v212
      %v299 = vpack.c.b16 %v297, %v296
      %v300 = vpack.c.b16 %v298, %v298
      %vm302 = vcmask 195584
      %v304 = vsel %vm302, %v277, 0
      %v307 = vsel %vm302, %v278, 0
      %v310 = vsel %vm302, %v279, 0
      %v313 = vsel %vm302, %v280, 0
      %v316 = vsel %vm302, %v281, 0
      %v319 = vsel %vm302, %v282, 0
      %v322 = vsel %vm302, %v283, 0
      %v325 = vsel %vm302, %v284, 0
      %v328 = vsel %vm302, %v285, 0
      %v331 = vsel %vm302, %v286, 0
      %v334 = vsel %vm302, %v287, 0
      %v337 = vsel %vm302, %v288, 0
      %v340 = vsel %vm302, %v289, 0
      %v343 = vsel %vm302, %v290, 0
      %v346 = vsel %vm302, %v291, 0
      %v349 = vsel %vm302, %v292, 0
      %vm351 = vcmask 1043456
      %v353 = vsel %vm351, %v300, 0
      %355 = vmatprep.subr.bf16.mxu0 0
      %356 = vmatpush1.bf16.msra.mxu0 0
      %357 = vmatprep.subr.bf16.mxu0 0
      %358 = vmatpush1.bf16.msra.mxu0 0
      %359 = vmatprep.subr.bf16.mxu0 0
      %360 = vmatpush1.bf16.msra.mxu0 0
      %361 = vmatprep.subr.bf16.mxu0 0
      %362 = vmatpush1.bf16.msra.mxu0 0
      %363 = vmatprep.subr.bf16.mxu0 0
      %364 = vmatpush1.bf16.msra.mxu0 0
      %365 = vmatprep.subr.bf16.mxu0 0
      %366 = vmatpush1.bf16.msra.mxu0 0
      %367 = vmatprep.subr.bf16.mxu0 0
      %368 = vmatpush1.bf16.msra.mxu0 %v353
      %369 = vmatprep.subr.bf16.mxu0 0
      %370 = vmatpush1.bf16.msra.mxu0 %v299
      %371 = vmatprep.subr.bf16.mxu0 0
      %372 = vmatpush2.bf16.msra.mxu0 0
      %373 = vmatprep.subr.bf16.mxu0 0
      %374 = vmatpush2.bf16.msra.mxu0 0
      %375 = vmatprep.subr.bf16.mxu0 0
      %376 = vmatpush2.bf16.msra.mxu0 0
      %377 = vmatprep.subr.bf16.mxu0 0
      %378 = vmatpush2.bf16.msra.mxu0 0
      %379 = vmatprep.subr.bf16.mxu0 0
      %380 = vmatpush2.bf16.msra.mxu0 0
      %381 = vmatprep.subr.bf16.mxu0 0
      %382 = vmatpush2.bf16.msra.mxu0 0
      %383 = vmatprep.subr.bf16.mxu0 0
      %384 = vmatpush2.bf16.msra.mxu0 0
      %385 = vmatprep.subr.bf16.mxu0 0
      %386 = vmatpush2.bf16.msra.mxu0 0
      %387 = vmatprep.mubr.bf16.mxu0 0
      %388 = vmatmul.mubr.bf16.gmra.mxu0 %v304
      %v389 = vpop.f32.mrf.mxu0
      %v390 = vadd.f32 0.0, %v389
      %v391 = vpop.f32.mrf.mxu0
      %v392 = vpop.f32.mrf.mxu0
      %v393 = vadd.f32 0.0, %v392
      %v394 = vpop.f32.mrf.mxu0
      %395 = vmatprep.mubr.bf16.mxu0 0
      %396 = vmatmul.mubr.bf16.gmra.mxu0 %v307
      %v397 = vpop.f32.mrf.mxu0
      %v398 = vadd.f32 0.0, %v397
      %v399 = vpop.f32.mrf.mxu0
      %v400 = vpop.f32.mrf.mxu0
      %v401 = vadd.f32 0.0, %v400
      %v402 = vpop.f32.mrf.mxu0
      %403 = vmatprep.mubr.bf16.mxu0 0
      %404 = vmatmul.mubr.bf16.gmra.mxu0 %v310
      %v405 = vpop.f32.mrf.mxu0
      %v406 = vadd.f32 0.0, %v405
      %v407 = vpop.f32.mrf.mxu0
      %v408 = vpop.f32.mrf.mxu0
      %v409 = vadd.f32 0.0, %v408
      %v410 = vpop.f32.mrf.mxu0
      %411 = vmatprep.mubr.bf16.mxu0 0
      %412 = vmatmul.mubr.bf16.gmra.mxu0 %v313
      %v413 = vpop.f32.mrf.mxu0
      %v414 = vadd.f32 0.0, %v413
      %v415 = vpop.f32.mrf.mxu0
      %v416 = vpop.f32.mrf.mxu0
      %v417 = vadd.f32 0.0, %v416
      %v418 = vpop.f32.mrf.mxu0
      %419 = vmatprep.mubr.bf16.mxu0 0
      %420 = vmatmul.mubr.bf16.gmra.mxu0 %v316
      %v421 = vpop.f32.mrf.mxu0
      %v422 = vadd.f32 0.0, %v421
      %v423 = vpop.f32.mrf.mxu0
      %v424 = vpop.f32.mrf.mxu0
      %v425 = vadd.f32 0.0, %v424
      %v426 = vpop.f32.mrf.mxu0
      %427 = vmatprep.mubr.bf16.mxu0 0
      %428 = vmatmul.mubr.bf16.gmra.mxu0 %v319
      %v429 = vpop.f32.mrf.mxu0
      %v430 = vadd.f32 0.0, %v429
      %v431 = vpop.f32.mrf.mxu0
      %v432 = vpop.f32.mrf.mxu0
      %v433 = vadd.f32 0.0, %v432
      %v434 = vpop.f32.mrf.mxu0
      %435 = vmatprep.mubr.bf16.mxu0 0
      %436 = vmatmul.mubr.bf16.gmra.mxu0 %v322
      %v437 = vpop.f32.mrf.mxu0
      %v438 = vadd.f32 0.0, %v437
      %v439 = vpop.f32.mrf.mxu0
      %v440 = vpop.f32.mrf.mxu0
      %v441 = vadd.f32 0.0, %v440
      %v442 = vpop.f32.mrf.mxu0
      %443 = vmatprep.mubr.bf16.mxu0 0
      %444 = vmatmul.mubr.bf16.gmra.mxu0 %v325
      %v445 = vpop.f32.mrf.mxu0
      %v446 = vadd.f32 0.0, %v445
      %v447 = vpop.f32.mrf.mxu0
      %v448 = vpop.f32.mrf.mxu0
      %v449 = vadd.f32 0.0, %v448
      %v450 = vpop.f32.mrf.mxu0
      %451 = vmatprep.mubr.bf16.mxu0 0
      %452 = vmatmul.mubr.bf16.gmra.mxu0 %v328
      %v453 = vpop.f32.mrf.mxu0
      %v454 = vadd.f32 0.0, %v453
      %v455 = vpop.f32.mrf.mxu0
      %v456 = vpop.f32.mrf.mxu0
      %v457 = vadd.f32 0.0, %v456
      %v458 = vpop.f32.mrf.mxu0
      %459 = vmatprep.mubr.bf16.mxu0 0
      %460 = vmatmul.mubr.bf16.gmra.mxu0 %v331
      %v461 = vpop.f32.mrf.mxu0
      %v462 = vadd.f32 0.0, %v461
      %v463 = vpop.f32.mrf.mxu0
      %v464 = vpop.f32.mrf.mxu0
      %v465 = vadd.f32 0.0, %v464
      %v466 = vpop.f32.mrf.mxu0
      %467 = vmatprep.mubr.bf16.mxu0 0
      %468 = vmatmul.mubr.bf16.gmra.mxu0 %v334
      %v469 = vpop.f32.mrf.mxu0
      %v470 = vadd.f32 0.0, %v469
      %v471 = vpop.f32.mrf.mxu0
      %v472 = vpop.f32.mrf.mxu0
      %v473 = vadd.f32 0.0, %v472
      %v474 = vpop.f32.mrf.mxu0
      %475 = vmatprep.mubr.bf16.mxu0 0
      %476 = vmatmul.mubr.bf16.gmra.mxu0 %v337
      %v477 = vpop.f32.mrf.mxu0
      %v478 = vadd.f32 0.0, %v477
      %v479 = vpop.f32.mrf.mxu0
      %v480 = vpop.f32.mrf.mxu0
      %v481 = vadd.f32 0.0, %v480
      %v482 = vpop.f32.mrf.mxu0
      %483 = vmatprep.mubr.bf16.mxu0 0
      %484 = vmatmul.mubr.bf16.gmra.mxu0 %v340
      %v485 = vpop.f32.mrf.mxu0
      %v486 = vadd.f32 0.0, %v485
      %v487 = vpop.f32.mrf.mxu0
      %v488 = vpop.f32.mrf.mxu0
      %v489 = vadd.f32 0.0, %v488
      %v490 = vpop.f32.mrf.mxu0
      %491 = vmatprep.mubr.bf16.mxu0 0
      %492 = vmatmul.mubr.bf16.gmra.mxu0 %v343
      %v493 = vpop.f32.mrf.mxu0
      %v494 = vadd.f32 0.0, %v493
      %v495 = vpop.f32.mrf.mxu0
      %v496 = vpop.f32.mrf.mxu0
      %v497 = vadd.f32 0.0, %v496
      %v498 = vpop.f32.mrf.mxu0
      %499 = vmatprep.mubr.bf16.mxu0 0
      %500 = vmatmul.mubr.bf16.gmra.mxu0 %v346
      %v501 = vpop.f32.mrf.mxu0
      %v502 = vadd.f32 0.0, %v501
      %v503 = vpop.f32.mrf.mxu0
      %v504 = vpop.f32.mrf.mxu0
      %v505 = vadd.f32 0.0, %v504
      %v506 = vpop.f32.mrf.mxu0
      %507 = vmatprep.mubr.bf16.mxu0 0
      %508 = vmatmul.mubr.bf16.gmra.mxu0 %v349
      %v509 = vpop.f32.mrf.mxu0
      %v510 = vadd.f32 0.0, %v509
      %v511 = vpop.f32.mrf.mxu0
      %v512 = vpop.f32.mrf.mxu0
      %v513 = vadd.f32 0.0, %v512
      %v514 = vpop.f32.mrf.mxu0
      %515 = vdwg.mxu0
      %v518 = vunpack.c.l.b16 %v172
      %v519 = vunpack.c.l.b16 %v173
      %v520 = vpack.c.b16 %v519, %v518
      %v524 = vunpack.c.l.b16 %v204
      %v525 = vunpack.c.l.b16 %v205
      %v526 = vunpack.c.l.b16 %v206
      %v527 = vpack.c.b16 %v525, %v524
      %v528 = vpack.c.b16 %v526, %v526
      %v531 = vsel %vm302, %v520, 0
      %v534 = vsel %vm351, %v528, 0
      %536 = vmatprep.subr.bf16.mxu0 0
      %537 = vmatpush1.bf16.msra.mxu0 0
      %538 = vmatprep.subr.bf16.mxu0 0
      %539 = vmatpush1.bf16.msra.mxu0 0
      %540 = vmatprep.subr.bf16.mxu0 0
      %541 = vmatpush1.bf16.msra.mxu0 0
      %542 = vmatprep.subr.bf16.mxu0 0
      %543 = vmatpush1.bf16.msra.mxu0 0
      %544 = vmatprep.subr.bf16.mxu0 0
      %545 = vmatpush1.bf16.msra.mxu0 0
      %546 = vmatprep.subr.bf16.mxu0 0
      %547 = vmatpush1.bf16.msra.mxu0 0
      %548 = vmatprep.subr.bf16.mxu0 0
      %549 = vmatpush1.bf16.msra.mxu0 %v534
      %550 = vmatprep.subr.bf16.mxu0 0
      %551 = vmatpush1.bf16.msra.mxu0 %v527
      %552 = vmatprep.subr.bf16.mxu0 0
      %553 = vmatpush2.bf16.msra.mxu0 0
      %554 = vmatprep.subr.bf16.mxu0 0
      %555 = vmatpush2.bf16.msra.mxu0 0
      %556 = vmatprep.subr.bf16.mxu0 0
      %557 = vmatpush2.bf16.msra.mxu0 0
      %558 = vmatprep.subr.bf16.mxu0 0
      %559 = vmatpush2.bf16.msra.mxu0 0
      %560 = vmatprep.subr.bf16.mxu0 0
      %561 = vmatpush2.bf16.msra.mxu0 0
      %562 = vmatprep.subr.bf16.mxu0 0
      %563 = vmatpush2.bf16.msra.mxu0 0
      %564 = vmatprep.subr.bf16.mxu0 0
      %565 = vmatpush2.bf16.msra.mxu0 0
      %566 = vmatprep.subr.bf16.mxu0 0
      %567 = vmatpush2.bf16.msra.mxu0 0
      %568 = vmatprep.mubr.bf16.mxu0 0
      %569 = vmatmul.mubr.bf16.gmra.mxu0 %v531
      %v570 = vpop.f32.mrf.mxu0
      %v571 = vadd.f32 %v390, %v570
      %v572 = vpop.f32.mrf.mxu0
      %v573 = vpop.f32.mrf.mxu0
      %v574 = vadd.f32 %v393, %v573
      %v575 = vpop.f32.mrf.mxu0
      %576 = vmatprep.mubr.bf16.mxu0 0
      %577 = vmatmul.mubr.bf16.gmra.mxu0 %v304
      %v578 = vpop.f32.mrf.mxu0
      %v579 = vadd.f32 %v398, %v578
      %v580 = vpop.f32.mrf.mxu0
      %v581 = vpop.f32.mrf.mxu0
      %v582 = vadd.f32 %v401, %v581
      %v583 = vpop.f32.mrf.mxu0
      %584 = vmatprep.mubr.bf16.mxu0 0
      %585 = vmatmul.mubr.bf16.gmra.mxu0 %v307
      %v586 = vpop.f32.mrf.mxu0
      %v587 = vadd.f32 %v406, %v586
      %v588 = vpop.f32.mrf.mxu0
      %v589 = vpop.f32.mrf.mxu0
      %v590 = vadd.f32 %v409, %v589
      %v591 = vpop.f32.mrf.mxu0
      %592 = vmatprep.mubr.bf16.mxu0 0
      %593 = vmatmul.mubr.bf16.gmra.mxu0 %v310
      %v594 = vpop.f32.mrf.mxu0
      %v595 = vadd.f32 %v414, %v594
      %v596 = vpop.f32.mrf.mxu0
      %v597 = vpop.f32.mrf.mxu0
      %v598 = vadd.f32 %v417, %v597
      %v599 = vpop.f32.mrf.mxu0
      %600 = vmatprep.mubr.bf16.mxu0 0
      %601 = vmatmul.mubr.bf16.gmra.mxu0 %v313
      %v602 = vpop.f32.mrf.mxu0
      %v603 = vadd.f32 %v422, %v602
      %v604 = vpop.f32.mrf.mxu0
      %v605 = vpop.f32.mrf.mxu0
      %v606 = vadd.f32 %v425, %v605
      %v607 = vpop.f32.mrf.mxu0
      %608 = vmatprep.mubr.bf16.mxu0 0
      %609 = vmatmul.mubr.bf16.gmra.mxu0 %v316
      %v610 = vpop.f32.mrf.mxu0
      %v611 = vadd.f32 %v430, %v610
      %v612 = vpop.f32.mrf.mxu0
      %v613 = vpop.f32.mrf.mxu0
      %v614 = vadd.f32 %v433, %v613
      %v615 = vpop.f32.mrf.mxu0
      %616 = vmatprep.mubr.bf16.mxu0 0
      %617 = vmatmul.mubr.bf16.gmra.mxu0 %v319
      %v618 = vpop.f32.mrf.mxu0
      %v619 = vadd.f32 %v438, %v618
      %v620 = vpop.f32.mrf.mxu0
      %v621 = vpop.f32.mrf.mxu0
      %v622 = vadd.f32 %v441, %v621
      %v623 = vpop.f32.mrf.mxu0
      %624 = vmatprep.mubr.bf16.mxu0 0
      %625 = vmatmul.mubr.bf16.gmra.mxu0 %v322
      %v626 = vpop.f32.mrf.mxu0
      %v627 = vadd.f32 %v446, %v626
      %v628 = vpop.f32.mrf.mxu0
      %v629 = vpop.f32.mrf.mxu0
      %v630 = vadd.f32 %v449, %v629
      %v631 = vpop.f32.mrf.mxu0
      %632 = vmatprep.mubr.bf16.mxu0 0
      %633 = vmatmul.mubr.bf16.gmra.mxu0 %v325
      %v634 = vpop.f32.mrf.mxu0
      %v635 = vadd.f32 %v454, %v634
      %v636 = vpop.f32.mrf.mxu0
      %v637 = vpop.f32.mrf.mxu0
      %v638 = vadd.f32 %v457, %v637
      %v639 = vpop.f32.mrf.mxu0
      %640 = vmatprep.mubr.bf16.mxu0 0
      %641 = vmatmul.mubr.bf16.gmra.mxu0 %v328
      %v642 = vpop.f32.mrf.mxu0
      %v643 = vadd.f32 %v462, %v642
      %v644 = vpop.f32.mrf.mxu0
      %v645 = vpop.f32.mrf.mxu0
      %v646 = vadd.f32 %v465, %v645
      %v647 = vpop.f32.mrf.mxu0
      %648 = vmatprep.mubr.bf16.mxu0 0
      %649 = vmatmul.mubr.bf16.gmra.mxu0 %v331
      %v650 = vpop.f32.mrf.mxu0
      %v651 = vadd.f32 %v470, %v650
      %v652 = vpop.f32.mrf.mxu0
      %v653 = vpop.f32.mrf.mxu0
      %v654 = vadd.f32 %v473, %v653
      %v655 = vpop.f32.mrf.mxu0
      %656 = vmatprep.mubr.bf16.mxu0 0
      %657 = vmatmul.mubr.bf16.gmra.mxu0 %v334
      %v658 = vpop.f32.mrf.mxu0
      %v659 = vadd.f32 %v478, %v658
      %v660 = vpop.f32.mrf.mxu0
      %v661 = vpop.f32.mrf.mxu0
      %v662 = vadd.f32 %v481, %v661
      %v663 = vpop.f32.mrf.mxu0
      %664 = vmatprep.mubr.bf16.mxu0 0
      %665 = vmatmul.mubr.bf16.gmra.mxu0 %v337
      %v666 = vpop.f32.mrf.mxu0
      %v667 = vadd.f32 %v486, %v666
      %v668 = vpop.f32.mrf.mxu0
      %v669 = vpop.f32.mrf.mxu0
      %v670 = vadd.f32 %v489, %v669
      %v671 = vpop.f32.mrf.mxu0
      %672 = vmatprep.mubr.bf16.mxu0 0
      %673 = vmatmul.mubr.bf16.gmra.mxu0 %v340
      %v674 = vpop.f32.mrf.mxu0
      %v675 = vadd.f32 %v494, %v674
      %v676 = vpop.f32.mrf.mxu0
      %v677 = vpop.f32.mrf.mxu0
      %v678 = vadd.f32 %v497, %v677
      %v679 = vpop.f32.mrf.mxu0
      %680 = vmatprep.mubr.bf16.mxu0 0
      %681 = vmatmul.mubr.bf16.gmra.mxu0 %v343
      %v682 = vpop.f32.mrf.mxu0
      %v683 = vadd.f32 %v502, %v682
      %v684 = vpop.f32.mrf.mxu0
      %v685 = vpop.f32.mrf.mxu0
      %v686 = vadd.f32 %v505, %v685
      %v687 = vpop.f32.mrf.mxu0
      %688 = vmatprep.mubr.bf16.mxu0 0
      %689 = vmatmul.mubr.bf16.gmra.mxu0 %v346
      %v690 = vpop.f32.mrf.mxu0
      %v691 = vadd.f32 %v510, %v690
      %v692 = vpop.f32.mrf.mxu0
      %v693 = vpop.f32.mrf.mxu0
      %v694 = vadd.f32 %v513, %v693
      %v695 = vpop.f32.mrf.mxu0
      %696 = vdwg.mxu0
      %v697 = vld [vmem:[%s2] sm:$0x1]
      %v699 = vlaneseq
      %v700 = vshrl.u32 %v699, 7
      %v701 = vsub.s32 0, %v700
      %v702 = vrot.slane %v697, %v701
      %v704 = vadd.f32 %v571, %v702
      %v705 = vadd.f32 %v574, %v702
      %v706 = vadd.f32 %v579, %v702
      %v707 = vadd.f32 %v582, %v702
      %v708 = vadd.f32 %v587, %v702
      %v709 = vadd.f32 %v590, %v702
      %v710 = vadd.f32 %v595, %v702
      %v711 = vadd.f32 %v598, %v702
      %v712 = vadd.f32 %v603, %v702
      %v713 = vadd.f32 %v606, %v702
      %v714 = vadd.f32 %v611, %v702
      %v715 = vadd.f32 %v614, %v702
      %v716 = vadd.f32 %v619, %v702
      %v717 = vadd.f32 %v622, %v702
      %v718 = vadd.f32 %v627, %v702
      %v719 = vadd.f32 %v630, %v702
      %v720 = vadd.f32 %v635, %v702
      %v721 = vadd.f32 %v638, %v702
      %v722 = vadd.f32 %v643, %v702
      %v723 = vadd.f32 %v646, %v702
      %v724 = vadd.f32 %v651, %v702
      %v725 = vadd.f32 %v654, %v702
      %v726 = vadd.f32 %v659, %v702
      %v727 = vadd.f32 %v662, %v702
      %v728 = vadd.f32 %v667, %v702
      %v729 = vadd.f32 %v670, %v702
      %v730 = vadd.f32 %v675, %v702
      %v731 = vadd.f32 %v678, %v702
      %v732 = vadd.f32 %v683, %v702
      %v733 = vadd.f32 %v686, %v702
      %v734 = vadd.f32 %v691, %v702
      %v735 = vadd.f32 %v694, %v702
      %vm736 = vcmp.gt.f32.partialorder %v704, 0.0
      %vm737 = vcmp.gt.f32.partialorder %v705, 0.0
      %vm738 = vcmp.gt.f32.partialorder %v706, 0.0
      %vm739 = vcmp.gt.f32.partialorder %v707, 0.0
      %vm740 = vcmp.gt.f32.partialorder %v708, 0.0
      %vm741 = vcmp.gt.f32.partialorder %v709, 0.0
      %vm742 = vcmp.gt.f32.partialorder %v710, 0.0
      %vm743 = vcmp.gt.f32.partialorder %v711, 0.0
      %vm744 = vcmp.gt.f32.partialorder %v712, 0.0
      %vm745 = vcmp.gt.f32.partialorder %v713, 0.0
      %vm746 = vcmp.gt.f32.partialorder %v714, 0.0
      %vm747 = vcmp.gt.f32.partialorder %v715, 0.0
      %vm748 = vcmp.gt.f32.partialorder %v716, 0.0
      %vm749 = vcmp.gt.f32.partialorder %v717, 0.0
      %vm750 = vcmp.gt.f32.partialorder %v718, 0.0
      %vm751 = vcmp.gt.f32.partialorder %v719, 0.0
      %vm752 = vcmp.gt.f32.partialorder %v720, 0.0
      %vm753 = vcmp.gt.f32.partialorder %v721, 0.0
      %vm754 = vcmp.gt.f32.partialorder %v722, 0.0
      %vm755 = vcmp.gt.f32.partialorder %v723, 0.0
      %vm756 = vcmp.gt.f32.partialorder %v724, 0.0
      %vm757 = vcmp.gt.f32.partialorder %v725, 0.0
      %vm758 = vcmp.gt.f32.partialorder %v726, 0.0
      %vm759 = vcmp.gt.f32.partialorder %v727, 0.0
      %vm760 = vcmp.gt.f32.partialorder %v728, 0.0
      %vm761 = vcmp.gt.f32.partialorder %v729, 0.0
      %vm762 = vcmp.gt.f32.partialorder %v730, 0.0
      %vm763 = vcmp.gt.f32.partialorder %v731, 0.0
      %vm764 = vcmp.gt.f32.partialorder %v732, 0.0
      %vm765 = vcmp.gt.f32.partialorder %v733, 0.0
      %vm766 = vcmp.gt.f32.partialorder %v734, 0.0
      %vm767 = vcmp.gt.f32.partialorder %v735, 0.0
      %v768 = vmul.f32 %v704, 0.2
      %v769 = vmul.f32 %v705, 0.2
      %v770 = vmul.f32 %v706, 0.2
      %v771 = vmul.f32 %v707, 0.2
      %v772 = vmul.f32 %v708, 0.2
      %v773 = vmul.f32 %v709, 0.2
      %v774 = vmul.f32 %v710, 0.2
      %v775 = vmul.f32 %v711, 0.2
      %v776 = vmul.f32 %v712, 0.2
      %v777 = vmul.f32 %v713, 0.2
      %v778 = vmul.f32 %v714, 0.2
      %v779 = vmul.f32 %v715, 0.2
      %v780 = vmul.f32 %v716, 0.2
      %v781 = vmul.f32 %v717, 0.2
      %v782 = vmul.f32 %v718, 0.2
      %v783 = vmul.f32 %v719, 0.2
      %v784 = vmul.f32 %v720, 0.2
      %v785 = vmul.f32 %v721, 0.2
      %v786 = vmul.f32 %v722, 0.2
      %v787 = vmul.f32 %v723, 0.2
      %v788 = vmul.f32 %v724, 0.2
      %v789 = vmul.f32 %v725, 0.2
      %v790 = vmul.f32 %v726, 0.2
      %v791 = vmul.f32 %v727, 0.2
      %v792 = vmul.f32 %v728, 0.2
      %v793 = vmul.f32 %v729, 0.2
      %v794 = vmul.f32 %v730, 0.2
      %v795 = vmul.f32 %v731, 0.2
      %v796 = vmul.f32 %v732, 0.2
      %v797 = vmul.f32 %v733, 0.2
      %v798 = vmul.f32 %v734, 0.2
      %v799 = vmul.f32 %v735, 0.2
      %v800 = vsel %vm736, %v704, %v768
      %v801 = vsel %vm737, %v705, %v769
      %v802 = vsel %vm738, %v706, %v770
      %v803 = vsel %vm739, %v707, %v771
      %v804 = vsel %vm740, %v708, %v772
      %v805 = vsel %vm741, %v709, %v773
      %v806 = vsel %vm742, %v710, %v774
      %v807 = vsel %vm743, %v711, %v775
      %v808 = vsel %vm744, %v712, %v776
      %v809 = vsel %vm745, %v713, %v777
      %v810 = vsel %vm746, %v714, %v778
      %v811 = vsel %vm747, %v715, %v779
      %v812 = vsel %vm748, %v716, %v780
      %v813 = vsel %vm749, %v717, %v781
      %v814 = vsel %vm750, %v718, %v782
      %v815 = vsel %vm751, %v719, %v783
      %v816 = vsel %vm752, %v720, %v784
      %v817 = vsel %vm753, %v721, %v785
      %v818 = vsel %vm754, %v722, %v786
      %v819 = vsel %vm755, %v723, %v787
      %v820 = vsel %vm756, %v724, %v788
      %v821 = vsel %vm757, %v725, %v789
      %v822 = vsel %vm758, %v726, %v790
      %v823 = vsel %vm759, %v727, %v791
      %v824 = vsel %vm760, %v728, %v792
      %v825 = vsel %vm761, %v729, %v793
      %v826 = vsel %vm762, %v730, %v794
      %v827 = vsel %vm763, %v731, %v795
      %v828 = vsel %vm764, %v732, %v796
      %v829 = vsel %vm765, %v733, %v797
      %v830 = vsel %vm766, %v734, %v798
      %v831 = vsel %vm767, %v735, %v799
      %v832 = vpack.c.bf16 %v801, %v800
      %v833 = vpack.c.bf16 %v803, %v802
      %v834 = vpack.c.bf16 %v805, %v804
      %v835 = vpack.c.bf16 %v807, %v806
      %v836 = vpack.c.bf16 %v809, %v808
      %v837 = vpack.c.bf16 %v811, %v810
      %v838 = vpack.c.bf16 %v813, %v812
      %v839 = vpack.c.bf16 %v815, %v814
      %v840 = vpack.c.bf16 %v817, %v816
      %v841 = vpack.c.bf16 %v819, %v818
      %v842 = vpack.c.bf16 %v821, %v820
      %v843 = vpack.c.bf16 %v823, %v822
      %v844 = vpack.c.bf16 %v825, %v824
      %v845 = vpack.c.bf16 %v827, %v826
      %v846 = vpack.c.bf16 %v829, %v828
      %v847 = vpack.c.bf16 %v831, %v830
      %v864 = vunpack.c.l.b16 %v832
      %v865 = vunpack.c.h.b16 %v832
      %v866 = vunpack.c.l.b16 %v833
      %v867 = vunpack.c.h.b16 %v833
      %v868 = vunpack.c.l.b16 %v834
      %v869 = vunpack.c.h.b16 %v834
      %v870 = vunpack.c.l.b16 %v835
      %v871 = vunpack.c.h.b16 %v835
      %v872 = vunpack.c.l.b16 %v836
      %v873 = vunpack.c.h.b16 %v836
      %v874 = vunpack.c.l.b16 %v837
      %v875 = vunpack.c.h.b16 %v837
      %v876 = vunpack.c.l.b16 %v838
      %v877 = vunpack.c.h.b16 %v838
      %v878 = vunpack.c.l.b16 %v839
      %v879 = vunpack.c.h.b16 %v839
      %v880 = vunpack.c.l.b16 %v840
      %v881 = vunpack.c.h.b16 %v840
      %v882 = vunpack.c.l.b16 %v841
      %v883 = vunpack.c.h.b16 %v841
      %v884 = vunpack.c.l.b16 %v842
      %v885 = vunpack.c.h.b16 %v842
      %v886 = vunpack.c.l.b16 %v843
      %v887 = vunpack.c.h.b16 %v843
      %v888 = vunpack.c.l.b16 %v844
      %v889 = vunpack.c.h.b16 %v844
      %v890 = vunpack.c.l.b16 %v845
      %v891 = vunpack.c.h.b16 %v845
      %v892 = vunpack.c.l.b16 %v846
      %v893 = vunpack.c.h.b16 %v846
      %v894 = vunpack.c.l.b16 %v847
      %v895 = vunpack.c.h.b16 %v847
      %v896 = vpack.c.b16 %v864, %v864
      %v897 = vpack.c.b16 %v865, %v865
      %v898 = vpack.c.b16 %v866, %v866
      %v899 = vpack.c.b16 %v867, %v867
      %v900 = vpack.c.b16 %v868, %v868
      %v901 = vpack.c.b16 %v869, %v869
      %v902 = vpack.c.b16 %v870, %v870
      %v903 = vpack.c.b16 %v871, %v871
      %v904 = vpack.c.b16 %v872, %v872
      %v905 = vpack.c.b16 %v873, %v873
      %v906 = vpack.c.b16 %v874, %v874
      %v907 = vpack.c.b16 %v875, %v875
      %v908 = vpack.c.b16 %v876, %v876
      %v909 = vpack.c.b16 %v877, %v877
      %v910 = vpack.c.b16 %v878, %v878
      %v911 = vpack.c.b16 %v879, %v879
      %v912 = vpack.c.b16 %v880, %v880
      %v913 = vpack.c.b16 %v881, %v881
      %v914 = vpack.c.b16 %v882, %v882
      %v915 = vpack.c.b16 %v883, %v883
      %v916 = vpack.c.b16 %v884, %v884
      %v917 = vpack.c.b16 %v885, %v885
      %v918 = vpack.c.b16 %v886, %v886
      %v919 = vpack.c.b16 %v887, %v887
      %v920 = vpack.c.b16 %v888, %v888
      %v921 = vpack.c.b16 %v889, %v889
      %v922 = vpack.c.b16 %v890, %v890
      %v923 = vpack.c.b16 %v891, %v891
      %v924 = vpack.c.b16 %v892, %v892
      %v925 = vpack.c.b16 %v893, %v893
      %v926 = vpack.c.b16 %v894, %v894
      %v927 = vpack.c.b16 %v895, %v895
      %960 = vst [vmem:[%s170] sm:$0xf] %v896
      %961 = vst [vmem:[%s170 + $0x4] sm:$0xf] %v897
      %962 = vst [vmem:[%s170 + $0x8] sm:$0xf] %v898
      %963 = vst [vmem:[%s170 + $0xc] sm:$0xf] %v899
      %964 = vst [vmem:[%s170 + $0x10] sm:$0xf] %v900
      %965 = vst [vmem:[%s170 + $0x14] sm:$0xf] %v901
      %966 = vst [vmem:[%s170 + $0x18] sm:$0xf] %v902
      %967 = vst [vmem:[%s170 + $0x1c] sm:$0xf] %v903
      %968 = vst [vmem:[%s170 + $0x20] sm:$0xf] %v904
      %969 = vst [vmem:[%s170 + $0x24] sm:$0xf] %v905
      %970 = vst [vmem:[%s170 + $0x28] sm:$0xf] %v906
      %971 = vst [vmem:[%s170 + $0x2c] sm:$0xf] %v907
      %972 = vst [vmem:[%s170 + $0x30] sm:$0xf] %v908
      %973 = vst [vmem:[%s170 + $0x34] sm:$0xf] %v909
      %974 = vst [vmem:[%s170 + $0x38] sm:$0xf] %v910
      %975 = vst [vmem:[%s170 + $0x3c] sm:$0xf] %v911
      %976 = vst [vmem:[%s170 + $0x40] sm:$0xf] %v912
      %977 = vst [vmem:[%s170 + $0x44] sm:$0xf] %v913
      %978 = vst [vmem:[%s170 + $0x48] sm:$0xf] %v914
      %979 = vst [vmem:[%s170 + $0x4c] sm:$0xf] %v915
      %980 = vst [vmem:[%s170 + $0x50] sm:$0xf] %v916
      %981 = vst [vmem:[%s170 + $0x54] sm:$0xf] %v917
      %982 = vst [vmem:[%s170 + $0x58] sm:$0xf] %v918
      %983 = vst [vmem:[%s170 + $0x5c] sm:$0xf] %v919
      %984 = vst [vmem:[%s170 + $0x60] sm:$0xf] %v920
      %985 = vst [vmem:[%s170 + $0x64] sm:$0xf] %v921
      %986 = vst [vmem:[%s170 + $0x68] sm:$0xf] %v922
      %987 = vst [vmem:[%s170 + $0x6c] sm:$0xf] %v923
      %988 = vst [vmem:[%s170 + $0x70] sm:$0xf] %v924
      %989 = vst [vmem:[%s170 + $0x74] sm:$0xf] %v925
      %990 = vst [vmem:[%s170 + $0x78] sm:$0xf] %v926
      %991 = vst [vmem:[%s170 + $0x7c] sm:$0xf] %v927
      %p992 = scmp.lt.s32.totalorder %s14, 1
      %s993 = scalar_select %p992, %s14, 1
      %s994 = smul.addr %s993, 32
      %s995 = smul.addr %s994, 4
      %s996 = scalar_lea.vmem %s3, %s995
      // Predicated region
      $region33: #{_lambda_.8} parent=31 // pred_check
        %p997 = pneg %p100
      $region34: #{_lambda_.8} parent=31 // pred_check_branch
        %999 = sbr.rel (%p997) target = $region36
      $region35: #{_lambda_.8} parent=31 // pred_region
        _
      $region36: #{_lambda_.8} parent=31 // pred_fallthru
        _
    $region32: #{_lambda_.8} parent=5 // pred_fallthru
      _
    %p1000 = scmp.le.s32.totalorder 2, %s9
    // Predicated region
    $region37: #{_lambda_.8} parent=5 // pred_check
      %p1001 = pneg %p1000
    $region38: #{_lambda_.8} parent=5 // pred_check_branch
      %1003 = sbr.rel (%p1001) target = $region40
    $region39: #{_lambda_.8} parent=5 // pred_region
      %s1004 = ssub.s32 %s9, 2
      // Predicated region
      $region41: #{_lambda_.8} parent=39 // pred_check
        %p1005 = pneg %p106
      $region42: #{_lambda_.8} parent=39 // pred_check_branch
        %1007 = sbr.rel (%p1005) target = $region44
      $region43: #{_lambda_.8} parent=39 // pred_region
        %p1008 = scmp.lt.s32.totalorder %s15, 1
        %s1009 = scalar_select %p1008, %s15, 1
        %s1010 = smul.addr %s1009, 32
        %s1011 = smul.addr %s1010, 4
        %s1012 = scalar_lea.vmem %s3, %s1011
      $region44: #{_lambda_.8} parent=39 // pred_fallthru
        _
    $region40: #{_lambda_.8} parent=5 // pred_fallthru
      _
  $region6: #{_lambda_.8} parent=0 // loop_footer
    %s13 = sadd.s32 1, %s9
  $region7: #{_lambda_.8} parent=0 // loop_footer_branch
    %8 = sbr.rel target = $region3
  $region8: #{_lambda_.8} parent=0 // loop_exit
    _

// kernel: _lambda_.10
$region0: #{_lambda_.10}
  #allocation0 [shape = 'u32[]', space=smem, size = 0x4, offset = 0x4, fixed_abs, tag = 'smem constant byte address 0x4 - core index']
  #allocation1 [shape = 'u32[144,128]{1,0:T(1,128)}', space=vmem, size = 0x12000, scoped, tag = 'internal scratch']
  %s0 = inlined_call_operand.vmem [shape: bf16[2,64,16], index: 0, kind: input, shape index: {}]
  %s1 = inlined_call_operand.vmem [shape: bf16[2,64,16], index: 1, kind: output, shape index: {}]
  %s2 = sld [smem:[#allocation0]]
  $region37: #{_lambda_.10} parent=0
    _
  %s4 = ssub.s32 1, %s2
  %s5 = scalar_select 0, %s4, %s2
  loop: start=0, step=1, limit=4
  $region2: #{_lambda_.10} parent=0 // loop_pre_header
    _
  $region3: #{_lambda_.10} parent=0 // loop_header
    %s7 = sphi 0, %s11
    %p8 = scmp.ge.s32.totalorder %s7, 4
    %s14 = sphi 0, %s26
    %s15 = sphi 0, %s22
    %s16 = sphi 0, %s14
    %s17 = sphi 0, %s15
    %s18 = sphi 0, %s16
    %s19 = sphi 0, %s17
    %s31 = sphi 0, %s33
    %s34 = sphi 0, %s31
    %s35 = sphi 0, %s34
    %s51 = sphi 0, %s35
    %s59 = sphi 0, %s61
    %s62 = sphi 0, %s59
    %s63 = sphi 0, %s62
    %s79 = sphi 0, %s63
  $region4: #{_lambda_.10} parent=0 // loop_header_branch
    %10 = sbr.rel (%p8) target = $region8
  $region5: #{_lambda_.10} parent=0 // loop_body
    %s12 = ssub.s32 %s7, 1
    %s13 = ssub.s32 %s7, 2
    %s20 = sadd.s32 1, %s15
    %p21 = scmp.ge.s32.totalorder %s20, 1
    %s22 = scalar_select %p21, 0, %s20
    %s23 = sadd.s32 1, %s14
    %s24 = scalar_select %p21, %s23, %s14
    %p25 = scmp.ge.s32.totalorder %s24, 2
    %s26 = scalar_select %p25, 0, %s24
    %s27 = ssub.s32 %s14, %s26
    %s28 = ssub.s32 %s15, %s22
    %s29 = sor.u32 %s27, %s28
    %p30 = scmp.eq.s32.totalorder %s29, 0
    %s32 = sadd.s32 %s31, 1
    %s33 = scalar_select %p30, %s31, %s32
    %p36 = pneg %p30
    %p37 = scmp.eq.s32.totalorder %s7, 1
    %p38 = por %p36, %p37
    %p39 = scmp.ne.s32.totalorder %s31, %s34
    %p40 = scmp.eq.s32.totalorder %s7, 0
    %p41 = por %p39, %p40
    %p42 = scmp.ne.s32.totalorder %s31, %s34
    %p43 = scmp.eq.s32.totalorder %s12, 1
    %p44 = por %p42, %p43
    %p45 = scmp.ne.s32.totalorder %s34, %s35
    %p46 = scmp.eq.s32.totalorder %s12, 0
    %p47 = por %p45, %p46
    %p48 = scmp.ne.s32.totalorder %s34, %s35
    %p49 = scmp.eq.s32.totalorder %s13, 1
    %p50 = por %p48, %p49
    %p52 = scmp.ne.s32.totalorder %s35, %s51
    %p53 = scmp.eq.s32.totalorder %s13, 0
    %p54 = por %p52, %p53
    %s55 = ssub.s32 %s14, %s26
    %s56 = ssub.s32 %s15, %s22
    %s57 = sor.u32 %s55, %s56
    %p58 = scmp.eq.s32.totalorder %s57, 0
    %s60 = sadd.s32 %s59, 1
    %s61 = scalar_select %p58, %s59, %s60
    %p64 = pneg %p58
    %p65 = scmp.eq.s32.totalorder %s7, 1
    %p66 = por %p64, %p65
    %p67 = scmp.ne.s32.totalorder %s59, %s62
    %p68 = scmp.eq.s32.totalorder %s7, 0
    %p69 = por %p67, %p68
    %p70 = scmp.ne.s32.totalorder %s59, %s62
    %p71 = scmp.eq.s32.totalorder %s12, 1
    %p72 = por %p70, %p71
    %p73 = scmp.ne.s32.totalorder %s62, %s63
    %p74 = scmp.eq.s32.totalorder %s12, 0
    %p75 = por %p73, %p74
    %p76 = scmp.ne.s32.totalorder %s62, %s63
    %p77 = scmp.eq.s32.totalorder %s13, 1
    %p78 = por %p76, %p77
    %p80 = scmp.ne.s32.totalorder %s63, %s79
    %p81 = scmp.eq.s32.totalorder %s13, 0
    %p82 = por %p80, %p81
    %p83 = scmp.le.s32.totalorder 1, %s7
    %p84 = scmp.lt.s32.totalorder %s7, 3
    %p85 = pnand %p83, %p84
    %p86 = pneg %p85
    // Predicated region
    $region9: #{_lambda_.10} parent=5 // pred_check
      _
    $region10: #{_lambda_.10} parent=5 // pred_check_branch
      %88 = sbr.rel (%p85) target = $region12
    $region11: #{_lambda_.10} parent=5 // pred_region
      %s89 = ssub.s32 %s7, 1
    $region12: #{_lambda_.10} parent=5 // pred_fallthru
      _
    %p90 = scmp.lt.s32.totalorder %s7, 2
    // Predicated region
    $region13: #{_lambda_.10} parent=5 // pred_check
      %p91 = pneg %p90
    $region14: #{_lambda_.10} parent=5 // pred_check_branch
      %93 = sbr.rel (%p91) target = $region16
    $region15: #{_lambda_.10} parent=5 // pred_region
      // Predicated region
      $region17: #{_lambda_.10} parent=15 // pred_check
        %p94 = pneg %p41
      $region18: #{_lambda_.10} parent=15 // pred_check_branch
        %96 = sbr.rel (%p94) target = $region20
      $region19: #{_lambda_.10} parent=15 // pred_region
        %p97 = scmp.lt.s32.totalorder %s14, 1
        %s98 = scalar_select %p97, %s14, 1
        %p99 = scmp.lt.s32.totalorder %s15, 0
        %s100 = scalar_select %p99, %s15, 0
        %s101 = smul.addr %s98, 8
        %s102 = sadd.s32 %s100, %s101
        %s103 = smul.addr %s102, 4
        %s104 = scalar_lea.vmem %s0, %s103
      $region20: #{_lambda_.10} parent=15 // pred_fallthru
        _
    $region16: #{_lambda_.10} parent=5 // pred_fallthru
      _
    %p105 = scmp.le.s32.totalorder 1, %s7
    %p106 = scmp.lt.s32.totalorder %s7, 3
    %p107 = pnand %p105, %p106
    %p108 = pneg %p107
    // Predicated region
    $region21: #{_lambda_.10} parent=5 // pred_check
      _
    $region22: #{_lambda_.10} parent=5 // pred_check_branch
      %110 = sbr.rel (%p107) target = $region24
    $region23: #{_lambda_.10} parent=5 // pred_region
      %s111 = ssub.s32 %s7, 1
      %p112 = scmp.lt.s32.totalorder %s16, 1
      %s113 = scalar_select %p112, %s16, 1
      %p114 = scmp.lt.s32.totalorder %s17, 0
      %s115 = scalar_select %p114, %s17, 0
      %s116 = smul.addr %s113, 8
      %s117 = sadd.s32 %s115, %s116
      %s118 = smul.addr %s117, 4
      %s119 = scalar_lea.vmem %s0, %s118
      %p120 = pneg %p47
      %p121 = pneg %p44
      %p122 = pneg %p75
      %p123 = pneg %p72
      %p124 = scmp.lt.s32.totalorder %s16, 1
      %s125 = scalar_select %p124, %s16, 1
      %p126 = scmp.lt.s32.totalorder %s17, 0
      %s127 = scalar_select %p126, %s17, 0
      %s128 = smul.addr %s125, 8
      %s129 = sadd.s32 %s127, %s128
      %s130 = smul.addr %s129, 4
      %s131 = scalar_lea.vmem %s1, %s130
      %p132 = scmp.lt.s32.totalorder %s16, 1
      %s133 = scalar_select %p132, %s16, 1
      %p134 = scmp.lt.s32.totalorder %s17, 0
      %s135 = scalar_select %p134, %s17, 0
      %s136 = smul.addr %s133, 8
      %s137 = sadd.s32 %s135, %s136
      %s138 = smul.addr %s137, 4
      %s139 = scalar_lea.vmem %s0, %s138
      %p140 = scmp.lt.s32.totalorder %s16, 1
      %s141 = scalar_select %p140, %s16, 1
      %p142 = scmp.lt.s32.totalorder %s17, 0
      %s143 = scalar_select %p142, %s17, 0
      %s144 = smul.addr %s141, 8
      %s145 = sadd.s32 %s143, %s144
      %s146 = smul.addr %s145, 4
      %s147 = scalar_lea.vmem %s1, %s146
      %v148 = vld [vmem:[%s139] sm:$0xf]
      %v149 = vld [vmem:[%s139 + $0x4] sm:$0xf]
      %v150 = vld [vmem:[%s139 + $0x8] sm:$0xf]
      %v151 = vld [vmem:[%s139 + $0xc] sm:$0xf]
      %v152 = vld [vmem:[%s139 + $0x10] sm:$0xf]
      %v153 = vld [vmem:[%s139 + $0x14] sm:$0xf]
      %v154 = vld [vmem:[%s139 + $0x18] sm:$0xf]
      %v155 = vld [vmem:[%s139 + $0x1c] sm:$0xf]
      %v156 = vunpack.c.l.bf16 %v148
      %v157 = vunpack.c.l.bf16 %v149
      %v158 = vunpack.c.l.bf16 %v150
      %v159 = vunpack.c.l.bf16 %v151
      %v160 = vunpack.c.l.bf16 %v152
      %v161 = vunpack.c.l.bf16 %v153
      %v162 = vunpack.c.l.bf16 %v154
      %v163 = vunpack.c.l.bf16 %v155
      %vm164 = vcmask 130048
      %v165 = vsel %vm164, %v156, 0.0
      %v166 = vsel %vm164, %v157, 0.0
      %v167 = vadd.f32 %v165, %v166
      %v168 = vsel %vm164, %v158, 0.0
      %v169 = vadd.f32 %v167, %v168
      %v170 = vsel %vm164, %v159, 0.0
      %v171 = vadd.f32 %v169, %v170
      %v172 = vsel %vm164, %v160, 0.0
      %v173 = vadd.f32 %v171, %v172
      %v174 = vsel %vm164, %v161, 0.0
      %v175 = vadd.f32 %v173, %v174
      %v176 = vsel %vm164, %v162, 0.0
      %v177 = vadd.f32 %v175, %v176
      %v178 = vsel %vm164, %v163, 0.0
      %v179 = vadd.f32 %v177, %v178
      %v180 = vrot.slane %v179, 4
      %v181 = vadd.f32 %v179, %v180
      %v182 = vrot.slane %v181, 2
      %v183 = vadd.f32 %v181, %v182
      %v184 = vrot.slane %v183, 1
      %v185 = vadd.f32 %v183, %v184
      %v186 = vrcp.pop 64.0
      %v187 = vmul.f32 %v185, %v186
      %v188 = vmul.f32 %v156, %v156
      %v189 = vmul.f32 %v157, %v157
      %v190 = vmul.f32 %v158, %v158
      %v191 = vmul.f32 %v159, %v159
      %v192 = vmul.f32 %v160, %v160
      %v193 = vmul.f32 %v161, %v161
      %v194 = vmul.f32 %v162, %v162
      %v195 = vmul.f32 %v163, %v163
      %v196 = vsel %vm164, %v188, 0.0
      %v197 = vsel %vm164, %v189, 0.0
      %v198 = vadd.f32 %v196, %v197
      %v199 = vsel %vm164, %v190, 0.0
      %v200 = vadd.f32 %v198, %v199
      %v201 = vsel %vm164, %v191, 0.0
      %v202 = vadd.f32 %v200, %v201
      %v203 = vsel %vm164, %v192, 0.0
      %v204 = vadd.f32 %v202, %v203
      %v205 = vsel %vm164, %v193, 0.0
      %v206 = vadd.f32 %v204, %v205
      %v207 = vsel %vm164, %v194, 0.0
      %v208 = vadd.f32 %v206, %v207
      %v209 = vsel %vm164, %v195, 0.0
      %v210 = vadd.f32 %v208, %v209
      %v211 = vrot.slane %v210, 4
      %v212 = vadd.f32 %v210, %v211
      %v213 = vrot.slane %v212, 2
      %v214 = vadd.f32 %v212, %v213
      %v215 = vrot.slane %v214, 1
      %v216 = vadd.f32 %v214, %v215
      %v217 = vmul.f32 %v216, %v186
      %v218 = vmul.f32 %v187, %v187
      %v219 = vsub.f32 %v217, %v218
      %v220 = vmax.f32 %v219, 0.0
      %v221 = vsub.f32 %v156, %v187
      %v222 = vsub.f32 %v157, %v187
      %v223 = vsub.f32 %v158, %v187
      %v224 = vsub.f32 %v159, %v187
      %v225 = vsub.f32 %v160, %v187
      %v226 = vsub.f32 %v161, %v187
      %v227 = vsub.f32 %v162, %v187
      %v228 = vsub.f32 %v163, %v187
      %v229 = vadd.f32 %v220, 1e-05
      %v230 = vrsqrt.pop %v229
      %v231 = vmul.f32 %v221, %v230
      %v232 = vmul.f32 %v222, %v230
      %v233 = vmul.f32 %v223, %v230
      %v234 = vmul.f32 %v224, %v230
      %v235 = vmul.f32 %v225, %v230
      %v236 = vmul.f32 %v226, %v230
      %v237 = vmul.f32 %v227, %v230
      %v238 = vmul.f32 %v228, %v230
      %vm239 = vcmp.gt.f32.partialorder %v231, 0.0
      %vm240 = vcmp.gt.f32.partialorder %v232, 0.0
      %vm241 = vcmp.gt.f32.partialorder %v233, 0.0
      %vm242 = vcmp.gt.f32.partialorder %v234, 0.0
      %vm243 = vcmp.gt.f32.partialorder %v235, 0.0
      %vm244 = vcmp.gt.f32.partialorder %v236, 0.0
      %vm245 = vcmp.gt.f32.partialorder %v237, 0.0
      %vm246 = vcmp.gt.f32.partialorder %v238, 0.0
      %v247 = vmul.f32 %v231, 0.2
      %v248 = vmul.f32 %v232, 0.2
      %v249 = vmul.f32 %v233, 0.2
      %v250 = vmul.f32 %v234, 0.2
      %v251 = vmul.f32 %v235, 0.2
      %v252 = vmul.f32 %v236, 0.2
      %v253 = vmul.f32 %v237, 0.2
      %v254 = vmul.f32 %v238, 0.2
      %v255 = vsel %vm239, %v231, %v247
      %v256 = vsel %vm240, %v232, %v248
      %v257 = vsel %vm241, %v233, %v249
      %v258 = vsel %vm242, %v234, %v250
      %v259 = vsel %vm243, %v235, %v251
      %v260 = vsel %vm244, %v236, %v252
      %v261 = vsel %vm245, %v237, %v253
      %v262 = vsel %vm246, %v238, %v254
      %v263 = vpack.c.bf16 %v256, %v255
      %v264 = vpack.c.bf16 %v258, %v257
      %v265 = vpack.c.bf16 %v260, %v259
      %v266 = vpack.c.bf16 %v262, %v261
      %v271 = vunpack.c.l.b16 %v263
      %v272 = vunpack.c.h.b16 %v263
      %v273 = vunpack.c.l.b16 %v264
      %v274 = vunpack.c.h.b16 %v264
      %v275 = vunpack.c.l.b16 %v265
      %v276 = vunpack.c.h.b16 %v265
      %v277 = vunpack.c.l.b16 %v266
      %v278 = vunpack.c.h.b16 %v266
      %v279 = vpack.c.b16 %v271, %v271
      %v280 = vpack.c.b16 %v272, %v272
      %v281 = vpack.c.b16 %v273, %v273
      %v282 = vpack.c.b16 %v274, %v274
      %v283 = vpack.c.b16 %v275, %v275
      %v284 = vpack.c.b16 %v276, %v276
      %v285 = vpack.c.b16 %v277, %v277
      %v286 = vpack.c.b16 %v278, %v278
      %vm295 = vcmask 125952
      %296 = vst.msk [vmem:[%s147] sm:$0xf] %vm295, %v279
      %297 = vst.msk [vmem:[%s147 + $0x4] sm:$0xf] %vm295, %v280
      %298 = vst.msk [vmem:[%s147 + $0x8] sm:$0xf] %vm295, %v281
      %299 = vst.msk [vmem:[%s147 + $0xc] sm:$0xf] %vm295, %v282
      %300 = vst.msk [vmem:[%s147 + $0x10] sm:$0xf] %vm295, %v283
      %301 = vst.msk [vmem:[%s147 + $0x14] sm:$0xf] %vm295, %v284
      %302 = vst.msk [vmem:[%s147 + $0x18] sm:$0xf] %vm295, %v285
      %303 = vst.msk [vmem:[%s147 + $0x1c] sm:$0xf] %vm295, %v286
      %p304 = scmp.lt.s32.totalorder %s16, 1
      %s305 = scalar_select %p304, %s16, 1
      %p306 = scmp.lt.s32.totalorder %s17, 0
      %s307 = scalar_select %p306, %s17, 0
      %s308 = smul.addr %s305, 8
      %s309 = sadd.s32 %s307, %s308
      %s310 = smul.addr %s309, 4
      %s311 = scalar_lea.vmem %s1, %s310
      // Predicated region
      $region25: #{_lambda_.10} parent=23 // pred_check
        %p312 = pneg %p72
      $region26: #{_lambda_.10} parent=23 // pred_check_branch
        %314 = sbr.rel (%p312) target = $region28
      $region27: #{_lambda_.10} parent=23 // pred_region
        _
      $region28: #{_lambda_.10} parent=23 // pred_fallthru
        _
    $region24: #{_lambda_.10} parent=5 // pred_fallthru
      _
    %p315 = scmp.le.s32.totalorder 2, %s7
    // Predicated region
    $region29: #{_lambda_.10} parent=5 // pred_check
      %p316 = pneg %p315
    $region30: #{_lambda_.10} parent=5 // pred_check_branch
      %318 = sbr.rel (%p316) target = $region32
    $region31: #{_lambda_.10} parent=5 // pred_region
      %s319 = ssub.s32 %s7, 2
      // Predicated region
      $region33: #{_lambda_.10} parent=31 // pred_check
        %p320 = pneg %p78
      $region34: #{_lambda_.10} parent=31 // pred_check_branch
        %322 = sbr.rel (%p320) target = $region36
      $region35: #{_lambda_.10} parent=31 // pred_region
        %p323 = scmp.lt.s32.totalorder %s18, 1
        %s324 = scalar_select %p323, %s18, 1
        %p325 = scmp.lt.s32.totalorder %s19, 0
        %s326 = scalar_select %p325, %s19, 0
        %s327 = smul.addr %s324, 8
        %s328 = sadd.s32 %s326, %s327
        %s329 = smul.addr %s328, 4
        %s330 = scalar_lea.vmem %s1, %s329
      $region36: #{_lambda_.10} parent=31 // pred_fallthru
        _
    $region32: #{_lambda_.10} parent=5 // pred_fallthru
      _
  $region6: #{_lambda_.10} parent=0 // loop_footer
    %s11 = sadd.s32 1, %s7
  $region7: #{_lambda_.10} parent=0 // loop_footer_branch
    %6 = sbr.rel target = $region3
  $region8: #{_lambda_.10} parent=0 // loop_exit
    _

// kernel: _lambda_.9
$region0: #{_lambda_.9}
  #allocation0 [shape = 'u32[]', space=smem, size = 0x4, offset = 0x4, fixed_abs, tag = 'smem constant byte address 0x4 - core index']
  #allocation1 [shape = 'u32[144,128]{1,0:T(1,128)}', space=vmem, size = 0x12000, scoped, tag = 'internal scratch']
  %s0 = inlined_call_operand.vmem [shape: bf16[2,72,64], index: 0, kind: input, shape index: {}]
  %s1 = inlined_call_operand.vmem [shape: bf16[2,64,128], index: 1, kind: input, shape index: {}]
  %s2 = inlined_call_operand.vmem [shape: f32[1,128], index: 2, kind: input, shape index: {}]
  %s3 = inlined_call_operand.vmem [shape: bf16[2,64,128], index: 3, kind: output, shape index: {}]
  %s4 = sld [smem:[#allocation0]]
  $region45: #{_lambda_.9} parent=0
    _
  %s6 = ssub.s32 1, %s4
  %s7 = scalar_select 0, %s6, %s4
  loop: start=0, step=1, limit=4
  $region2: #{_lambda_.9} parent=0 // loop_pre_header
    _
  $region3: #{_lambda_.9} parent=0 // loop_header
    %s9 = sphi 0, %s13
    %p10 = scmp.ge.s32.totalorder %s9, 4
    %s19 = sphi 0, %s21
    %s22 = sphi 0, %s19
    %s23 = sphi 0, %s22
    %s39 = sphi 0, %s23
    %s43 = sphi 0, %s43
    %s45 = sphi 0, %s43
    %s46 = sphi 0, %s45
    %s60 = sphi 0, %s46
    %s64 = sphi 0, %s64
    %s66 = sphi 0, %s64
    %s67 = sphi 0, %s66
    %s81 = sphi 0, %s67
    %s87 = sphi 0, %s89
    %s90 = sphi 0, %s87
    %s91 = sphi 0, %s90
    %s107 = sphi 0, %s91
  $region4: #{_lambda_.9} parent=0 // loop_header_branch
    %12 = sbr.rel (%p10) target = $region8
  $region5: #{_lambda_.9} parent=0 // loop_body
    %s14 = ssub.s32 %s9, 1
    %s15 = ssub.s32 %s9, 2
    %s16 = sadd.s32 %s9, 1
    %s17 = ssub.s32 %s9, %s16
    %p18 = scmp.eq.s32.totalorder %s17, 0
    %s20 = sadd.s32 %s19, 1
    %s21 = scalar_select %p18, %s19, %s20
    %p24 = pneg %p18
    %p25 = scmp.eq.s32.totalorder %s9, 1
    %p26 = por %p24, %p25
    %p27 = scmp.ne.s32.totalorder %s19, %s22
    %p28 = scmp.eq.s32.totalorder %s9, 0
    %p29 = por %p27, %p28
    %p30 = scmp.ne.s32.totalorder %s19, %s22
    %p31 = scmp.eq.s32.totalorder %s14, 1
    %p32 = por %p30, %p31
    %p33 = scmp.ne.s32.totalorder %s22, %s23
    %p34 = scmp.eq.s32.totalorder %s14, 0
    %p35 = por %p33, %p34
    %p36 = scmp.ne.s32.totalorder %s22, %s23
    %p37 = scmp.eq.s32.totalorder %s15, 1
    %p38 = por %p36, %p37
    %p40 = scmp.ne.s32.totalorder %s23, %s39
    %p41 = scmp.eq.s32.totalorder %s15, 0
    %p42 = por %p40, %p41
    %s44 = sadd.s32 %s43, 1
    %p47 = scmp.eq.s32.totalorder %s9, 1
    %p48 = scmp.ne.s32.totalorder %s43, %s45
    %p49 = scmp.eq.s32.totalorder %s9, 0
    %p50 = por %p48, %p49
    %p51 = scmp.ne.s32.totalorder %s43, %s45
    %p52 = scmp.eq.s32.totalorder %s14, 1
    %p53 = por %p51, %p52
    %p54 = scmp.ne.s32.totalorder %s45, %s46
    %p55 = scmp.eq.s32.totalorder %s14, 0
    %p56 = por %p54, %p55
    %p57 = scmp.ne.s32.totalorder %s45, %s46
    %p58 = scmp.eq.s32.totalorder %s15, 1
    %p59 = por %p57, %p58
    %p61 = scmp.ne.s32.totalorder %s46, %s60
    %p62 = scmp.eq.s32.totalorder %s15, 0
    %p63 = por %p61, %p62
    %s65 = sadd.s32 %s64, 1
    %p68 = scmp.eq.s32.totalorder %s9, 1
    %p69 = scmp.ne.s32.totalorder %s64, %s66
    %p70 = scmp.eq.s32.totalorder %s9, 0
    %p71 = por %p69, %p70
    %p72 = scmp.ne.s32.totalorder %s64, %s66
    %p73 = scmp.eq.s32.totalorder %s14, 1
    %p74 = por %p72, %p73
    %p75 = scmp.ne.s32.totalorder %s66, %s67
    %p76 = scmp.eq.s32.totalorder %s14, 0
    %p77 = por %p75, %p76
    %p78 = scmp.ne.s32.totalorder %s66, %s67
    %p79 = scmp.eq.s32.totalorder %s15, 1
    %p80 = por %p78, %p79
    %p82 = scmp.ne.s32.totalorder %s67, %s81
    %p83 = scmp.eq.s32.totalorder %s15, 0
    %p84 = por %p82, %p83
    %s85 = ssub.s32 %s9, %s16
    %p86 = scmp.eq.s32.totalorder %s85, 0
    %s88 = sadd.s32 %s87, 1
    %s89 = scalar_select %p86, %s87, %s88
    %p92 = pneg %p86
    %p93 = scmp.eq.s32.totalorder %s9, 1
    %p94 = por %p92, %p93
    %p95 = scmp.ne.s32.totalorder %s87, %s90
    %p96 = scmp.eq.s32.totalorder %s9, 0
    %p97 = por %p95, %p96
    %p98 = scmp.ne.s32.totalorder %s87, %s90
    %p99 = scmp.eq.s32.totalorder %s14, 1
    %p100 = por %p98, %p99
    %p101 = scmp.ne.s32.totalorder %s90, %s91
    %p102 = scmp.eq.s32.totalorder %s14, 0
    %p103 = por %p101, %p102
    %p104 = scmp.ne.s32.totalorder %s90, %s91
    %p105 = scmp.eq.s32.totalorder %s15, 1
    %p106 = por %p104, %p105
    %p108 = scmp.ne.s32.totalorder %s91, %s107
    %p109 = scmp.eq.s32.totalorder %s15, 0
    %p110 = por %p108, %p109
    %p111 = scmp.le.s32.totalorder 1, %s9
    %p112 = scmp.lt.s32.totalorder %s9, 3
    %p113 = pnand %p111, %p112
    %p114 = pneg %p113
    // Predicated region
    $region9: #{_lambda_.9} parent=5 // pred_check
      _
    $region10: #{_lambda_.9} parent=5 // pred_check_branch
      %116 = sbr.rel (%p113) target = $region12
    $region11: #{_lambda_.9} parent=5 // pred_region
      %s117 = ssub.s32 %s9, 1
      // Predicated region
      $region13: #{_lambda_.9} parent=11 // pred_check
        %p118 = pneg %p56
      $region14: #{_lambda_.9} parent=11 // pred_check_branch
        %120 = sbr.rel (%p118) target = $region16
      $region15: #{_lambda_.9} parent=11 // pred_region
        _
      $region16: #{_lambda_.9} parent=11 // pred_fallthru
        _
      // Predicated region
      $region17: #{_lambda_.9} parent=11 // pred_check
        %p121 = pneg %p77
      $region18: #{_lambda_.9} parent=11 // pred_check_branch
        %123 = sbr.rel (%p121) target = $region20
      $region19: #{_lambda_.9} parent=11 // pred_region
        _
      $region20: #{_lambda_.9} parent=11 // pred_fallthru
        _
    $region12: #{_lambda_.9} parent=5 // pred_fallthru
      _
    %p124 = scmp.lt.s32.totalorder %s9, 2
    // Predicated region
    $region21: #{_lambda_.9} parent=5 // pred_check
      %p125 = pneg %p124
    $region22: #{_lambda_.9} parent=5 // pred_check_branch
      %127 = sbr.rel (%p125) target = $region24
    $region23: #{_lambda_.9} parent=5 // pred_region
      // Predicated region
      $region25: #{_lambda_.9} parent=23 // pred_check
        %p128 = pneg %p29
      $region26: #{_lambda_.9} parent=23 // pred_check_branch
        %130 = sbr.rel (%p128) target = $region28
      $region27: #{_lambda_.9} parent=23 // pred_region
        %p131 = scmp.lt.s32.totalorder %s9, 1
        %s132 = scalar_select %p131, %s9, 1
        %s133 = smul.addr %s132, 9
        %s134 = smul.addr %s133, 4
        %s135 = scalar_lea.vmem %s0, %s134
      $region28: #{_lambda_.9} parent=23 // pred_fallthru
        _
    $region24: #{_lambda_.9} parent=5 // pred_fallthru
      _
    %p136 = scmp.le.s32.totalorder 1, %s9
    %p137 = scmp.lt.s32.totalorder %s9, 3
    %p138 = pnand %p136, %p137
    %p139 = pneg %p138
    // Predicated region
    $region29: #{_lambda_.9} parent=5 // pred_check
      _
    $region30: #{_lambda_.9} parent=5 // pred_check_branch
      %141 = sbr.rel (%p138) target = $region32
    $region31: #{_lambda_.9} parent=5 // pred_region
      %s142 = ssub.s32 %s9, 1
      %p143 = scmp.lt.s32.totalorder %s14, 1
      %s144 = scalar_select %p143, %s14, 1
      %s145 = smul.addr %s144, 9
      %s146 = smul.addr %s145, 4
      %s147 = scalar_lea.vmem %s0, %s146
      %p148 = pneg %p35
      %p149 = pneg %p32
      %p150 = pneg %p56
      %p151 = pneg %p53
      %p152 = pneg %p77
      %p153 = pneg %p74
      %p154 = pneg %p103
      %p155 = pneg %p100
      %p156 = scmp.lt.s32.totalorder %s14, 1
      %s157 = scalar_select %p156, %s14, 1
      %s158 = smul.addr %s157, 8
      %s159 = smul.addr %s158, 4
      %s160 = scalar_lea.vmem %s3, %s159
      %p161 = scmp.lt.s32.totalorder %s14, 1
      %s162 = scalar_select %p161, %s14, 1
      %s163 = smul.addr %s162, 9
      %s164 = smul.addr %s163, 4
      %s165 = scalar_lea.vmem %s0, %s164
      %p166 = scmp.lt.s32.totalorder %s14, 1
      %s167 = scalar_select %p166, %s14, 1
      %s168 = smul.addr %s167, 8
      %s169 = smul.addr %s168, 4
      %s170 = scalar_lea.vmem %s3, %s169
      %v172 = vld [vmem:[%s165] sm:$0xf]
      %v173 = vld [vmem:[%s165 + $0x4] sm:$0xf]
      %v174 = vld [vmem:[%s165 + $0x8] sm:$0xf]
      %v175 = vld [vmem:[%s165 + $0xc] sm:$0xf]
      %v176 = vld [vmem:[%s165 + $0x10] sm:$0xf]
      %v177 = vld [vmem:[%s165 + $0x14] sm:$0xf]
      %v178 = vld [vmem:[%s165 + $0x18] sm:$0xf]
      %v179 = vld [vmem:[%s165 + $0x1c] sm:$0xf]
      %v180 = vld [vmem:[%s1] sm:$0xf]
      %v181 = vld [vmem:[%s1 + $0x4] sm:$0xf]
      %v182 = vld [vmem:[%s1 + $0x8] sm:$0xf]
      %v183 = vld [vmem:[%s1 + $0xc] sm:$0xf]
      %v184 = vld [vmem:[%s1 + $0x10] sm:$0xf]
      %v185 = vld [vmem:[%s1 + $0x14] sm:$0xf]
      %v186 = vld [vmem:[%s1 + $0x18] sm:$0xf]
      %v187 = vld [vmem:[%s1 + $0x1c] sm:$0xf]
      %v188 = vld [vmem:[%s165 + $0x20] sm:$0xf]
      %s189 = scalar_lea.vmem %s1, 32
      %v190 = vld [vmem:[%s189] sm:$0xf]
      %v191 = vld [vmem:[%s189 + $0x4] sm:$0xf]
      %v192 = vld [vmem:[%s189 + $0x8] sm:$0xf]
      %v193 = vld [vmem:[%s189 + $0xc] sm:$0xf]
      %v194 = vld [vmem:[%s189 + $0x10] sm:$0xf]
      %v195 = vld [vmem:[%s189 + $0x14] sm:$0xf]
      %v196 = vld [vmem:[%s189 + $0x18] sm:$0xf]
      %v197 = vld [vmem:[%s189 + $0x1c] sm:$0xf]
      %v206 = vunpack.c.l.b16 %v173
      %v207 = vunpack.c.l.b16 %v174
      %v208 = vunpack.c.l.b16 %v175
      %v209 = vunpack.c.l.b16 %v176
      %v210 = vunpack.c.l.b16 %v177
      %v211 = vunpack.c.l.b16 %v178
      %v212 = vunpack.c.l.b16 %v179
      %v213 = vunpack.c.l.b16 %v188
      %v214 = vpack.c.b16 %v207, %v206
      %v215 = vpack.c.b16 %v209, %v208
      %v216 = vpack.c.b16 %v211, %v210
      %v217 = vpack.c.b16 %v213, %v212
      %v226 = vunpack.c.l.b16 %v190
      %v227 = vunpack.c.l.b16 %v191
      %v228 = vunpack.c.l.b16 %v192
      %v229 = vunpack.c.l.b16 %v193
      %v230 = vunpack.c.l.b16 %v194
      %v231 = vunpack.c.l.b16 %v195
      %v232 = vunpack.c.l.b16 %v196
      %v233 = vunpack.c.l.b16 %v197
      %v234 = vpack.c.b16 %v227, %v226
      %v235 = vpack.c.b16 %v229, %v228
      %v236 = vpack.c.b16 %v231, %v230
      %v237 = vpack.c.b16 %v233, %v232
      %vm242 = vcmask 523264
      %v244 = vsel %vm242, %v214, 0
      %v247 = vsel %vm242, %v215, 0
      %v250 = vsel %vm242, %v216, 0
      %v253 = vsel %vm242, %v217, 0
      %255 = vmatprep.subr.bf16.mxu0 0
      %256 = vmatpush1.bf16.msra.mxu0 0
      %257 = vmatprep.subr.bf16.mxu0 0
      %258 = vmatpush1.bf16.msra.mxu0 0
      %259 = vmatprep.subr.bf16.mxu0 0
      %260 = vmatpush1.bf16.msra.mxu0 0
      %261 = vmatprep.subr.bf16.mxu0 0
      %262 = vmatpush1.bf16.msra.mxu0 0
      %263 = vmatprep.subr.bf16.mxu0 0
      %264 = vmatpush1.bf16.msra.mxu0 %v237
      %265 = vmatprep.subr.bf16.mxu0 0
      %266 = vmatpush1.bf16.msra.mxu0 %v236
      %267 = vmatprep.subr.bf16.mxu0 0
      %268 = vmatpush1.bf16.msra.mxu0 %v235
      %269 = vmatprep.subr.bf16.mxu0 0
      %270 = vmatpush1.bf16.msra.mxu0 %v234
      %271 = vmatprep.subr.bf16.mxu0 0
      %272 = vmatpush2.bf16.msra.mxu0 0
      %273 = vmatprep.subr.bf16.mxu0 0
      %274 = vmatpush2.bf16.msra.mxu0 0
      %275 = vmatprep.subr.bf16.mxu0 0
      %276 = vmatpush2.bf16.msra.mxu0 0
      %277 = vmatprep.subr.bf16.mxu0 0
      %278 = vmatpush2.bf16.msra.mxu0 0
      %279 = vmatprep.subr.bf16.mxu0 0
      %280 = vmatpush2.bf16.msra.mxu0 0
      %281 = vmatprep.subr.bf16.mxu0 0
      %282 = vmatpush2.bf16.msra.mxu0 0
      %283 = vmatprep.subr.bf16.mxu0 0
      %284 = vmatpush2.bf16.msra.mxu0 0
      %285 = vmatprep.subr.bf16.mxu0 0
      %286 = vmatpush2.bf16.msra.mxu0 0
      %287 = vmatprep.mubr.bf16.mxu0 0
      %288 = vmatmul.mubr.bf16.gmra.mxu0 %v244
      %v289 = vpop.f32.mrf.mxu0
      %v290 = vadd.f32 0.0, %v289
      %v291 = vpop.f32.mrf.mxu0
      %v292 = vpop.f32.mrf.mxu0
      %v293 = vadd.f32 0.0, %v292
      %v294 = vpop.f32.mrf.mxu0
      %295 = vmatprep.mubr.bf16.mxu0 0
      %296 = vmatmul.mubr.bf16.gmra.mxu0 %v247
      %v297 = vpop.f32.mrf.mxu0
      %v298 = vadd.f32 0.0, %v297
      %v299 = vpop.f32.mrf.mxu0
      %v300 = vpop.f32.mrf.mxu0
      %v301 = vadd.f32 0.0, %v300
      %v302 = vpop.f32.mrf.mxu0
      %303 = vmatprep.mubr.bf16.mxu0 0
      %304 = vmatmul.mubr.bf16.gmra.mxu0 %v250
      %v305 = vpop.f32.mrf.mxu0
      %v306 = vadd.f32 0.0, %v305
      %v307 = vpop.f32.mrf.mxu0
      %v308 = vpop.f32.mrf.mxu0
      %v309 = vadd.f32 0.0, %v308
      %v310 = vpop.f32.mrf.mxu0
      %311 = vmatprep.mubr.bf16.mxu0 0
      %312 = vmatmul.mubr.bf16.gmra.mxu0 %v253
      %v313 = vpop.f32.mrf.mxu0
      %v314 = vadd.f32 0.0, %v313
      %v315 = vpop.f32.mrf.mxu0
      %v316 = vpop.f32.mrf.mxu0
      %v317 = vadd.f32 0.0, %v316
      %v318 = vpop.f32.mrf.mxu0
      %319 = vdwg.mxu0
      %v321 = vunpack.c.l.b16 %v172
      %v322 = vpack.c.b16 %v206, %v321
      %v323 = vpack.c.b16 %v208, %v207
      %v324 = vpack.c.b16 %v210, %v209
      %v325 = vpack.c.b16 %v212, %v211
      %v334 = vunpack.c.l.b16 %v180
      %v335 = vunpack.c.l.b16 %v181
      %v336 = vunpack.c.l.b16 %v182
      %v337 = vunpack.c.l.b16 %v183
      %v338 = vunpack.c.l.b16 %v184
      %v339 = vunpack.c.l.b16 %v185
      %v340 = vunpack.c.l.b16 %v186
      %v341 = vunpack.c.l.b16 %v187
      %v342 = vpack.c.b16 %v335, %v334
      %v343 = vpack.c.b16 %v337, %v336
      %v344 = vpack.c.b16 %v339, %v338
      %v345 = vpack.c.b16 %v341, %v340
      %v351 = vsel %vm242, %v322, 0
      %v354 = vsel %vm242, %v323, 0
      %v357 = vsel %vm242, %v324, 0
      %v360 = vsel %vm242, %v325, 0
      %362 = vmatprep.subr.bf16.mxu0 0
      %363 = vmatpush1.bf16.msra.mxu0 0
      %364 = vmatprep.subr.bf16.mxu0 0
      %365 = vmatpush1.bf16.msra.mxu0 0
      %366 = vmatprep.subr.bf16.mxu0 0
      %367 = vmatpush1.bf16.msra.mxu0 0
      %368 = vmatprep.subr.bf16.mxu0 0
      %369 = vmatpush1.bf16.msra.mxu0 0
      %370 = vmatprep.subr.bf16.mxu0 0
      %371 = vmatpush1.bf16.msra.mxu0 %v345
      %372 = vmatprep.subr.bf16.mxu0 0
      %373 = vmatpush1.bf16.msra.mxu0 %v344
      %374 = vmatprep.subr.bf16.mxu0 0
      %375 = vmatpush1.bf16.msra.mxu0 %v343
      %376 = vmatprep.subr.bf16.mxu0 0
      %377 = vmatpush1.bf16.msra.mxu0 %v342
      %378 = vmatprep.subr.bf16.mxu0 0
      %379 = vmatpush2.bf16.msra.mxu0 0
      %380 = vmatprep.subr.bf16.mxu0 0
      %381 = vmatpush2.bf16.msra.mxu0 0
      %382 = vmatprep.subr.bf16.mxu0 0
      %383 = vmatpush2.bf16.msra.mxu0 0
      %384 = vmatprep.subr.bf16.mxu0 0
      %385 = vmatpush2.bf16.msra.mxu0 0
      %386 = vmatprep.subr.bf16.mxu0 0
      %387 = vmatpush2.bf16.msra.mxu0 0
      %388 = vmatprep.subr.bf16.mxu0 0
      %389 = vmatpush2.bf16.msra.mxu0 0
      %390 = vmatprep.subr.bf16.mxu0 0
      %391 = vmatpush2.bf16.msra.mxu0 0
      %392 = vmatprep.subr.bf16.mxu0 0
      %393 = vmatpush2.bf16.msra.mxu0 0
      %394 = vmatprep.mubr.bf16.mxu0 0
      %395 = vmatmul.mubr.bf16.gmra.mxu0 %v351
      %v396 = vpop.f32.mrf.mxu0
      %v397 = vadd.f32 %v290, %v396
      %v398 = vpop.f32.mrf.mxu0
      %v399 = vpop.f32.mrf.mxu0
      %v400 = vadd.f32 %v293, %v399
      %v401 = vpop.f32.mrf.mxu0
      %402 = vmatprep.mubr.bf16.mxu0 0
      %403 = vmatmul.mubr.bf16.gmra.mxu0 %v354
      %v404 = vpop.f32.mrf.mxu0
      %v405 = vadd.f32 %v298, %v404
      %v406 = vpop.f32.mrf.mxu0
      %v407 = vpop.f32.mrf.mxu0
      %v408 = vadd.f32 %v301, %v407
      %v409 = vpop.f32.mrf.mxu0
      %410 = vmatprep.mubr.bf16.mxu0 0
      %411 = vmatmul.mubr.bf16.gmra.mxu0 %v357
      %v412 = vpop.f32.mrf.mxu0
      %v413 = vadd.f32 %v306, %v412
      %v414 = vpop.f32.mrf.mxu0
      %v415 = vpop.f32.mrf.mxu0
      %v416 = vadd.f32 %v309, %v415
      %v417 = vpop.f32.mrf.mxu0
      %418 = vmatprep.mubr.bf16.mxu0 0
      %419 = vmatmul.mubr.bf16.gmra.mxu0 %v360
      %v420 = vpop.f32.mrf.mxu0
      %v421 = vadd.f32 %v314, %v420
      %v422 = vpop.f32.mrf.mxu0
      %v423 = vpop.f32.mrf.mxu0
      %v424 = vadd.f32 %v317, %v423
      %v425 = vpop.f32.mrf.mxu0
      %426 = vdwg.mxu0
      %v427 = vld [vmem:[%s2] sm:$0x1]
      %v429 = vlaneseq
      %v430 = vshrl.u32 %v429, 7
      %v431 = vsub.s32 0, %v430
      %v432 = vrot.slane %v427, %v431
      %v434 = vadd.f32 %v397, %v432
      %v435 = vadd.f32 %v400, %v432
      %v436 = vadd.f32 %v405, %v432
      %v437 = vadd.f32 %v408, %v432
      %v438 = vadd.f32 %v413, %v432
      %v439 = vadd.f32 %v416, %v432
      %v440 = vadd.f32 %v421, %v432
      %v441 = vadd.f32 %v424, %v432
      %v442 = vpack.c.bf16 %v435, %v434
      %v443 = vpack.c.bf16 %v437, %v436
      %v444 = vpack.c.bf16 %v439, %v438
      %v445 = vpack.c.bf16 %v441, %v440
      %v450 = vunpack.c.l.b16 %v442
      %v451 = vunpack.c.h.b16 %v442
      %v452 = vunpack.c.l.b16 %v443
      %v453 = vunpack.c.h.b16 %v443
      %v454 = vunpack.c.l.b16 %v444
      %v455 = vunpack.c.h.b16 %v444
      %v456 = vunpack.c.l.b16 %v445
      %v457 = vunpack.c.h.b16 %v445
      %v458 = vpack.c.b16 %v450, %v450
      %v459 = vpack.c.b16 %v451, %v451
      %v460 = vpack.c.b16 %v452, %v452
      %v461 = vpack.c.b16 %v453, %v453
      %v462 = vpack.c.b16 %v454, %v454
      %v463 = vpack.c.b16 %v455, %v455
      %v464 = vpack.c.b16 %v456, %v456
      %v465 = vpack.c.b16 %v457, %v457
      %474 = vst [vmem:[%s170] sm:$0xf] %v458
      %475 = vst [vmem:[%s170 + $0x4] sm:$0xf] %v459
      %476 = vst [vmem:[%s170 + $0x8] sm:$0xf] %v460
      %477 = vst [vmem:[%s170 + $0xc] sm:$0xf] %v461
      %478 = vst [vmem:[%s170 + $0x10] sm:$0xf] %v462
      %479 = vst [vmem:[%s170 + $0x14] sm:$0xf] %v463
      %480 = vst [vmem:[%s170 + $0x18] sm:$0xf] %v464
      %481 = vst [vmem:[%s170 + $0x1c] sm:$0xf] %v465
      %p482 = scmp.lt.s32.totalorder %s14, 1
      %s483 = scalar_select %p482, %s14, 1
      %s484 = smul.addr %s483, 8
      %s485 = smul.addr %s484, 4
      %s486 = scalar_lea.vmem %s3, %s485
      // Predicated region
      $region33: #{_lambda_.9} parent=31 // pred_check
        %p487 = pneg %p100
      $region34: #{_lambda_.9} parent=31 // pred_check_branch
        %489 = sbr.rel (%p487) target = $region36
      $region35: #{_lambda_.9} parent=31 // pred_region
        _
      $region36: #{_lambda_.9} parent=31 // pred_fallthru
        _
    $region32: #{_lambda_.9} parent=5 // pred_fallthru
      _
    %p490 = scmp.le.s32.totalorder 2, %s9
    // Predicated region
    $region37: #{_lambda_.9} parent=5 // pred_check
      %p491 = pneg %p490
    $region38: #{_lambda_.9} parent=5 // pred_check_branch
      %493 = sbr.rel (%p491) target = $region40
    $region39: #{_lambda_.9} parent=5 // pred_region
      %s494 = ssub.s32 %s9, 2
      // Predicated region
      $region41: #{_lambda_.9} parent=39 // pred_check
        %p495 = pneg %p106
      $region42: #{_lambda_.9} parent=39 // pred_check_branch
        %497 = sbr.rel (%p495) target = $region44
      $region43: #{_lambda_.9} parent=39 // pred_region
        %p498 = scmp.lt.s32.totalorder %s15, 1
        %s499 = scalar_select %p498, %s15, 1
        %s500 = smul.addr %s499, 8
        %s501 = smul.addr %s500, 4
        %s502 = scalar_lea.vmem %s3, %s501
      $region44: #{_lambda_.9} parent=39 // pred_fallthru
        _
    $region40: #{_lambda_.9} parent=5 // pred_fallthru
      _
  $region6: #{_lambda_.9} parent=0 // loop_footer
    %s13 = sadd.s32 1, %s9
  $region7: #{_lambda_.9} parent=0 // loop_footer_branch
    %8 = sbr.rel target = $region3
  $region8: #{_lambda_.9} parent=0 // loop_exit
    _

// kernel: _lambda_.12
$region0: #{_lambda_.12}
  #allocation0 [shape = 'u32[]', space=smem, size = 0x4, offset = 0x4, fixed_abs, tag = 'smem constant byte address 0x4 - core index']
  #allocation1 [shape = 'u32[144,128]{1,0:T(1,128)}', space=vmem, size = 0x12000, scoped, tag = 'internal scratch']
  %s0 = inlined_call_operand.vmem [shape: bf16[2,16,32], index: 0, kind: input, shape index: {}]
  %s1 = inlined_call_operand.vmem [shape: bf16[2,16,32], index: 1, kind: output, shape index: {}]
  %s2 = sld [smem:[#allocation0]]
  $region37: #{_lambda_.12} parent=0
    _
  %s4 = ssub.s32 1, %s2
  %s5 = scalar_select 0, %s4, %s2
  loop: start=0, step=1, limit=4
  $region2: #{_lambda_.12} parent=0 // loop_pre_header
    _
  $region3: #{_lambda_.12} parent=0 // loop_header
    %s7 = sphi 0, %s11
    %p8 = scmp.ge.s32.totalorder %s7, 4
    %s14 = sphi 0, %s26
    %s15 = sphi 0, %s22
    %s16 = sphi 0, %s14
    %s17 = sphi 0, %s15
    %s18 = sphi 0, %s16
    %s19 = sphi 0, %s17
    %s31 = sphi 0, %s33
    %s34 = sphi 0, %s31
    %s35 = sphi 0, %s34
    %s51 = sphi 0, %s35
    %s59 = sphi 0, %s61
    %s62 = sphi 0, %s59
    %s63 = sphi 0, %s62
    %s79 = sphi 0, %s63
  $region4: #{_lambda_.12} parent=0 // loop_header_branch
    %10 = sbr.rel (%p8) target = $region8
  $region5: #{_lambda_.12} parent=0 // loop_body
    %s12 = ssub.s32 %s7, 1
    %s13 = ssub.s32 %s7, 2
    %s20 = sadd.s32 1, %s15
    %p21 = scmp.ge.s32.totalorder %s20, 1
    %s22 = scalar_select %p21, 0, %s20
    %s23 = sadd.s32 1, %s14
    %s24 = scalar_select %p21, %s23, %s14
    %p25 = scmp.ge.s32.totalorder %s24, 2
    %s26 = scalar_select %p25, 0, %s24
    %s27 = ssub.s32 %s14, %s26
    %s28 = ssub.s32 %s15, %s22
    %s29 = sor.u32 %s27, %s28
    %p30 = scmp.eq.s32.totalorder %s29, 0
    %s32 = sadd.s32 %s31, 1
    %s33 = scalar_select %p30, %s31, %s32
    %p36 = pneg %p30
    %p37 = scmp.eq.s32.totalorder %s7, 1
    %p38 = por %p36, %p37
    %p39 = scmp.ne.s32.totalorder %s31, %s34
    %p40 = scmp.eq.s32.totalorder %s7, 0
    %p41 = por %p39, %p40
    %p42 = scmp.ne.s32.totalorder %s31, %s34
    %p43 = scmp.eq.s32.totalorder %s12, 1
    %p44 = por %p42, %p43
    %p45 = scmp.ne.s32.totalorder %s34, %s35
    %p46 = scmp.eq.s32.totalorder %s12, 0
    %p47 = por %p45, %p46
    %p48 = scmp.ne.s32.totalorder %s34, %s35
    %p49 = scmp.eq.s32.totalorder %s13, 1
    %p50 = por %p48, %p49
    %p52 = scmp.ne.s32.totalorder %s35, %s51
    %p53 = scmp.eq.s32.totalorder %s13, 0
    %p54 = por %p52, %p53
    %s55 = ssub.s32 %s14, %s26
    %s56 = ssub.s32 %s15, %s22
    %s57 = sor.u32 %s55, %s56
    %p58 = scmp.eq.s32.totalorder %s57, 0
    %s60 = sadd.s32 %s59, 1
    %s61 = scalar_select %p58, %s59, %s60
    %p64 = pneg %p58
    %p65 = scmp.eq.s32.totalorder %s7, 1
    %p66 = por %p64, %p65
    %p67 = scmp.ne.s32.totalorder %s59, %s62
    %p68 = scmp.eq.s32.totalorder %s7, 0
    %p69 = por %p67, %p68
    %p70 = scmp.ne.s32.totalorder %s59, %s62
    %p71 = scmp.eq.s32.totalorder %s12, 1
    %p72 = por %p70, %p71
    %p73 = scmp.ne.s32.totalorder %s62, %s63
    %p74 = scmp.eq.s32.totalorder %s12, 0
    %p75 = por %p73, %p74
    %p76 = scmp.ne.s32.totalorder %s62, %s63
    %p77 = scmp.eq.s32.totalorder %s13, 1
    %p78 = por %p76, %p77
    %p80 = scmp.ne.s32.totalorder %s63, %s79
    %p81 = scmp.eq.s32.totalorder %s13, 0
    %p82 = por %p80, %p81
    %p83 = scmp.le.s32.totalorder 1, %s7
    %p84 = scmp.lt.s32.totalorder %s7, 3
    %p85 = pnand %p83, %p84
    %p86 = pneg %p85
    // Predicated region
    $region9: #{_lambda_.12} parent=5 // pred_check
      _
    $region10: #{_lambda_.12} parent=5 // pred_check_branch
      %88 = sbr.rel (%p85) target = $region12
    $region11: #{_lambda_.12} parent=5 // pred_region
      %s89 = ssub.s32 %s7, 1
    $region12: #{_lambda_.12} parent=5 // pred_fallthru
      _
    %p90 = scmp.lt.s32.totalorder %s7, 2
    // Predicated region
    $region13: #{_lambda_.12} parent=5 // pred_check
      %p91 = pneg %p90
    $region14: #{_lambda_.12} parent=5 // pred_check_branch
      %93 = sbr.rel (%p91) target = $region16
    $region15: #{_lambda_.12} parent=5 // pred_region
      // Predicated region
      $region17: #{_lambda_.12} parent=15 // pred_check
        %p94 = pneg %p41
      $region18: #{_lambda_.12} parent=15 // pred_check_branch
        %96 = sbr.rel (%p94) target = $region20
      $region19: #{_lambda_.12} parent=15 // pred_region
        %p97 = scmp.lt.s32.totalorder %s14, 1
        %s98 = scalar_select %p97, %s14, 1
        %p99 = scmp.lt.s32.totalorder %s15, 0
        %s100 = scalar_select %p99, %s15, 0
        %s101 = smul.addr %s98, 2
        %s102 = sadd.s32 %s100, %s101
        %s103 = smul.addr %s102, 4
        %s104 = scalar_lea.vmem %s0, %s103
      $region20: #{_lambda_.12} parent=15 // pred_fallthru
        _
    $region16: #{_lambda_.12} parent=5 // pred_fallthru
      _
    %p105 = scmp.le.s32.totalorder 1, %s7
    %p106 = scmp.lt.s32.totalorder %s7, 3
    %p107 = pnand %p105, %p106
    %p108 = pneg %p107
    // Predicated region
    $region21: #{_lambda_.12} parent=5 // pred_check
      _
    $region22: #{_lambda_.12} parent=5 // pred_check_branch
      %110 = sbr.rel (%p107) target = $region24
    $region23: #{_lambda_.12} parent=5 // pred_region
      %s111 = ssub.s32 %s7, 1
      %p112 = scmp.lt.s32.totalorder %s16, 1
      %s113 = scalar_select %p112, %s16, 1
      %p114 = scmp.lt.s32.totalorder %s17, 0
      %s115 = scalar_select %p114, %s17, 0
      %s116 = smul.addr %s113, 2
      %s117 = sadd.s32 %s115, %s116
      %s118 = smul.addr %s117, 4
      %s119 = scalar_lea.vmem %s0, %s118
      %p120 = pneg %p47
      %p121 = pneg %p44
      %p122 = pneg %p75
      %p123 = pneg %p72
      %p124 = scmp.lt.s32.totalorder %s16, 1
      %s125 = scalar_select %p124, %s16, 1
      %p126 = scmp.lt.s32.totalorder %s17, 0
      %s127 = scalar_select %p126, %s17, 0
      %s128 = smul.addr %s125, 2
      %s129 = sadd.s32 %s127, %s128
      %s130 = smul.addr %s129, 4
      %s131 = scalar_lea.vmem %s1, %s130
      %p132 = scmp.lt.s32.totalorder %s16, 1
      %s133 = scalar_select %p132, %s16, 1
      %p134 = scmp.lt.s32.totalorder %s17, 0
      %s135 = scalar_select %p134, %s17, 0
      %s136 = smul.addr %s133, 2
      %s137 = sadd.s32 %s135, %s136
      %s138 = smul.addr %s137, 4
      %s139 = scalar_lea.vmem %s0, %s138
      %p140 = scmp.lt.s32.totalorder %s16, 1
      %s141 = scalar_select %p140, %s16, 1
      %p142 = scmp.lt.s32.totalorder %s17, 0
      %s143 = scalar_select %p142, %s17, 0
      %s144 = smul.addr %s141, 2
      %s145 = sadd.s32 %s143, %s144
      %s146 = smul.addr %s145, 4
      %s147 = scalar_lea.vmem %s1, %s146
      %v148 = vld [vmem:[%s139] sm:$0xf]
      %v149 = vld [vmem:[%s139 + $0x4] sm:$0xf]
      %v150 = vunpack.c.l.bf16 %v148
      %v151 = vunpack.c.l.bf16 %v149
      %vm152 = vcmask 261120
      %v153 = vsel %vm152, %v150, 0.0
      %v154 = vsel %vm152, %v151, 0.0
      %v155 = vadd.f32 %v153, %v154
      %v156 = vrot.slane %v155, 4
      %v157 = vadd.f32 %v155, %v156
      %v158 = vrot.slane %v157, 2
      %v159 = vadd.f32 %v157, %v158
      %v160 = vrot.slane %v159, 1
      %v161 = vadd.f32 %v159, %v160
      %v162 = vrcp.pop 16.0
      %v163 = vmul.f32 %v161, %v162
      %v164 = vmul.f32 %v150, %v150
      %v165 = vmul.f32 %v151, %v151
      %v166 = vsel %vm152, %v164, 0.0
      %v167 = vsel %vm152, %v165, 0.0
      %v168 = vadd.f32 %v166, %v167
      %v169 = vrot.slane %v168, 4
      %v170 = vadd.f32 %v168, %v169
      %v171 = vrot.slane %v170, 2
      %v172 = vadd.f32 %v170, %v171
      %v173 = vrot.slane %v172, 1
      %v174 = vadd.f32 %v172, %v173
      %v175 = vmul.f32 %v174, %v162
      %v176 = vmul.f32 %v163, %v163
      %v177 = vsub.f32 %v175, %v176
      %v178 = vmax.f32 %v177, 0.0
      %v179 = vsub.f32 %v150, %v163
      %v180 = vsub.f32 %v151, %v163
      %v181 = vadd.f32 %v178, 1e-05
      %v182 = vrsqrt.pop %v181
      %v183 = vmul.f32 %v179, %v182
      %v184 = vmul.f32 %v180, %v182
      %vm185 = vcmp.gt.f32.partialorder %v183, 0.0
      %vm186 = vcmp.gt.f32.partialorder %v184, 0.0
      %v187 = vmul.f32 %v183, 0.2
      %v188 = vmul.f32 %v184, 0.2
      %v189 = vsel %vm185, %v183, %v187
      %v190 = vsel %vm186, %v184, %v188
      %v191 = vpack.c.bf16 %v190, %v189
      %v193 = vunpack.c.l.b16 %v191
      %v194 = vunpack.c.h.b16 %v191
      %v195 = vpack.c.b16 %v193, %v193
      %v196 = vpack.c.b16 %v194, %v194
      %vm199 = vcmask 257024
      %200 = vst.msk [vmem:[%s147] sm:$0xf] %vm199, %v195
      %201 = vst.msk [vmem:[%s147 + $0x4] sm:$0xf] %vm199, %v196
      %p202 = scmp.lt.s32.totalorder %s16, 1
      %s203 = scalar_select %p202, %s16, 1
      %p204 = scmp.lt.s32.totalorder %s17, 0
      %s205 = scalar_select %p204, %s17, 0
      %s206 = smul.addr %s203, 2
      %s207 = sadd.s32 %s205, %s206
      %s208 = smul.addr %s207, 4
      %s209 = scalar_lea.vmem %s1, %s208
      // Predicated region
      $region25: #{_lambda_.12} parent=23 // pred_check
        %p210 = pneg %p72
      $region26: #{_lambda_.12} parent=23 // pred_check_branch
        %212 = sbr.rel (%p210) target = $region28
      $region27: #{_lambda_.12} parent=23 // pred_region
        _
      $region28: #{_lambda_.12} parent=23 // pred_fallthru
        _
    $region24: #{_lambda_.12} parent=5 // pred_fallthru
      _
    %p213 = scmp.le.s32.totalorder 2, %s7
    // Predicated region
    $region29: #{_lambda_.12} parent=5 // pred_check
      %p214 = pneg %p213
    $region30: #{_lambda_.12} parent=5 // pred_check_branch
      %216 = sbr.rel (%p214) target = $region32
    $region31: #{_lambda_.12} parent=5 // pred_region
      %s217 = ssub.s32 %s7, 2
      // Predicated region
      $region33: #{_lambda_.12} parent=31 // pred_check
        %p218 = pneg %p78
      $region34: #{_lambda_.12} parent=31 // pred_check_branch
        %220 = sbr.rel (%p218) target = $region36
      $region35: #{_lambda_.12} parent=31 // pred_region
        %p221 = scmp.lt.s32.totalorder %s18, 1
        %s222 = scalar_select %p221, %s18, 1
        %p223 = scmp.lt.s32.totalorder %s19, 0
        %s224 = scalar_select %p223, %s19, 0
        %s225 = smul.addr %s222, 2
        %s226 = sadd.s32 %s224, %s225
        %s227 = smul.addr %s226, 4
        %s228 = scalar_lea.vmem %s1, %s227
      $region36: #{_lambda_.12} parent=31 // pred_fallthru
        _
    $region32: #{_lambda_.12} parent=5 // pred_fallthru
      _
  $region6: #{_lambda_.12} parent=0 // loop_footer
    %s11 = sadd.s32 1, %s7
  $region7: #{_lambda_.12} parent=0 // loop_footer_branch
    %6 = sbr.rel target = $region3
  $region8: #{_lambda_.12} parent=0 // loop_exit
    _

// kernel: _lambda_.11
$region0: #{_lambda_.11}
  #allocation0 [shape = 'u32[]', space=smem, size = 0x4, offset = 0x4, fixed_abs, tag = 'smem constant byte address 0x4 - core index']
  #allocation1 [shape = 'u32[144,128]{1,0:T(1,128)}', space=vmem, size = 0x12000, scoped, tag = 'internal scratch']
  %s0 = inlined_call_operand.vmem [shape: bf16[2,40,128], index: 0, kind: input, shape index: {}]
  %s1 = inlined_call_operand.vmem [shape: bf16[2,128,128], index: 1, kind: input, shape index: {}]
  %s2 = inlined_call_operand.vmem [shape: f32[1,128], index: 2, kind: input, shape index: {}]
  %s3 = inlined_call_operand.vmem [shape: bf16[2,32,128], index: 3, kind: output, shape index: {}]
  %s4 = sld [smem:[#allocation0]]
  $region45: #{_lambda_.11} parent=0
    _
  %s6 = ssub.s32 1, %s4
  %s7 = scalar_select 0, %s6, %s4
  loop: start=0, step=1, limit=4
  $region2: #{_lambda_.11} parent=0 // loop_pre_header
    _
  $region3: #{_lambda_.11} parent=0 // loop_header
    %s9 = sphi 0, %s13
    %p10 = scmp.ge.s32.totalorder %s9, 4
    %s19 = sphi 0, %s21
    %s22 = sphi 0, %s19
    %s23 = sphi 0, %s22
    %s39 = sphi 0, %s23
    %s43 = sphi 0, %s43
    %s45 = sphi 0, %s43
    %s46 = sphi 0, %s45
    %s60 = sphi 0, %s46
    %s64 = sphi 0, %s64
    %s66 = sphi 0, %s64
    %s67 = sphi 0, %s66
    %s81 = sphi 0, %s67
    %s87 = sphi 0, %s89
    %s90 = sphi 0, %s87
    %s91 = sphi 0, %s90
    %s107 = sphi 0, %s91
  $region4: #{_lambda_.11} parent=0 // loop_header_branch
    %12 = sbr.rel (%p10) target = $region8
  $region5: #{_lambda_.11} parent=0 // loop_body
    %s14 = ssub.s32 %s9, 1
    %s15 = ssub.s32 %s9, 2
    %s16 = sadd.s32 %s9, 1
    %s17 = ssub.s32 %s9, %s16
    %p18 = scmp.eq.s32.totalorder %s17, 0
    %s20 = sadd.s32 %s19, 1
    %s21 = scalar_select %p18, %s19, %s20
    %p24 = pneg %p18
    %p25 = scmp.eq.s32.totalorder %s9, 1
    %p26 = por %p24, %p25
    %p27 = scmp.ne.s32.totalorder %s19, %s22
    %p28 = scmp.eq.s32.totalorder %s9, 0
    %p29 = por %p27, %p28
    %p30 = scmp.ne.s32.totalorder %s19, %s22
    %p31 = scmp.eq.s32.totalorder %s14, 1
    %p32 = por %p30, %p31
    %p33 = scmp.ne.s32.totalorder %s22, %s23
    %p34 = scmp.eq.s32.totalorder %s14, 0
    %p35 = por %p33, %p34
    %p36 = scmp.ne.s32.totalorder %s22, %s23
    %p37 = scmp.eq.s32.totalorder %s15, 1
    %p38 = por %p36, %p37
    %p40 = scmp.ne.s32.totalorder %s23, %s39
    %p41 = scmp.eq.s32.totalorder %s15, 0
    %p42 = por %p40, %p41
    %s44 = sadd.s32 %s43, 1
    %p47 = scmp.eq.s32.totalorder %s9, 1
    %p48 = scmp.ne.s32.totalorder %s43, %s45
    %p49 = scmp.eq.s32.totalorder %s9, 0
    %p50 = por %p48, %p49
    %p51 = scmp.ne.s32.totalorder %s43, %s45
    %p52 = scmp.eq.s32.totalorder %s14, 1
    %p53 = por %p51, %p52
    %p54 = scmp.ne.s32.totalorder %s45, %s46
    %p55 = scmp.eq.s32.totalorder %s14, 0
    %p56 = por %p54, %p55
    %p57 = scmp.ne.s32.totalorder %s45, %s46
    %p58 = scmp.eq.s32.totalorder %s15, 1
    %p59 = por %p57, %p58
    %p61 = scmp.ne.s32.totalorder %s46, %s60
    %p62 = scmp.eq.s32.totalorder %s15, 0
    %p63 = por %p61, %p62
    %s65 = sadd.s32 %s64, 1
    %p68 = scmp.eq.s32.totalorder %s9, 1
    %p69 = scmp.ne.s32.totalorder %s64, %s66
    %p70 = scmp.eq.s32.totalorder %s9, 0
    %p71 = por %p69, %p70
    %p72 = scmp.ne.s32.totalorder %s64, %s66
    %p73 = scmp.eq.s32.totalorder %s14, 1
    %p74 = por %p72, %p73
    %p75 = scmp.ne.s32.totalorder %s66, %s67
    %p76 = scmp.eq.s32.totalorder %s14, 0
    %p77 = por %p75, %p76
    %p78 = scmp.ne.s32.totalorder %s66, %s67
    %p79 = scmp.eq.s32.totalorder %s15, 1
    %p80 = por %p78, %p79
    %p82 = scmp.ne.s32.totalorder %s67, %s81
    %p83 = scmp.eq.s32.totalorder %s15, 0
    %p84 = por %p82, %p83
    %s85 = ssub.s32 %s9, %s16
    %p86 = scmp.eq.s32.totalorder %s85, 0
    %s88 = sadd.s32 %s87, 1
    %s89 = scalar_select %p86, %s87, %s88
    %p92 = pneg %p86
    %p93 = scmp.eq.s32.totalorder %s9, 1
    %p94 = por %p92, %p93
    %p95 = scmp.ne.s32.totalorder %s87, %s90
    %p96 = scmp.eq.s32.totalorder %s9, 0
    %p97 = por %p95, %p96
    %p98 = scmp.ne.s32.totalorder %s87, %s90
    %p99 = scmp.eq.s32.totalorder %s14, 1
    %p100 = por %p98, %p99
    %p101 = scmp.ne.s32.totalorder %s90, %s91
    %p102 = scmp.eq.s32.totalorder %s14, 0
    %p103 = por %p101, %p102
    %p104 = scmp.ne.s32.totalorder %s90, %s91
    %p105 = scmp.eq.s32.totalorder %s15, 1
    %p106 = por %p104, %p105
    %p108 = scmp.ne.s32.totalorder %s91, %s107
    %p109 = scmp.eq.s32.totalorder %s15, 0
    %p110 = por %p108, %p109
    %p111 = scmp.le.s32.totalorder 1, %s9
    %p112 = scmp.lt.s32.totalorder %s9, 3
    %p113 = pnand %p111, %p112
    %p114 = pneg %p113
    // Predicated region
    $region9: #{_lambda_.11} parent=5 // pred_check
      _
    $region10: #{_lambda_.11} parent=5 // pred_check_branch
      %116 = sbr.rel (%p113) target = $region12
    $region11: #{_lambda_.11} parent=5 // pred_region
      %s117 = ssub.s32 %s9, 1
      // Predicated region
      $region13: #{_lambda_.11} parent=11 // pred_check
        %p118 = pneg %p56
      $region14: #{_lambda_.11} parent=11 // pred_check_branch
        %120 = sbr.rel (%p118) target = $region16
      $region15: #{_lambda_.11} parent=11 // pred_region
        _
      $region16: #{_lambda_.11} parent=11 // pred_fallthru
        _
      // Predicated region
      $region17: #{_lambda_.11} parent=11 // pred_check
        %p121 = pneg %p77
      $region18: #{_lambda_.11} parent=11 // pred_check_branch
        %123 = sbr.rel (%p121) target = $region20
      $region19: #{_lambda_.11} parent=11 // pred_region
        _
      $region20: #{_lambda_.11} parent=11 // pred_fallthru
        _
    $region12: #{_lambda_.11} parent=5 // pred_fallthru
      _
    %p124 = scmp.lt.s32.totalorder %s9, 2
    // Predicated region
    $region21: #{_lambda_.11} parent=5 // pred_check
      %p125 = pneg %p124
    $region22: #{_lambda_.11} parent=5 // pred_check_branch
      %127 = sbr.rel (%p125) target = $region24
    $region23: #{_lambda_.11} parent=5 // pred_region
      // Predicated region
      $region25: #{_lambda_.11} parent=23 // pred_check
        %p128 = pneg %p29
      $region26: #{_lambda_.11} parent=23 // pred_check_branch
        %130 = sbr.rel (%p128) target = $region28
      $region27: #{_lambda_.11} parent=23 // pred_region
        %p131 = scmp.lt.s32.totalorder %s9, 1
        %s132 = scalar_select %p131, %s9, 1
        %s133 = smul.addr %s132, 5
        %s134 = smul.addr %s133, 4
        %s135 = scalar_lea.vmem %s0, %s134
      $region28: #{_lambda_.11} parent=23 // pred_fallthru
        _
    $region24: #{_lambda_.11} parent=5 // pred_fallthru
      _
    %p136 = scmp.le.s32.totalorder 1, %s9
    %p137 = scmp.lt.s32.totalorder %s9, 3
    %p138 = pnand %p136, %p137
    %p139 = pneg %p138
    // Predicated region
    $region29: #{_lambda_.11} parent=5 // pred_check
      _
    $region30: #{_lambda_.11} parent=5 // pred_check_branch
      %141 = sbr.rel (%p138) target = $region32
    $region31: #{_lambda_.11} parent=5 // pred_region
      %s142 = ssub.s32 %s9, 1
      %p143 = scmp.lt.s32.totalorder %s14, 1
      %s144 = scalar_select %p143, %s14, 1
      %s145 = smul.addr %s144, 5
      %s146 = smul.addr %s145, 4
      %s147 = scalar_lea.vmem %s0, %s146
      %p148 = pneg %p35
      %p149 = pneg %p32
      %p150 = pneg %p56
      %p151 = pneg %p53
      %p152 = pneg %p77
      %p153 = pneg %p74
      %p154 = pneg %p103
      %p155 = pneg %p100
      %p156 = scmp.lt.s32.totalorder %s14, 1
      %s157 = scalar_select %p156, %s14, 1
      %s158 = smul.addr %s157, 4
      %s159 = smul.addr %s158, 4
      %s160 = scalar_lea.vmem %s3, %s159
      %p161 = scmp.lt.s32.totalorder %s14, 1
      %s162 = scalar_select %p161, %s14, 1
      %s163 = smul.addr %s162, 5
      %s164 = smul.addr %s163, 4
      %s165 = scalar_lea.vmem %s0, %s164
      %p166 = scmp.lt.s32.totalorder %s14, 1
      %s167 = scalar_select %p166, %s14, 1
      %s168 = smul.addr %s167, 4
      %s169 = smul.addr %s168, 4
      %s170 = scalar_lea.vmem %s3, %s169
      %v172 = vld [vmem:[%s165] sm:$0xf]
      %v173 = vld [vmem:[%s165 + $0x4] sm:$0xf]
      %v174 = vld [vmem:[%s165 + $0x8] sm:$0xf]
      %v175 = vld [vmem:[%s165 + $0xc] sm:$0xf]
      %v176 = vld [vmem:[%s1] sm:$0xf]
      %v177 = vld [vmem:[%s1 + $0x4] sm:$0xf]
      %v178 = vld [vmem:[%s1 + $0x8] sm:$0xf]
      %v179 = vld [vmem:[%s1 + $0xc] sm:$0xf]
      %v180 = vld [vmem:[%s1 + $0x10] sm:$0xf]
      %v181 = vld [vmem:[%s1 + $0x14] sm:$0xf]
      %v182 = vld [vmem:[%s1 + $0x18] sm:$0xf]
      %v183 = vld [vmem:[%s1 + $0x1c] sm:$0xf]
      %v184 = vld [vmem:[%s1 + $0x20] sm:$0xf]
      %v185 = vld [vmem:[%s1 + $0x24] sm:$0xf]
      %v186 = vld [vmem:[%s1 + $0x28] sm:$0xf]
      %v187 = vld [vmem:[%s1 + $0x2c] sm:$0xf]
      %v188 = vld [vmem:[%s1 + $0x30] sm:$0xf]
      %v189 = vld [vmem:[%s1 + $0x34] sm:$0xf]
      %v190 = vld [vmem:[%s1 + $0x38] sm:$0xf]
      %v191 = vld [vmem:[%s1 + $0x3c] sm:$0xf]
      %v192 = vld [vmem:[%s165 + $0x4] sm:$0xf]
      %v193 = vld [vmem:[%s165 + $0x8] sm:$0xf]
      %v194 = vld [vmem:[%s165 + $0xc] sm:$0xf]
      %v195 = vld [vmem:[%s165 + $0x10] sm:$0xf]
      %s196 = scalar_lea.vmem %s1, 64
      %v197 = vld [vmem:[%s196] sm:$0xf]
      %v198 = vld [vmem:[%s196 + $0x4] sm:$0xf]
      %v199 = vld [vmem:[%s196 + $0x8] sm:$0xf]
      %v200 = vld [vmem:[%s196 + $0xc] sm:$0xf]
      %v201 = vld [vmem:[%s196 + $0x10] sm:$0xf]
      %v202 = vld [vmem:[%s196 + $0x14] sm:$0xf]
      %v203 = vld [vmem:[%s196 + $0x18] sm:$0xf]
      %v204 = vld [vmem:[%s196 + $0x1c] sm:$0xf]
      %v205 = vld [vmem:[%s196 + $0x20] sm:$0xf]
      %v206 = vld [vmem:[%s196 + $0x24] sm:$0xf]
      %v207 = vld [vmem:[%s196 + $0x28] sm:$0xf]
      %v208 = vld [vmem:[%s196 + $0x2c] sm:$0xf]
      %v209 = vld [vmem:[%s196 + $0x30] sm:$0xf]
      %v210 = vld [vmem:[%s196 + $0x34] sm:$0xf]
      %v211 = vld [vmem:[%s196 + $0x38] sm:$0xf]
      %v212 = vld [vmem:[%s196 + $0x3c] sm:$0xf]
      %v217 = vunpack.c.l.b16 %v192
      %v218 = vunpack.c.l.b16 %v193
      %v219 = vunpack.c.l.b16 %v194
      %v220 = vunpack.c.l.b16 %v195
      %v221 = vpack.c.b16 %v218, %v217
      %v222 = vpack.c.b16 %v220, %v219
      %v241 = vunpack.c.l.b16 %v197
      %v242 = vunpack.c.l.b16 %v198
      %v243 = vunpack.c.l.b16 %v199
      %v244 = vunpack.c.l.b16 %v200
      %v245 = vunpack.c.l.b16 %v201
      %v246 = vunpack.c.l.b16 %v202
      %v247 = vunpack.c.l.b16 %v203
      %v248 = vunpack.c.l.b16 %v204
      %v249 = vunpack.c.l.b16 %v205
      %v250 = vunpack.c.l.b16 %v206
      %v251 = vunpack.c.l.b16 %v207
      %v252 = vunpack.c.l.b16 %v208
      %v253 = vunpack.c.l.b16 %v209
      %v254 = vunpack.c.l.b16 %v210
      %v255 = vunpack.c.l.b16 %v211
      %v256 = vunpack.c.l.b16 %v212
      %v257 = vpack.c.b16 %v242, %v241
      %v258 = vpack.c.b16 %v244, %v243
      %v259 = vpack.c.b16 %v246, %v245
      %v260 = vpack.c.b16 %v248, %v247
      %v261 = vpack.c.b16 %v250, %v249
      %v262 = vpack.c.b16 %v252, %v251
      %v263 = vpack.c.b16 %v254, %v253
      %v264 = vpack.c.b16 %v256, %v255
      %273 = vmatprep.subr.bf16.mxu0 0
      %274 = vmatpush1.bf16.msra.mxu0 %v264
      %275 = vmatprep.subr.bf16.mxu0 0
      %276 = vmatpush1.bf16.msra.mxu0 %v263
      %277 = vmatprep.subr.bf16.mxu0 0
      %278 = vmatpush1.bf16.msra.mxu0 %v262
      %279 = vmatprep.subr.bf16.mxu0 0
      %280 = vmatpush1.bf16.msra.mxu0 %v261
      %281 = vmatprep.subr.bf16.mxu0 0
      %282 = vmatpush1.bf16.msra.mxu0 %v260
      %283 = vmatprep.subr.bf16.mxu0 0
      %284 = vmatpush1.bf16.msra.mxu0 %v259
      %285 = vmatprep.subr.bf16.mxu0 0
      %286 = vmatpush1.bf16.msra.mxu0 %v258
      %287 = vmatprep.subr.bf16.mxu0 0
      %288 = vmatpush1.bf16.msra.mxu0 %v257
      %289 = vmatprep.subr.bf16.mxu0 0
      %290 = vmatpush2.bf16.msra.mxu0 0
      %291 = vmatprep.subr.bf16.mxu0 0
      %292 = vmatpush2.bf16.msra.mxu0 0
      %293 = vmatprep.subr.bf16.mxu0 0
      %294 = vmatpush2.bf16.msra.mxu0 0
      %295 = vmatprep.subr.bf16.mxu0 0
      %296 = vmatpush2.bf16.msra.mxu0 0
      %297 = vmatprep.subr.bf16.mxu0 0
      %298 = vmatpush2.bf16.msra.mxu0 0
      %299 = vmatprep.subr.bf16.mxu0 0
      %300 = vmatpush2.bf16.msra.mxu0 0
      %301 = vmatprep.subr.bf16.mxu0 0
      %302 = vmatpush2.bf16.msra.mxu0 0
      %303 = vmatprep.subr.bf16.mxu0 0
      %304 = vmatpush2.bf16.msra.mxu0 0
      %305 = vmatprep.mubr.bf16.mxu0 0
      %306 = vmatmul.mubr.bf16.gmra.mxu0 %v221
      %v307 = vpop.f32.mrf.mxu0
      %v308 = vadd.f32 0.0, %v307
      %v309 = vpop.f32.mrf.mxu0
      %v310 = vpop.f32.mrf.mxu0
      %v311 = vadd.f32 0.0, %v310
      %v312 = vpop.f32.mrf.mxu0
      %313 = vmatprep.mubr.bf16.mxu0 0
      %314 = vmatmul.mubr.bf16.gmra.mxu0 %v222
      %v315 = vpop.f32.mrf.mxu0
      %v316 = vadd.f32 0.0, %v315
      %v317 = vpop.f32.mrf.mxu0
      %v318 = vpop.f32.mrf.mxu0
      %v319 = vadd.f32 0.0, %v318
      %v320 = vpop.f32.mrf.mxu0
      %321 = vdwg.mxu0
      %v326 = vunpack.c.l.b16 %v172
      %v327 = vunpack.c.l.b16 %v173
      %v328 = vunpack.c.l.b16 %v174
      %v329 = vunpack.c.l.b16 %v175
      %v330 = vpack.c.b16 %v327, %v326
      %v331 = vpack.c.b16 %v329, %v328
      %v350 = vunpack.c.l.b16 %v176
      %v351 = vunpack.c.l.b16 %v177
      %v352 = vunpack.c.l.b16 %v178
      %v353 = vunpack.c.l.b16 %v179
      %v354 = vunpack.c.l.b16 %v180
      %v355 = vunpack.c.l.b16 %v181
      %v356 = vunpack.c.l.b16 %v182
      %v357 = vunpack.c.l.b16 %v183
      %v358 = vunpack.c.l.b16 %v184
      %v359 = vunpack.c.l.b16 %v185
      %v360 = vunpack.c.l.b16 %v186
      %v361 = vunpack.c.l.b16 %v187
      %v362 = vunpack.c.l.b16 %v188
      %v363 = vunpack.c.l.b16 %v189
      %v364 = vunpack.c.l.b16 %v190
      %v365 = vunpack.c.l.b16 %v191
      %v366 = vpack.c.b16 %v351, %v350
      %v367 = vpack.c.b16 %v353, %v352
      %v368 = vpack.c.b16 %v355, %v354
      %v369 = vpack.c.b16 %v357, %v356
      %v370 = vpack.c.b16 %v359, %v358
      %v371 = vpack.c.b16 %v361, %v360
      %v372 = vpack.c.b16 %v363, %v362
      %v373 = vpack.c.b16 %v365, %v364
      %382 = vmatprep.subr.bf16.mxu0 0
      %383 = vmatpush1.bf16.msra.mxu0 %v373
      %384 = vmatprep.subr.bf16.mxu0 0
      %385 = vmatpush1.bf16.msra.mxu0 %v372
      %386 = vmatprep.subr.bf16.mxu0 0
      %387 = vmatpush1.bf16.msra.mxu0 %v371
      %388 = vmatprep.subr.bf16.mxu0 0
      %389 = vmatpush1.bf16.msra.mxu0 %v370
      %390 = vmatprep.subr.bf16.mxu0 0
      %391 = vmatpush1.bf16.msra.mxu0 %v369
      %392 = vmatprep.subr.bf16.mxu0 0
      %393 = vmatpush1.bf16.msra.mxu0 %v368
      %394 = vmatprep.subr.bf16.mxu0 0
      %395 = vmatpush1.bf16.msra.mxu0 %v367
      %396 = vmatprep.subr.bf16.mxu0 0
      %397 = vmatpush1.bf16.msra.mxu0 %v366
      %398 = vmatprep.subr.bf16.mxu0 0
      %399 = vmatpush2.bf16.msra.mxu0 0
      %400 = vmatprep.subr.bf16.mxu0 0
      %401 = vmatpush2.bf16.msra.mxu0 0
      %402 = vmatprep.subr.bf16.mxu0 0
      %403 = vmatpush2.bf16.msra.mxu0 0
      %404 = vmatprep.subr.bf16.mxu0 0
      %405 = vmatpush2.bf16.msra.mxu0 0
      %406 = vmatprep.subr.bf16.mxu0 0
      %407 = vmatpush2.bf16.msra.mxu0 0
      %408 = vmatprep.subr.bf16.mxu0 0
      %409 = vmatpush2.bf16.msra.mxu0 0
      %410 = vmatprep.subr.bf16.mxu0 0
      %411 = vmatpush2.bf16.msra.mxu0 0
      %412 = vmatprep.subr.bf16.mxu0 0
      %413 = vmatpush2.bf16.msra.mxu0 0
      %414 = vmatprep.mubr.bf16.mxu0 0
      %415 = vmatmul.mubr.bf16.gmra.mxu0 %v330
      %v416 = vpop.f32.mrf.mxu0
      %v417 = vadd.f32 %v308, %v416
      %v418 = vpop.f32.mrf.mxu0
      %v419 = vpop.f32.mrf.mxu0
      %v420 = vadd.f32 %v311, %v419
      %v421 = vpop.f32.mrf.mxu0
      %422 = vmatprep.mubr.bf16.mxu0 0
      %423 = vmatmul.mubr.bf16.gmra.mxu0 %v331
      %v424 = vpop.f32.mrf.mxu0
      %v425 = vadd.f32 %v316, %v424
      %v426 = vpop.f32.mrf.mxu0
      %v427 = vpop.f32.mrf.mxu0
      %v428 = vadd.f32 %v319, %v427
      %v429 = vpop.f32.mrf.mxu0
      %430 = vdwg.mxu0
      %v431 = vld [vmem:[%s2] sm:$0x1]
      %v433 = vlaneseq
      %v434 = vshrl.u32 %v433, 7
      %v435 = vsub.s32 0, %v434
      %v436 = vrot.slane %v431, %v435
      %v438 = vadd.f32 %v417, %v436
      %v439 = vadd.f32 %v420, %v436
      %v440 = vadd.f32 %v425, %v436
      %v441 = vadd.f32 %v428, %v436
      %v442 = vpack.c.bf16 %v439, %v438
      %v443 = vpack.c.bf16 %v441, %v440
      %v446 = vunpack.c.l.b16 %v442
      %v447 = vunpack.c.h.b16 %v442
      %v448 = vunpack.c.l.b16 %v443
      %v449 = vunpack.c.h.b16 %v443
      %v450 = vpack.c.b16 %v446, %v446
      %v451 = vpack.c.b16 %v447, %v447
      %v452 = vpack.c.b16 %v448, %v448
      %v453 = vpack.c.b16 %v449, %v449
      %458 = vst [vmem:[%s170] sm:$0xf] %v450
      %459 = vst [vmem:[%s170 + $0x4] sm:$0xf] %v451
      %460 = vst [vmem:[%s170 + $0x8] sm:$0xf] %v452
      %461 = vst [vmem:[%s170 + $0xc] sm:$0xf] %v453
      %p462 = scmp.lt.s32.totalorder %s14, 1
      %s463 = scalar_select %p462, %s14, 1
      %s464 = smul.addr %s463, 4
      %s465 = smul.addr %s464, 4
      %s466 = scalar_lea.vmem %s3, %s465
      // Predicated region
      $region33: #{_lambda_.11} parent=31 // pred_check
        %p467 = pneg %p100
      $region34: #{_lambda_.11} parent=31 // pred_check_branch
        %469 = sbr.rel (%p467) target = $region36
      $region35: #{_lambda_.11} parent=31 // pred_region
        _
      $region36: #{_lambda_.11} parent=31 // pred_fallthru
        _
    $region32: #{_lambda_.11} parent=5 // pred_fallthru
      _
    %p470 = scmp.le.s32.totalorder 2, %s9
    // Predicated region
    $region37: #{_lambda_.11} parent=5 // pred_check
      %p471 = pneg %p470
    $region38: #{_lambda_.11} parent=5 // pred_check_branch
      %473 = sbr.rel (%p471) target = $region40
    $region39: #{_lambda_.11} parent=5 // pred_region
      %s474 = ssub.s32 %s9, 2
      // Predicated region
      $region41: #{_lambda_.11} parent=39 // pred_check
        %p475 = pneg %p106
      $region42: #{_lambda_.11} parent=39 // pred_check_branch
        %477 = sbr.rel (%p475) target = $region44
      $region43: #{_lambda_.11} parent=39 // pred_region
        %p478 = scmp.lt.s32.totalorder %s15, 1
        %s479 = scalar_select %p478, %s15, 1
        %s480 = smul.addr %s479, 4
        %s481 = smul.addr %s480, 4
        %s482 = scalar_lea.vmem %s3, %s481
      $region44: #{_lambda_.11} parent=39 // pred_fallthru
        _
    $region40: #{_lambda_.11} parent=5 // pred_fallthru
      _
  $region6: #{_lambda_.11} parent=0 // loop_footer
    %s13 = sadd.s32 1, %s9
  $region7: #{_lambda_.11} parent=0 // loop_footer_branch
    %8 = sbr.rel target = $region3
  $region8: #{_lambda_.11} parent=0 // loop_exit
    _

// kernel: _lambda_.14
$region0: #{_lambda_.14}
  #allocation0 [shape = 'u32[]', space=smem, size = 0x4, offset = 0x4, fixed_abs, tag = 'smem constant byte address 0x4 - core index']
  #allocation1 [shape = 'u32[144,128]{1,0:T(1,128)}', space=vmem, size = 0x12000, scoped, tag = 'internal scratch']
  %s0 = inlined_call_operand.vmem [shape: bf16[2,9,64], index: 0, kind: input, shape index: {}]
  %s1 = inlined_call_operand.vmem [shape: bf16[2,9,64], index: 1, kind: output, shape index: {}]
  %s2 = sld [smem:[#allocation0]]
  $region37: #{_lambda_.14} parent=0
    _
  %s4 = ssub.s32 1, %s2
  %s5 = scalar_select 0, %s4, %s2
  loop: start=0, step=1, limit=4
  $region2: #{_lambda_.14} parent=0 // loop_pre_header
    _
  $region3: #{_lambda_.14} parent=0 // loop_header
    %s7 = sphi 0, %s11
    %p8 = scmp.ge.s32.totalorder %s7, 4
    %s14 = sphi 0, %s26
    %s15 = sphi 0, %s22
    %s16 = sphi 0, %s14
    %s17 = sphi 0, %s15
    %s18 = sphi 0, %s16
    %s19 = sphi 0, %s17
    %s31 = sphi 0, %s33
    %s34 = sphi 0, %s31
    %s35 = sphi 0, %s34
    %s51 = sphi 0, %s35
    %s59 = sphi 0, %s61
    %s62 = sphi 0, %s59
    %s63 = sphi 0, %s62
    %s79 = sphi 0, %s63
  $region4: #{_lambda_.14} parent=0 // loop_header_branch
    %10 = sbr.rel (%p8) target = $region8
  $region5: #{_lambda_.14} parent=0 // loop_body
    %s12 = ssub.s32 %s7, 1
    %s13 = ssub.s32 %s7, 2
    %s20 = sadd.s32 1, %s15
    %p21 = scmp.ge.s32.totalorder %s20, 1
    %s22 = scalar_select %p21, 0, %s20
    %s23 = sadd.s32 1, %s14
    %s24 = scalar_select %p21, %s23, %s14
    %p25 = scmp.ge.s32.totalorder %s24, 2
    %s26 = scalar_select %p25, 0, %s24
    %s27 = ssub.s32 %s14, %s26
    %s28 = ssub.s32 %s15, %s22
    %s29 = sor.u32 %s27, %s28
    %p30 = scmp.eq.s32.totalorder %s29, 0
    %s32 = sadd.s32 %s31, 1
    %s33 = scalar_select %p30, %s31, %s32
    %p36 = pneg %p30
    %p37 = scmp.eq.s32.totalorder %s7, 1
    %p38 = por %p36, %p37
    %p39 = scmp.ne.s32.totalorder %s31, %s34
    %p40 = scmp.eq.s32.totalorder %s7, 0
    %p41 = por %p39, %p40
    %p42 = scmp.ne.s32.totalorder %s31, %s34
    %p43 = scmp.eq.s32.totalorder %s12, 1
    %p44 = por %p42, %p43
    %p45 = scmp.ne.s32.totalorder %s34, %s35
    %p46 = scmp.eq.s32.totalorder %s12, 0
    %p47 = por %p45, %p46
    %p48 = scmp.ne.s32.totalorder %s34, %s35
    %p49 = scmp.eq.s32.totalorder %s13, 1
    %p50 = por %p48, %p49
    %p52 = scmp.ne.s32.totalorder %s35, %s51
    %p53 = scmp.eq.s32.totalorder %s13, 0
    %p54 = por %p52, %p53
    %s55 = ssub.s32 %s14, %s26
    %s56 = ssub.s32 %s15, %s22
    %s57 = sor.u32 %s55, %s56
    %p58 = scmp.eq.s32.totalorder %s57, 0
    %s60 = sadd.s32 %s59, 1
    %s61 = scalar_select %p58, %s59, %s60
    %p64 = pneg %p58
    %p65 = scmp.eq.s32.totalorder %s7, 1
    %p66 = por %p64, %p65
    %p67 = scmp.ne.s32.totalorder %s59, %s62
    %p68 = scmp.eq.s32.totalorder %s7, 0
    %p69 = por %p67, %p68
    %p70 = scmp.ne.s32.totalorder %s59, %s62
    %p71 = scmp.eq.s32.totalorder %s12, 1
    %p72 = por %p70, %p71
    %p73 = scmp.ne.s32.totalorder %s62, %s63
    %p74 = scmp.eq.s32.totalorder %s12, 0
    %p75 = por %p73, %p74
    %p76 = scmp.ne.s32.totalorder %s62, %s63
    %p77 = scmp.eq.s32.totalorder %s13, 1
    %p78 = por %p76, %p77
    %p80 = scmp.ne.s32.totalorder %s63, %s79
    %p81 = scmp.eq.s32.totalorder %s13, 0
    %p82 = por %p80, %p81
    %p83 = scmp.le.s32.totalorder 1, %s7
    %p84 = scmp.lt.s32.totalorder %s7, 3
    %p85 = pnand %p83, %p84
    %p86 = pneg %p85
    // Predicated region
    $region9: #{_lambda_.14} parent=5 // pred_check
      _
    $region10: #{_lambda_.14} parent=5 // pred_check_branch
      %88 = sbr.rel (%p85) target = $region12
    $region11: #{_lambda_.14} parent=5 // pred_region
      %s89 = ssub.s32 %s7, 1
    $region12: #{_lambda_.14} parent=5 // pred_fallthru
      _
    %p90 = scmp.lt.s32.totalorder %s7, 2
    // Predicated region
    $region13: #{_lambda_.14} parent=5 // pred_check
      %p91 = pneg %p90
    $region14: #{_lambda_.14} parent=5 // pred_check_branch
      %93 = sbr.rel (%p91) target = $region16
    $region15: #{_lambda_.14} parent=5 // pred_region
      // Predicated region
      $region17: #{_lambda_.14} parent=15 // pred_check
        %p94 = pneg %p41
      $region18: #{_lambda_.14} parent=15 // pred_check_branch
        %96 = sbr.rel (%p94) target = $region20
      $region19: #{_lambda_.14} parent=15 // pred_region
        %p97 = scmp.lt.s32.totalorder %s14, 1
        %s98 = scalar_select %p97, %s14, 1
        %p99 = scmp.lt.s32.totalorder %s15, 0
        %s100 = scalar_select %p99, %s15, 0
        %s101 = smul.addr %s98, 2
        %s102 = sadd.s32 %s100, %s101
        %s103 = smul.addr %s102, 4
        %s104 = scalar_lea.vmem %s0, %s103
      $region20: #{_lambda_.14} parent=15 // pred_fallthru
        _
    $region16: #{_lambda_.14} parent=5 // pred_fallthru
      _
    %p105 = scmp.le.s32.totalorder 1, %s7
    %p106 = scmp.lt.s32.totalorder %s7, 3
    %p107 = pnand %p105, %p106
    %p108 = pneg %p107
    // Predicated region
    $region21: #{_lambda_.14} parent=5 // pred_check
      _
    $region22: #{_lambda_.14} parent=5 // pred_check_branch
      %110 = sbr.rel (%p107) target = $region24
    $region23: #{_lambda_.14} parent=5 // pred_region
      %s111 = ssub.s32 %s7, 1
      %p112 = scmp.lt.s32.totalorder %s16, 1
      %s113 = scalar_select %p112, %s16, 1
      %p114 = scmp.lt.s32.totalorder %s17, 0
      %s115 = scalar_select %p114, %s17, 0
      %s116 = smul.addr %s113, 2
      %s117 = sadd.s32 %s115, %s116
      %s118 = smul.addr %s117, 4
      %s119 = scalar_lea.vmem %s0, %s118
      %p120 = pneg %p47
      %p121 = pneg %p44
      %p122 = pneg %p75
      %p123 = pneg %p72
      %p124 = scmp.lt.s32.totalorder %s16, 1
      %s125 = scalar_select %p124, %s16, 1
      %p126 = scmp.lt.s32.totalorder %s17, 0
      %s127 = scalar_select %p126, %s17, 0
      %s128 = smul.addr %s125, 2
      %s129 = sadd.s32 %s127, %s128
      %s130 = smul.addr %s129, 4
      %s131 = scalar_lea.vmem %s1, %s130
      %p132 = scmp.lt.s32.totalorder %s16, 1
      %s133 = scalar_select %p132, %s16, 1
      %p134 = scmp.lt.s32.totalorder %s17, 0
      %s135 = scalar_select %p134, %s17, 0
      %s136 = smul.addr %s133, 2
      %s137 = sadd.s32 %s135, %s136
      %s138 = smul.addr %s137, 4
      %s139 = scalar_lea.vmem %s0, %s138
      %p140 = scmp.lt.s32.totalorder %s16, 1
      %s141 = scalar_select %p140, %s16, 1
      %p142 = scmp.lt.s32.totalorder %s17, 0
      %s143 = scalar_select %p142, %s17, 0
      %s144 = smul.addr %s141, 2
      %s145 = sadd.s32 %s143, %s144
      %s146 = smul.addr %s145, 4
      %s147 = scalar_lea.vmem %s1, %s146
      %v148 = vld [vmem:[%s139] sm:$0xf]
      %v149 = vld [vmem:[%s139 + $0x4] sm:$0x1]
      %v150 = vunpack.c.l.bf16 %v148
      %v151 = vunpack.c.l.bf16 %v149
      %vm152 = vcmask 523264
      %v153 = vsel %vm152, %v150, 0.0
      %vm154 = vcmask 516096
      %v155 = vsel %vm154, %v151, 0.0
      %v156 = vadd.f32 %v153, %v155
      %v157 = vrot.slane %v156, 4
      %v158 = vadd.f32 %v156, %v157
      %v159 = vrot.slane %v158, 2
      %v160 = vadd.f32 %v158, %v159
      %v161 = vrot.slane %v160, 1
      %v162 = vadd.f32 %v160, %v161
      %v163 = vrcp.pop 9.0
      %v164 = vmul.f32 %v162, %v163
      %v165 = vmul.f32 %v150, %v150
      %v166 = vmul.f32 %v151, %v151
      %v167 = vsel %vm152, %v165, 0.0
      %v168 = vsel %vm154, %v166, 0.0
      %v169 = vadd.f32 %v167, %v168
      %v170 = vrot.slane %v169, 4
      %v171 = vadd.f32 %v169, %v170
      %v172 = vrot.slane %v171, 2
      %v173 = vadd.f32 %v171, %v172
      %v174 = vrot.slane %v173, 1
      %v175 = vadd.f32 %v173, %v174
      %v176 = vmul.f32 %v175, %v163
      %v177 = vmul.f32 %v164, %v164
      %v178 = vsub.f32 %v176, %v177
      %v179 = vmax.f32 %v178, 0.0
      %v180 = vsub.f32 %v150, %v164
      %v181 = vsub.f32 %v151, %v164
      %v182 = vadd.f32 %v179, 1e-05
      %v183 = vrsqrt.pop %v182
      %v184 = vmul.f32 %v180, %v183
      %v185 = vmul.f32 %v181, %v183
      %vm186 = vcmp.gt.f32.partialorder %v184, 0.0
      %vm187 = vcmp.gt.f32.partialorder %v185, 0.0
      %v188 = vmul.f32 %v184, 0.2
      %v189 = vmul.f32 %v185, 0.2
      %v190 = vsel %vm186, %v184, %v188
      %v191 = vsel %vm187, %v185, %v189
      %v192 = vpack.c.bf16 %v191, %v190
      %v194 = vunpack.c.l.b16 %v192
      %v195 = vunpack.c.h.b16 %v192
      %v196 = vpack.c.b16 %v194, %v194
      %v197 = vpack.c.b16 %v195, %v195
      %vm200 = vcmask 519168
      %201 = vst.msk [vmem:[%s147] sm:$0xf] %vm200, %v196
      %vm202 = vcmask 516096
      %vm203 = vsmask.f32 256
      %vm204 = vmand %vm202, %vm203
      %v205 = vld [vmem:[%s147 + $0x4] sm:$0x1]
      %v206 = vsel %vm204, %v197, %v205
      %207 = vst [vmem:[%s147 + $0x4] sm:$0x1] %v206
      %p208 = scmp.lt.s32.totalorder %s16, 1
      %s209 = scalar_select %p208, %s16, 1
      %p210 = scmp.lt.s32.totalorder %s17, 0
      %s211 = scalar_select %p210, %s17, 0
      %s212 = smul.addr %s209, 2
      %s213 = sadd.s32 %s211, %s212
      %s214 = smul.addr %s213, 4
      %s215 = scalar_lea.vmem %s1, %s214
      // Predicated region
      $region25: #{_lambda_.14} parent=23 // pred_check
        %p216 = pneg %p72
      $region26: #{_lambda_.14} parent=23 // pred_check_branch
        %218 = sbr.rel (%p216) target = $region28
      $region27: #{_lambda_.14} parent=23 // pred_region
        _
      $region28: #{_lambda_.14} parent=23 // pred_fallthru
        _
    $region24: #{_lambda_.14} parent=5 // pred_fallthru
      _
    %p219 = scmp.le.s32.totalorder 2, %s7
    // Predicated region
    $region29: #{_lambda_.14} parent=5 // pred_check
      %p220 = pneg %p219
    $region30: #{_lambda_.14} parent=5 // pred_check_branch
      %222 = sbr.rel (%p220) target = $region32
    $region31: #{_lambda_.14} parent=5 // pred_region
      %s223 = ssub.s32 %s7, 2
      // Predicated region
      $region33: #{_lambda_.14} parent=31 // pred_check
        %p224 = pneg %p78
      $region34: #{_lambda_.14} parent=31 // pred_check_branch
        %226 = sbr.rel (%p224) target = $region36
      $region35: #{_lambda_.14} parent=31 // pred_region
        %p227 = scmp.lt.s32.totalorder %s18, 1
        %s228 = scalar_select %p227, %s18, 1
        %p229 = scmp.lt.s32.totalorder %s19, 0
        %s230 = scalar_select %p229, %s19, 0
        %s231 = smul.addr %s228, 2
        %s232 = sadd.s32 %s230, %s231
        %s233 = smul.addr %s232, 4
        %s234 = scalar_lea.vmem %s1, %s233
      $region36: #{_lambda_.14} parent=31 // pred_fallthru
        _
    $region32: #{_lambda_.14} parent=5 // pred_fallthru
      _
  $region6: #{_lambda_.14} parent=0 // loop_footer
    %s11 = sadd.s32 1, %s7
  $region7: #{_lambda_.14} parent=0 // loop_footer_branch
    %6 = sbr.rel target = $region3
  $region8: #{_lambda_.14} parent=0 // loop_exit
    _

// kernel: _lambda_.13
$region0: #{_lambda_.13}
  #allocation0 [shape = 'u32[]', space=smem, size = 0x4, offset = 0x4, fixed_abs, tag = 'smem constant byte address 0x4 - core index']
  #allocation1 [shape = 'u32[144,128]{1,0:T(1,128)}', space=vmem, size = 0x12000, scoped, tag = 'internal scratch']
  %s0 = inlined_call_operand.vmem [shape: bf16[2,48,128], index: 0, kind: input, shape index: {}]
  %s1 = inlined_call_operand.vmem [shape: bf16[4,128,128], index: 1, kind: input, shape index: {}]
  %s2 = inlined_call_operand.vmem [shape: f32[1,128], index: 2, kind: input, shape index: {}]
  %s3 = inlined_call_operand.vmem [shape: bf16[2,24,128], index: 3, kind: output, shape index: {}]
  %s4 = sld [smem:[#allocation0]]
  $region45: #{_lambda_.13} parent=0
    _
  %s6 = ssub.s32 1, %s4
  %s7 = scalar_select 0, %s6, %s4
  loop: start=0, step=1, limit=4
  $region2: #{_lambda_.13} parent=0 // loop_pre_header
    _
  $region3: #{_lambda_.13} parent=0 // loop_header
    %s9 = sphi 0, %s13
    %p10 = scmp.ge.s32.totalorder %s9, 4
    %s19 = sphi 0, %s21
    %s22 = sphi 0, %s19
    %s23 = sphi 0, %s22
    %s39 = sphi 0, %s23
    %s43 = sphi 0, %s43
    %s45 = sphi 0, %s43
    %s46 = sphi 0, %s45
    %s60 = sphi 0, %s46
    %s64 = sphi 0, %s64
    %s66 = sphi 0, %s64
    %s67 = sphi 0, %s66
    %s81 = sphi 0, %s67
    %s87 = sphi 0, %s89
    %s90 = sphi 0, %s87
    %s91 = sphi 0, %s90
    %s107 = sphi 0, %s91
  $region4: #{_lambda_.13} parent=0 // loop_header_branch
    %12 = sbr.rel (%p10) target = $region8
  $region5: #{_lambda_.13} parent=0 // loop_body
    %s14 = ssub.s32 %s9, 1
    %s15 = ssub.s32 %s9, 2
    %s16 = sadd.s32 %s9, 1
    %s17 = ssub.s32 %s9, %s16
    %p18 = scmp.eq.s32.totalorder %s17, 0
    %s20 = sadd.s32 %s19, 1
    %s21 = scalar_select %p18, %s19, %s20
    %p24 = pneg %p18
    %p25 = scmp.eq.s32.totalorder %s9, 1
    %p26 = por %p24, %p25
    %p27 = scmp.ne.s32.totalorder %s19, %s22
    %p28 = scmp.eq.s32.totalorder %s9, 0
    %p29 = por %p27, %p28
    %p30 = scmp.ne.s32.totalorder %s19, %s22
    %p31 = scmp.eq.s32.totalorder %s14, 1
    %p32 = por %p30, %p31
    %p33 = scmp.ne.s32.totalorder %s22, %s23
    %p34 = scmp.eq.s32.totalorder %s14, 0
    %p35 = por %p33, %p34
    %p36 = scmp.ne.s32.totalorder %s22, %s23
    %p37 = scmp.eq.s32.totalorder %s15, 1
    %p38 = por %p36, %p37
    %p40 = scmp.ne.s32.totalorder %s23, %s39
    %p41 = scmp.eq.s32.totalorder %s15, 0
    %p42 = por %p40, %p41
    %s44 = sadd.s32 %s43, 1
    %p47 = scmp.eq.s32.totalorder %s9, 1
    %p48 = scmp.ne.s32.totalorder %s43, %s45
    %p49 = scmp.eq.s32.totalorder %s9, 0
    %p50 = por %p48, %p49
    %p51 = scmp.ne.s32.totalorder %s43, %s45
    %p52 = scmp.eq.s32.totalorder %s14, 1
    %p53 = por %p51, %p52
    %p54 = scmp.ne.s32.totalorder %s45, %s46
    %p55 = scmp.eq.s32.totalorder %s14, 0
    %p56 = por %p54, %p55
    %p57 = scmp.ne.s32.totalorder %s45, %s46
    %p58 = scmp.eq.s32.totalorder %s15, 1
    %p59 = por %p57, %p58
    %p61 = scmp.ne.s32.totalorder %s46, %s60
    %p62 = scmp.eq.s32.totalorder %s15, 0
    %p63 = por %p61, %p62
    %s65 = sadd.s32 %s64, 1
    %p68 = scmp.eq.s32.totalorder %s9, 1
    %p69 = scmp.ne.s32.totalorder %s64, %s66
    %p70 = scmp.eq.s32.totalorder %s9, 0
    %p71 = por %p69, %p70
    %p72 = scmp.ne.s32.totalorder %s64, %s66
    %p73 = scmp.eq.s32.totalorder %s14, 1
    %p74 = por %p72, %p73
    %p75 = scmp.ne.s32.totalorder %s66, %s67
    %p76 = scmp.eq.s32.totalorder %s14, 0
    %p77 = por %p75, %p76
    %p78 = scmp.ne.s32.totalorder %s66, %s67
    %p79 = scmp.eq.s32.totalorder %s15, 1
    %p80 = por %p78, %p79
    %p82 = scmp.ne.s32.totalorder %s67, %s81
    %p83 = scmp.eq.s32.totalorder %s15, 0
    %p84 = por %p82, %p83
    %s85 = ssub.s32 %s9, %s16
    %p86 = scmp.eq.s32.totalorder %s85, 0
    %s88 = sadd.s32 %s87, 1
    %s89 = scalar_select %p86, %s87, %s88
    %p92 = pneg %p86
    %p93 = scmp.eq.s32.totalorder %s9, 1
    %p94 = por %p92, %p93
    %p95 = scmp.ne.s32.totalorder %s87, %s90
    %p96 = scmp.eq.s32.totalorder %s9, 0
    %p97 = por %p95, %p96
    %p98 = scmp.ne.s32.totalorder %s87, %s90
    %p99 = scmp.eq.s32.totalorder %s14, 1
    %p100 = por %p98, %p99
    %p101 = scmp.ne.s32.totalorder %s90, %s91
    %p102 = scmp.eq.s32.totalorder %s14, 0
    %p103 = por %p101, %p102
    %p104 = scmp.ne.s32.totalorder %s90, %s91
    %p105 = scmp.eq.s32.totalorder %s15, 1
    %p106 = por %p104, %p105
    %p108 = scmp.ne.s32.totalorder %s91, %s107
    %p109 = scmp.eq.s32.totalorder %s15, 0
    %p110 = por %p108, %p109
    %p111 = scmp.le.s32.totalorder 1, %s9
    %p112 = scmp.lt.s32.totalorder %s9, 3
    %p113 = pnand %p111, %p112
    %p114 = pneg %p113
    // Predicated region
    $region9: #{_lambda_.13} parent=5 // pred_check
      _
    $region10: #{_lambda_.13} parent=5 // pred_check_branch
      %116 = sbr.rel (%p113) target = $region12
    $region11: #{_lambda_.13} parent=5 // pred_region
      %s117 = ssub.s32 %s9, 1
      // Predicated region
      $region13: #{_lambda_.13} parent=11 // pred_check
        %p118 = pneg %p56
      $region14: #{_lambda_.13} parent=11 // pred_check_branch
        %120 = sbr.rel (%p118) target = $region16
      $region15: #{_lambda_.13} parent=11 // pred_region
        _
      $region16: #{_lambda_.13} parent=11 // pred_fallthru
        _
      // Predicated region
      $region17: #{_lambda_.13} parent=11 // pred_check
        %p121 = pneg %p77
      $region18: #{_lambda_.13} parent=11 // pred_check_branch
        %123 = sbr.rel (%p121) target = $region20
      $region19: #{_lambda_.13} parent=11 // pred_region
        _
      $region20: #{_lambda_.13} parent=11 // pred_fallthru
        _
    $region12: #{_lambda_.13} parent=5 // pred_fallthru
      _
    %p124 = scmp.lt.s32.totalorder %s9, 2
    // Predicated region
    $region21: #{_lambda_.13} parent=5 // pred_check
      %p125 = pneg %p124
    $region22: #{_lambda_.13} parent=5 // pred_check_branch
      %127 = sbr.rel (%p125) target = $region24
    $region23: #{_lambda_.13} parent=5 // pred_region
      // Predicated region
      $region25: #{_lambda_.13} parent=23 // pred_check
        %p128 = pneg %p29
      $region26: #{_lambda_.13} parent=23 // pred_check_branch
        %130 = sbr.rel (%p128) target = $region28
      $region27: #{_lambda_.13} parent=23 // pred_region
        %p131 = scmp.lt.s32.totalorder %s9, 1
        %s132 = scalar_select %p131, %s9, 1
        %s133 = smul.addr %s132, 6
        %s134 = smul.addr %s133, 4
        %s135 = scalar_lea.vmem %s0, %s134
      $region28: #{_lambda_.13} parent=23 // pred_fallthru
        _
    $region24: #{_lambda_.13} parent=5 // pred_fallthru
      _
    %p136 = scmp.le.s32.totalorder 1, %s9
    %p137 = scmp.lt.s32.totalorder %s9, 3
    %p138 = pnand %p136, %p137
    %p139 = pneg %p138
    // Predicated region
    $region29: #{_lambda_.13} parent=5 // pred_check
      _
    $region30: #{_lambda_.13} parent=5 // pred_check_branch
      %141 = sbr.rel (%p138) target = $region32
    $region31: #{_lambda_.13} parent=5 // pred_region
      %s142 = ssub.s32 %s9, 1
      %p143 = scmp.lt.s32.totalorder %s14, 1
      %s144 = scalar_select %p143, %s14, 1
      %s145 = smul.addr %s144, 6
      %s146 = smul.addr %s145, 4
      %s147 = scalar_lea.vmem %s0, %s146
      %p148 = pneg %p35
      %p149 = pneg %p32
      %p150 = pneg %p56
      %p151 = pneg %p53
      %p152 = pneg %p77
      %p153 = pneg %p74
      %p154 = pneg %p103
      %p155 = pneg %p100
      %p156 = scmp.lt.s32.totalorder %s14, 1
      %s157 = scalar_select %p156, %s14, 1
      %s158 = smul.addr %s157, 3
      %s159 = smul.addr %s158, 4
      %s160 = scalar_lea.vmem %s3, %s159
      %p161 = scmp.lt.s32.totalorder %s14, 1
      %s162 = scalar_select %p161, %s14, 1
      %s163 = smul.addr %s162, 6
      %s164 = smul.addr %s163, 4
      %s165 = scalar_lea.vmem %s0, %s164
      %p166 = scmp.lt.s32.totalorder %s14, 1
      %s167 = scalar_select %p166, %s14, 1
      %s168 = smul.addr %s167, 3
      %s169 = smul.addr %s168, 4
      %s170 = scalar_lea.vmem %s3, %s169
      %v172 = vld [vmem:[%s165] sm:$0xf]
      %v173 = vld [vmem:[%s165 + $0x4] sm:$0xf]
      %v174 = vld [vmem:[%s165 + $0x8] sm:$0xf]
      %v175 = vld [vmem:[%s1] sm:$0xf]
      %v176 = vld [vmem:[%s1 + $0x4] sm:$0xf]
      %v177 = vld [vmem:[%s1 + $0x8] sm:$0xf]
      %v178 = vld [vmem:[%s1 + $0xc] sm:$0xf]
      %v179 = vld [vmem:[%s1 + $0x10] sm:$0xf]
      %v180 = vld [vmem:[%s1 + $0x14] sm:$0xf]
      %v181 = vld [vmem:[%s1 + $0x18] sm:$0xf]
      %v182 = vld [vmem:[%s1 + $0x1c] sm:$0xf]
      %v183 = vld [vmem:[%s1 + $0x20] sm:$0xf]
      %v184 = vld [vmem:[%s1 + $0x24] sm:$0xf]
      %v185 = vld [vmem:[%s1 + $0x28] sm:$0xf]
      %v186 = vld [vmem:[%s1 + $0x2c] sm:$0xf]
      %v187 = vld [vmem:[%s1 + $0x30] sm:$0xf]
      %v188 = vld [vmem:[%s1 + $0x34] sm:$0xf]
      %v189 = vld [vmem:[%s1 + $0x38] sm:$0xf]
      %v190 = vld [vmem:[%s1 + $0x3c] sm:$0xf]
      %v191 = vld [vmem:[%s165 + $0xc] sm:$0xf]
      %s192 = scalar_lea.vmem %s1, 64
      %v193 = vld [vmem:[%s192] sm:$0xf]
      %v194 = vld [vmem:[%s192 + $0x4] sm:$0xf]
      %v195 = vld [vmem:[%s192 + $0x8] sm:$0xf]
      %v196 = vld [vmem:[%s192 + $0xc] sm:$0xf]
      %v197 = vld [vmem:[%s192 + $0x10] sm:$0xf]
      %v198 = vld [vmem:[%s192 + $0x14] sm:$0xf]
      %v199 = vld [vmem:[%s192 + $0x18] sm:$0xf]
      %v200 = vld [vmem:[%s192 + $0x1c] sm:$0xf]
      %v201 = vld [vmem:[%s192 + $0x20] sm:$0xf]
      %v202 = vld [vmem:[%s192 + $0x24] sm:$0xf]
      %v203 = vld [vmem:[%s192 + $0x28] sm:$0xf]
      %v204 = vld [vmem:[%s192 + $0x2c] sm:$0xf]
      %v205 = vld [vmem:[%s192 + $0x30] sm:$0xf]
      %v206 = vld [vmem:[%s192 + $0x34] sm:$0xf]
      %v207 = vld [vmem:[%s192 + $0x38] sm:$0xf]
      %v208 = vld [vmem:[%s192 + $0x3c] sm:$0xf]
      %v212 = vunpack.c.l.b16 %v173
      %v213 = vunpack.c.l.b16 %v174
      %v214 = vunpack.c.l.b16 %v191
      %v215 = vpack.c.b16 %v213, %v212
      %v216 = vpack.c.b16 %v214, %v214
      %v235 = vunpack.c.l.b16 %v193
      %v236 = vunpack.c.l.b16 %v194
      %v237 = vunpack.c.l.b16 %v195
      %v238 = vunpack.c.l.b16 %v196
      %v239 = vunpack.c.l.b16 %v197
      %v240 = vunpack.c.l.b16 %v198
      %v241 = vunpack.c.l.b16 %v199
      %v242 = vunpack.c.l.b16 %v200
      %v243 = vunpack.c.l.b16 %v201
      %v244 = vunpack.c.l.b16 %v202
      %v245 = vunpack.c.l.b16 %v203
      %v246 = vunpack.c.l.b16 %v204
      %v247 = vunpack.c.l.b16 %v205
      %v248 = vunpack.c.l.b16 %v206
      %v249 = vunpack.c.l.b16 %v207
      %v250 = vunpack.c.l.b16 %v208
      %v251 = vpack.c.b16 %v236, %v235
      %v252 = vpack.c.b16 %v238, %v237
      %v253 = vpack.c.b16 %v240, %v239
      %v254 = vpack.c.b16 %v242, %v241
      %v255 = vpack.c.b16 %v244, %v243
      %v256 = vpack.c.b16 %v246, %v245
      %v257 = vpack.c.b16 %v248, %v247
      %v258 = vpack.c.b16 %v250, %v249
      %267 = vmatprep.subr.bf16.mxu0 0
      %268 = vmatpush1.bf16.msra.mxu0 %v258
      %269 = vmatprep.subr.bf16.mxu0 0
      %270 = vmatpush1.bf16.msra.mxu0 %v257
      %271 = vmatprep.subr.bf16.mxu0 0
      %272 = vmatpush1.bf16.msra.mxu0 %v256
      %273 = vmatprep.subr.bf16.mxu0 0
      %274 = vmatpush1.bf16.msra.mxu0 %v255
      %275 = vmatprep.subr.bf16.mxu0 0
      %276 = vmatpush1.bf16.msra.mxu0 %v254
      %277 = vmatprep.subr.bf16.mxu0 0
      %278 = vmatpush1.bf16.msra.mxu0 %v253
      %279 = vmatprep.subr.bf16.mxu0 0
      %280 = vmatpush1.bf16.msra.mxu0 %v252
      %281 = vmatprep.subr.bf16.mxu0 0
      %282 = vmatpush1.bf16.msra.mxu0 %v251
      %283 = vmatprep.subr.bf16.mxu0 0
      %284 = vmatpush2.bf16.msra.mxu0 0
      %285 = vmatprep.subr.bf16.mxu0 0
      %286 = vmatpush2.bf16.msra.mxu0 0
      %287 = vmatprep.subr.bf16.mxu0 0
      %288 = vmatpush2.bf16.msra.mxu0 0
      %289 = vmatprep.subr.bf16.mxu0 0
      %290 = vmatpush2.bf16.msra.mxu0 0
      %291 = vmatprep.subr.bf16.mxu0 0
      %292 = vmatpush2.bf16.msra.mxu0 0
      %293 = vmatprep.subr.bf16.mxu0 0
      %294 = vmatpush2.bf16.msra.mxu0 0
      %295 = vmatprep.subr.bf16.mxu0 0
      %296 = vmatpush2.bf16.msra.mxu0 0
      %297 = vmatprep.subr.bf16.mxu0 0
      %298 = vmatpush2.bf16.msra.mxu0 0
      %299 = vmatprep.mubr.bf16.mxu0 0
      %300 = vmatmul.mubr.bf16.gmra.mxu0 %v215
      %v301 = vpop.f32.mrf.mxu0
      %v302 = vadd.f32 0.0, %v301
      %v303 = vpop.f32.mrf.mxu0
      %v304 = vpop.f32.mrf.mxu0
      %v305 = vadd.f32 0.0, %v304
      %v306 = vpop.f32.mrf.mxu0
      %307 = vmatprep.mubr.bf16.mxu0 0
      %308 = vmatmul.mubr.bf16.gmra.mxu0 %v216
      %v309 = vpop.f32.mrf.mxu0
      %v310 = vadd.f32 0.0, %v309
      %v311 = vpop.f32.mrf.mxu0
      %v312 = vpop.f32.mrf.mxu0
      %v313 = vpop.f32.mrf.mxu0
      %314 = vdwg.mxu0
      %v316 = vunpack.c.l.b16 %v172
      %v317 = vpack.c.b16 %v212, %v316
      %v318 = vpack.c.b16 %v213, %v213
      %v337 = vunpack.c.l.b16 %v175
      %v338 = vunpack.c.l.b16 %v176
      %v339 = vunpack.c.l.b16 %v177
      %v340 = vunpack.c.l.b16 %v178
      %v341 = vunpack.c.l.b16 %v179
      %v342 = vunpack.c.l.b16 %v180
      %v343 = vunpack.c.l.b16 %v181
      %v344 = vunpack.c.l.b16 %v182
      %v345 = vunpack.c.l.b16 %v183
      %v346 = vunpack.c.l.b16 %v184
      %v347 = vunpack.c.l.b16 %v185
      %v348 = vunpack.c.l.b16 %v186
      %v349 = vunpack.c.l.b16 %v187
      %v350 = vunpack.c.l.b16 %v188
      %v351 = vunpack.c.l.b16 %v189
      %v352 = vunpack.c.l.b16 %v190
      %v353 = vpack.c.b16 %v338, %v337
      %v354 = vpack.c.b16 %v340, %v339
      %v355 = vpack.c.b16 %v342, %v341
      %v356 = vpack.c.b16 %v344, %v343
      %v357 = vpack.c.b16 %v346, %v345
      %v358 = vpack.c.b16 %v348, %v347
      %v359 = vpack.c.b16 %v350, %v349
      %v360 = vpack.c.b16 %v352, %v351
      %369 = vmatprep.subr.bf16.mxu0 0
      %370 = vmatpush1.bf16.msra.mxu0 %v360
      %371 = vmatprep.subr.bf16.mxu0 0
      %372 = vmatpush1.bf16.msra.mxu0 %v359
      %373 = vmatprep.subr.bf16.mxu0 0
      %374 = vmatpush1.bf16.msra.mxu0 %v358
      %375 = vmatprep.subr.bf16.mxu0 0
      %376 = vmatpush1.bf16.msra.mxu0 %v357
      %377 = vmatprep.subr.bf16.mxu0 0
      %378 = vmatpush1.bf16.msra.mxu0 %v356
      %379 = vmatprep.subr.bf16.mxu0 0
      %380 = vmatpush1.bf16.msra.mxu0 %v355
      %381 = vmatprep.subr.bf16.mxu0 0
      %382 = vmatpush1.bf16.msra.mxu0 %v354
      %383 = vmatprep.subr.bf16.mxu0 0
      %384 = vmatpush1.bf16.msra.mxu0 %v353
      %385 = vmatprep.subr.bf16.mxu0 0
      %386 = vmatpush2.bf16.msra.mxu0 0
      %387 = vmatprep.subr.bf16.mxu0 0
      %388 = vmatpush2.bf16.msra.mxu0 0
      %389 = vmatprep.subr.bf16.mxu0 0
      %390 = vmatpush2.bf16.msra.mxu0 0
      %391 = vmatprep.subr.bf16.mxu0 0
      %392 = vmatpush2.bf16.msra.mxu0 0
      %393 = vmatprep.subr.bf16.mxu0 0
      %394 = vmatpush2.bf16.msra.mxu0 0
      %395 = vmatprep.subr.bf16.mxu0 0
      %396 = vmatpush2.bf16.msra.mxu0 0
      %397 = vmatprep.subr.bf16.mxu0 0
      %398 = vmatpush2.bf16.msra.mxu0 0
      %399 = vmatprep.subr.bf16.mxu0 0
      %400 = vmatpush2.bf16.msra.mxu0 0
      %401 = vmatprep.mubr.bf16.mxu0 0
      %402 = vmatmul.mubr.bf16.gmra.mxu0 %v317
      %v403 = vpop.f32.mrf.mxu0
      %v404 = vadd.f32 %v302, %v403
      %v405 = vpop.f32.mrf.mxu0
      %v406 = vpop.f32.mrf.mxu0
      %v407 = vadd.f32 %v305, %v406
      %v408 = vpop.f32.mrf.mxu0
      %409 = vmatprep.mubr.bf16.mxu0 0
      %410 = vmatmul.mubr.bf16.gmra.mxu0 %v318
      %v411 = vpop.f32.mrf.mxu0
      %v412 = vadd.f32 %v310, %v411
      %v413 = vpop.f32.mrf.mxu0
      %v414 = vpop.f32.mrf.mxu0
      %v415 = vpop.f32.mrf.mxu0
      %416 = vdwg.mxu0
      %v417 = vld [vmem:[%s165 + $0x8] sm:$0xf]
      %v418 = vld [vmem:[%s165 + $0xc] sm:$0xf]
      %v419 = vld [vmem:[%s165 + $0x10] sm:$0xf]
      %s420 = scalar_lea.vmem %s1, 128
      %v421 = vld [vmem:[%s420] sm:$0xf]
      %v422 = vld [vmem:[%s420 + $0x4] sm:$0xf]
      %v423 = vld [vmem:[%s420 + $0x8] sm:$0xf]
      %v424 = vld [vmem:[%s420 + $0xc] sm:$0xf]
      %v425 = vld [vmem:[%s420 + $0x10] sm:$0xf]
      %v426 = vld [vmem:[%s420 + $0x14] sm:$0xf]
      %v427 = vld [vmem:[%s420 + $0x18] sm:$0xf]
      %v428 = vld [vmem:[%s420 + $0x1c] sm:$0xf]
      %v429 = vld [vmem:[%s420 + $0x20] sm:$0xf]
      %v430 = vld [vmem:[%s420 + $0x24] sm:$0xf]
      %v431 = vld [vmem:[%s420 + $0x28] sm:$0xf]
      %v432 = vld [vmem:[%s420 + $0x2c] sm:$0xf]
      %v433 = vld [vmem:[%s420 + $0x30] sm:$0xf]
      %v434 = vld [vmem:[%s420 + $0x34] sm:$0xf]
      %v435 = vld [vmem:[%s420 + $0x38] sm:$0xf]
      %v436 = vld [vmem:[%s420 + $0x3c] sm:$0xf]
      %v440 = vunpack.c.l.b16 %v417
      %v441 = vunpack.c.l.b16 %v418
      %v442 = vunpack.c.l.b16 %v419
      %v443 = vpack.c.b16 %v441, %v440
      %v444 = vpack.c.b16 %v442, %v442
      %v463 = vunpack.c.l.b16 %v421
      %v464 = vunpack.c.l.b16 %v422
      %v465 = vunpack.c.l.b16 %v423
      %v466 = vunpack.c.l.b16 %v424
      %v467 = vunpack.c.l.b16 %v425
      %v468 = vunpack.c.l.b16 %v426
      %v469 = vunpack.c.l.b16 %v427
      %v470 = vunpack.c.l.b16 %v428
      %v471 = vunpack.c.l.b16 %v429
      %v472 = vunpack.c.l.b16 %v430
      %v473 = vunpack.c.l.b16 %v431
      %v474 = vunpack.c.l.b16 %v432
      %v475 = vunpack.c.l.b16 %v433
      %v476 = vunpack.c.l.b16 %v434
      %v477 = vunpack.c.l.b16 %v435
      %v478 = vunpack.c.l.b16 %v436
      %v479 = vpack.c.b16 %v464, %v463
      %v480 = vpack.c.b16 %v466, %v465
      %v481 = vpack.c.b16 %v468, %v467
      %v482 = vpack.c.b16 %v470, %v469
      %v483 = vpack.c.b16 %v472, %v471
      %v484 = vpack.c.b16 %v474, %v473
      %v485 = vpack.c.b16 %v476, %v475
      %v486 = vpack.c.b16 %v478, %v477
      %495 = vmatprep.subr.bf16.mxu0 0
      %496 = vmatpush1.bf16.msra.mxu0 %v486
      %497 = vmatprep.subr.bf16.mxu0 0
      %498 = vmatpush1.bf16.msra.mxu0 %v485
      %499 = vmatprep.subr.bf16.mxu0 0
      %500 = vmatpush1.bf16.msra.mxu0 %v484
      %501 = vmatprep.subr.bf16.mxu0 0
      %502 = vmatpush1.bf16.msra.mxu0 %v483
      %503 = vmatprep.subr.bf16.mxu0 0
      %504 = vmatpush1.bf16.msra.mxu0 %v482
      %505 = vmatprep.subr.bf16.mxu0 0
      %506 = vmatpush1.bf16.msra.mxu0 %v481
      %507 = vmatprep.subr.bf16.mxu0 0
      %508 = vmatpush1.bf16.msra.mxu0 %v480
      %509 = vmatprep.subr.bf16.mxu0 0
      %510 = vmatpush1.bf16.msra.mxu0 %v479
      %511 = vmatprep.subr.bf16.mxu0 0
      %512 = vmatpush2.bf16.msra.mxu0 0
      %513 = vmatprep.subr.bf16.mxu0 0
      %514 = vmatpush2.bf16.msra.mxu0 0
      %515 = vmatprep.subr.bf16.mxu0 0
      %516 = vmatpush2.bf16.msra.mxu0 0
      %517 = vmatprep.subr.bf16.mxu0 0
      %518 = vmatpush2.bf16.msra.mxu0 0
      %519 = vmatprep.subr.bf16.mxu0 0
      %520 = vmatpush2.bf16.msra.mxu0 0
      %521 = vmatprep.subr.bf16.mxu0 0
      %522 = vmatpush2.bf16.msra.mxu0 0
      %523 = vmatprep.subr.bf16.mxu0 0
      %524 = vmatpush2.bf16.msra.mxu0 0
      %525 = vmatprep.subr.bf16.mxu0 0
      %526 = vmatpush2.bf16.msra.mxu0 0
      %527 = vmatprep.mubr.bf16.mxu0 0
      %528 = vmatmul.mubr.bf16.gmra.mxu0 %v443
      %v529 = vpop.f32.mrf.mxu0
      %v530 = vadd.f32 0.0, %v529
      %v531 = vpop.f32.mrf.mxu0
      %v532 = vpop.f32.mrf.mxu0
      %v533 = vadd.f32 0.0, %v532
      %v534 = vpop.f32.mrf.mxu0
      %535 = vmatprep.mubr.bf16.mxu0 0
      %536 = vmatmul.mubr.bf16.gmra.mxu0 %v444
      %v537 = vpop.f32.mrf.mxu0
      %v538 = vadd.f32 0.0, %v537
      %v539 = vpop.f32.mrf.mxu0
      %v540 = vpop.f32.mrf.mxu0
      %v541 = vpop.f32.mrf.mxu0
      %542 = vdwg.mxu0
      %v543 = vadd.f32 %v404, %v530
      %v544 = vadd.f32 %v407, %v533
      %v545 = vadd.f32 %v412, %v538
      %v546 = vld [vmem:[%s165 + $0xc] sm:$0xf]
      %v547 = vld [vmem:[%s165 + $0x10] sm:$0xf]
      %v548 = vld [vmem:[%s165 + $0x14] sm:$0xf]
      %s549 = scalar_lea.vmem %s1, 192
      %v550 = vld [vmem:[%s549] sm:$0xf]
      %v551 = vld [vmem:[%s549 + $0x4] sm:$0xf]
      %v552 = vld [vmem:[%s549 + $0x8] sm:$0xf]
      %v553 = vld [vmem:[%s549 + $0xc] sm:$0xf]
      %v554 = vld [vmem:[%s549 + $0x10] sm:$0xf]
      %v555 = vld [vmem:[%s549 + $0x14] sm:$0xf]
      %v556 = vld [vmem:[%s549 + $0x18] sm:$0xf]
      %v557 = vld [vmem:[%s549 + $0x1c] sm:$0xf]
      %v558 = vld [vmem:[%s549 + $0x20] sm:$0xf]
      %v559 = vld [vmem:[%s549 + $0x24] sm:$0xf]
      %v560 = vld [vmem:[%s549 + $0x28] sm:$0xf]
      %v561 = vld [vmem:[%s549 + $0x2c] sm:$0xf]
      %v562 = vld [vmem:[%s549 + $0x30] sm:$0xf]
      %v563 = vld [vmem:[%s549 + $0x34] sm:$0xf]
      %v564 = vld [vmem:[%s549 + $0x38] sm:$0xf]
      %v565 = vld [vmem:[%s549 + $0x3c] sm:$0xf]
      %v569 = vunpack.c.l.b16 %v546
      %v570 = vunpack.c.l.b16 %v547
      %v571 = vunpack.c.l.b16 %v548
      %v572 = vpack.c.b16 %v570, %v569
      %v573 = vpack.c.b16 %v571, %v571
      %v592 = vunpack.c.l.b16 %v550
      %v593 = vunpack.c.l.b16 %v551
      %v594 = vunpack.c.l.b16 %v552
      %v595 = vunpack.c.l.b16 %v553
      %v596 = vunpack.c.l.b16 %v554
      %v597 = vunpack.c.l.b16 %v555
      %v598 = vunpack.c.l.b16 %v556
      %v599 = vunpack.c.l.b16 %v557
      %v600 = vunpack.c.l.b16 %v558
      %v601 = vunpack.c.l.b16 %v559
      %v602 = vunpack.c.l.b16 %v560
      %v603 = vunpack.c.l.b16 %v561
      %v604 = vunpack.c.l.b16 %v562
      %v605 = vunpack.c.l.b16 %v563
      %v606 = vunpack.c.l.b16 %v564
      %v607 = vunpack.c.l.b16 %v565
      %v608 = vpack.c.b16 %v593, %v592
      %v609 = vpack.c.b16 %v595, %v594
      %v610 = vpack.c.b16 %v597, %v596
      %v611 = vpack.c.b16 %v599, %v598
      %v612 = vpack.c.b16 %v601, %v600
      %v613 = vpack.c.b16 %v603, %v602
      %v614 = vpack.c.b16 %v605, %v604
      %v615 = vpack.c.b16 %v607, %v606
      %624 = vmatprep.subr.bf16.mxu0 0
      %625 = vmatpush1.bf16.msra.mxu0 %v615
      %626 = vmatprep.subr.bf16.mxu0 0
      %627 = vmatpush1.bf16.msra.mxu0 %v614
      %628 = vmatprep.subr.bf16.mxu0 0
      %629 = vmatpush1.bf16.msra.mxu0 %v613
      %630 = vmatprep.subr.bf16.mxu0 0
      %631 = vmatpush1.bf16.msra.mxu0 %v612
      %632 = vmatprep.subr.bf16.mxu0 0
      %633 = vmatpush1.bf16.msra.mxu0 %v611
      %634 = vmatprep.subr.bf16.mxu0 0
      %635 = vmatpush1.bf16.msra.mxu0 %v610
      %636 = vmatprep.subr.bf16.mxu0 0
      %637 = vmatpush1.bf16.msra.mxu0 %v609
      %638 = vmatprep.subr.bf16.mxu0 0
      %639 = vmatpush1.bf16.msra.mxu0 %v608
      %640 = vmatprep.subr.bf16.mxu0 0
      %641 = vmatpush2.bf16.msra.mxu0 0
      %642 = vmatprep.subr.bf16.mxu0 0
      %643 = vmatpush2.bf16.msra.mxu0 0
      %644 = vmatprep.subr.bf16.mxu0 0
      %645 = vmatpush2.bf16.msra.mxu0 0
      %646 = vmatprep.subr.bf16.mxu0 0
      %647 = vmatpush2.bf16.msra.mxu0 0
      %648 = vmatprep.subr.bf16.mxu0 0
      %649 = vmatpush2.bf16.msra.mxu0 0
      %650 = vmatprep.subr.bf16.mxu0 0
      %651 = vmatpush2.bf16.msra.mxu0 0
      %652 = vmatprep.subr.bf16.mxu0 0
      %653 = vmatpush2.bf16.msra.mxu0 0
      %654 = vmatprep.subr.bf16.mxu0 0
      %655 = vmatpush2.bf16.msra.mxu0 0
      %656 = vmatprep.mubr.bf16.mxu0 0
      %657 = vmatmul.mubr.bf16.gmra.mxu0 %v572
      %v658 = vpop.f32.mrf.mxu0
      %v659 = vadd.f32 0.0, %v658
      %v660 = vpop.f32.mrf.mxu0
      %v661 = vpop.f32.mrf.mxu0
      %v662 = vadd.f32 0.0, %v661
      %v663 = vpop.f32.mrf.mxu0
      %664 = vmatprep.mubr.bf16.mxu0 0
      %665 = vmatmul.mubr.bf16.gmra.mxu0 %v573
      %v666 = vpop.f32.mrf.mxu0
      %v667 = vadd.f32 0.0, %v666
      %v668 = vpop.f32.mrf.mxu0
      %v669 = vpop.f32.mrf.mxu0
      %v670 = vpop.f32.mrf.mxu0
      %671 = vdwg.mxu0
      %v672 = vadd.f32 %v543, %v659
      %v673 = vadd.f32 %v544, %v662
      %v674 = vadd.f32 %v545, %v667
      %v675 = vld [vmem:[%s2] sm:$0x1]
      %v677 = vlaneseq
      %v678 = vshrl.u32 %v677, 7
      %v679 = vsub.s32 0, %v678
      %v680 = vrot.slane %v675, %v679
      %v682 = vadd.f32 %v672, %v680
      %v683 = vadd.f32 %v673, %v680
      %v684 = vadd.f32 %v674, %v680
      %v685 = vpack.c.bf16 %v683, %v682
      %v686 = vpack.c.bf16 %v684, %v684
      %v689 = vunpack.c.l.b16 %v685
      %v690 = vunpack.c.h.b16 %v685
      %v691 = vunpack.c.l.b16 %v686
      %v692 = vpack.c.b16 %v689, %v689
      %v693 = vpack.c.b16 %v690, %v690
      %v694 = vpack.c.b16 %v691, %v691
      %698 = vst [vmem:[%s170] sm:$0xf] %v692
      %699 = vst [vmem:[%s170 + $0x4] sm:$0xf] %v693
      %700 = vst [vmem:[%s170 + $0x8] sm:$0xf] %v694
      %p701 = scmp.lt.s32.totalorder %s14, 1
      %s702 = scalar_select %p701, %s14, 1
      %s703 = smul.addr %s702, 3
      %s704 = smul.addr %s703, 4
      %s705 = scalar_lea.vmem %s3, %s704
      // Predicated region
      $region33: #{_lambda_.13} parent=31 // pred_check
        %p706 = pneg %p100
      $region34: #{_lambda_.13} parent=31 // pred_check_branch
        %708 = sbr.rel (%p706) target = $region36
      $region35: #{_lambda_.13} parent=31 // pred_region
        _
      $region36: #{_lambda_.13} parent=31 // pred_fallthru
        _
    $region32: #{_lambda_.13} parent=5 // pred_fallthru
      _
    %p709 = scmp.le.s32.totalorder 2, %s9
    // Predicated region
    $region37: #{_lambda_.13} parent=5 // pred_check
      %p710 = pneg %p709
    $region38: #{_lambda_.13} parent=5 // pred_check_branch
      %712 = sbr.rel (%p710) target = $region40
    $region39: #{_lambda_.13} parent=5 // pred_region
      %s713 = ssub.s32 %s9, 2
      // Predicated region
      $region41: #{_lambda_.13} parent=39 // pred_check
        %p714 = pneg %p106
      $region42: #{_lambda_.13} parent=39 // pred_check_branch
        %716 = sbr.rel (%p714) target = $region44
      $region43: #{_lambda_.13} parent=39 // pred_region
        %p717 = scmp.lt.s32.totalorder %s15, 1
        %s718 = scalar_select %p717, %s15, 1
        %s719 = smul.addr %s718, 3
        %s720 = smul.addr %s719, 4
        %s721 = scalar_lea.vmem %s3, %s720
      $region44: #{_lambda_.13} parent=39 // pred_fallthru
        _
    $region40: #{_lambda_.13} parent=5 // pred_fallthru
      _
  $region6: #{_lambda_.13} parent=0 // loop_footer
    %s13 = sadd.s32 1, %s9
  $region7: #{_lambda_.13} parent=0 // loop_footer_branch
    %8 = sbr.rel target = $region3
  $region8: #{_lambda_.13} parent=0 // loop_exit
    _

// kernel: _lambda_.15
$region0: #{_lambda_.15}
  #allocation0 [shape = 'u32[]', space=smem, size = 0x4, offset = 0x4, fixed_abs, tag = 'smem constant byte address 0x4 - core index']
  #allocation1 [shape = 'u32[144,128]{1,0:T(1,128)}', space=vmem, size = 0x12000, scoped, tag = 'internal scratch']
  %s0 = inlined_call_operand.vmem [shape: bf16[2,40,256], index: 0, kind: input, shape index: {}]
  %s1 = inlined_call_operand.vmem [shape: bf16[4,256,128], index: 1, kind: input, shape index: {}]
  %s2 = inlined_call_operand.vmem [shape: f32[1,128], index: 2, kind: input, shape index: {}]
  %s3 = inlined_call_operand.vmem [shape: f32[2,16,128], index: 3, kind: output, shape index: {}]
  %s4 = sld [smem:[#allocation0]]
  $region45: #{_lambda_.15} parent=0
    _
  %s6 = ssub.s32 1, %s4
  %s7 = scalar_select 0, %s6, %s4
  loop: start=0, step=1, limit=4
  $region2: #{_lambda_.15} parent=0 // loop_pre_header
    _
  $region3: #{_lambda_.15} parent=0 // loop_header
    %s9 = sphi 0, %s13
    %p10 = scmp.ge.s32.totalorder %s9, 4
    %s19 = sphi 0, %s21
    %s22 = sphi 0, %s19
    %s23 = sphi 0, %s22
    %s39 = sphi 0, %s23
    %s43 = sphi 0, %s43
    %s45 = sphi 0, %s43
    %s46 = sphi 0, %s45
    %s60 = sphi 0, %s46
    %s64 = sphi 0, %s64
    %s66 = sphi 0, %s64
    %s67 = sphi 0, %s66
    %s81 = sphi 0, %s67
    %s87 = sphi 0, %s89
    %s90 = sphi 0, %s87
    %s91 = sphi 0, %s90
    %s107 = sphi 0, %s91
  $region4: #{_lambda_.15} parent=0 // loop_header_branch
    %12 = sbr.rel (%p10) target = $region8
  $region5: #{_lambda_.15} parent=0 // loop_body
    %s14 = ssub.s32 %s9, 1
    %s15 = ssub.s32 %s9, 2
    %s16 = sadd.s32 %s9, 1
    %s17 = ssub.s32 %s9, %s16
    %p18 = scmp.eq.s32.totalorder %s17, 0
    %s20 = sadd.s32 %s19, 1
    %s21 = scalar_select %p18, %s19, %s20
    %p24 = pneg %p18
    %p25 = scmp.eq.s32.totalorder %s9, 1
    %p26 = por %p24, %p25
    %p27 = scmp.ne.s32.totalorder %s19, %s22
    %p28 = scmp.eq.s32.totalorder %s9, 0
    %p29 = por %p27, %p28
    %p30 = scmp.ne.s32.totalorder %s19, %s22
    %p31 = scmp.eq.s32.totalorder %s14, 1
    %p32 = por %p30, %p31
    %p33 = scmp.ne.s32.totalorder %s22, %s23
    %p34 = scmp.eq.s32.totalorder %s14, 0
    %p35 = por %p33, %p34
    %p36 = scmp.ne.s32.totalorder %s22, %s23
    %p37 = scmp.eq.s32.totalorder %s15, 1
    %p38 = por %p36, %p37
    %p40 = scmp.ne.s32.totalorder %s23, %s39
    %p41 = scmp.eq.s32.totalorder %s15, 0
    %p42 = por %p40, %p41
    %s44 = sadd.s32 %s43, 1
    %p47 = scmp.eq.s32.totalorder %s9, 1
    %p48 = scmp.ne.s32.totalorder %s43, %s45
    %p49 = scmp.eq.s32.totalorder %s9, 0
    %p50 = por %p48, %p49
    %p51 = scmp.ne.s32.totalorder %s43, %s45
    %p52 = scmp.eq.s32.totalorder %s14, 1
    %p53 = por %p51, %p52
    %p54 = scmp.ne.s32.totalorder %s45, %s46
    %p55 = scmp.eq.s32.totalorder %s14, 0
    %p56 = por %p54, %p55
    %p57 = scmp.ne.s32.totalorder %s45, %s46
    %p58 = scmp.eq.s32.totalorder %s15, 1
    %p59 = por %p57, %p58
    %p61 = scmp.ne.s32.totalorder %s46, %s60
    %p62 = scmp.eq.s32.totalorder %s15, 0
    %p63 = por %p61, %p62
    %s65 = sadd.s32 %s64, 1
    %p68 = scmp.eq.s32.totalorder %s9, 1
    %p69 = scmp.ne.s32.totalorder %s64, %s66
    %p70 = scmp.eq.s32.totalorder %s9, 0
    %p71 = por %p69, %p70
    %p72 = scmp.ne.s32.totalorder %s64, %s66
    %p73 = scmp.eq.s32.totalorder %s14, 1
    %p74 = por %p72, %p73
    %p75 = scmp.ne.s32.totalorder %s66, %s67
    %p76 = scmp.eq.s32.totalorder %s14, 0
    %p77 = por %p75, %p76
    %p78 = scmp.ne.s32.totalorder %s66, %s67
    %p79 = scmp.eq.s32.totalorder %s15, 1
    %p80 = por %p78, %p79
    %p82 = scmp.ne.s32.totalorder %s67, %s81
    %p83 = scmp.eq.s32.totalorder %s15, 0
    %p84 = por %p82, %p83
    %s85 = ssub.s32 %s9, %s16
    %p86 = scmp.eq.s32.totalorder %s85, 0
    %s88 = sadd.s32 %s87, 1
    %s89 = scalar_select %p86, %s87, %s88
    %p92 = pneg %p86
    %p93 = scmp.eq.s32.totalorder %s9, 1
    %p94 = por %p92, %p93
    %p95 = scmp.ne.s32.totalorder %s87, %s90
    %p96 = scmp.eq.s32.totalorder %s9, 0
    %p97 = por %p95, %p96
    %p98 = scmp.ne.s32.totalorder %s87, %s90
    %p99 = scmp.eq.s32.totalorder %s14, 1
    %p100 = por %p98, %p99
    %p101 = scmp.ne.s32.totalorder %s90, %s91
    %p102 = scmp.eq.s32.totalorder %s14, 0
    %p103 = por %p101, %p102
    %p104 = scmp.ne.s32.totalorder %s90, %s91
    %p105 = scmp.eq.s32.totalorder %s15, 1
    %p106 = por %p104, %p105
    %p108 = scmp.ne.s32.totalorder %s91, %s107
    %p109 = scmp.eq.s32.totalorder %s15, 0
    %p110 = por %p108, %p109
    %p111 = scmp.le.s32.totalorder 1, %s9
    %p112 = scmp.lt.s32.totalorder %s9, 3
    %p113 = pnand %p111, %p112
    %p114 = pneg %p113
    // Predicated region
    $region9: #{_lambda_.15} parent=5 // pred_check
      _
    $region10: #{_lambda_.15} parent=5 // pred_check_branch
      %116 = sbr.rel (%p113) target = $region12
    $region11: #{_lambda_.15} parent=5 // pred_region
      %s117 = ssub.s32 %s9, 1
      // Predicated region
      $region13: #{_lambda_.15} parent=11 // pred_check
        %p118 = pneg %p56
      $region14: #{_lambda_.15} parent=11 // pred_check_branch
        %120 = sbr.rel (%p118) target = $region16
      $region15: #{_lambda_.15} parent=11 // pred_region
        _
      $region16: #{_lambda_.15} parent=11 // pred_fallthru
        _
      // Predicated region
      $region17: #{_lambda_.15} parent=11 // pred_check
        %p121 = pneg %p77
      $region18: #{_lambda_.15} parent=11 // pred_check_branch
        %123 = sbr.rel (%p121) target = $region20
      $region19: #{_lambda_.15} parent=11 // pred_region
        _
      $region20: #{_lambda_.15} parent=11 // pred_fallthru
        _
    $region12: #{_lambda_.15} parent=5 // pred_fallthru
      _
    %p124 = scmp.lt.s32.totalorder %s9, 2
    // Predicated region
    $region21: #{_lambda_.15} parent=5 // pred_check
      %p125 = pneg %p124
    $region22: #{_lambda_.15} parent=5 // pred_check_branch
      %127 = sbr.rel (%p125) target = $region24
    $region23: #{_lambda_.15} parent=5 // pred_region
      // Predicated region
      $region25: #{_lambda_.15} parent=23 // pred_check
        %p128 = pneg %p29
      $region26: #{_lambda_.15} parent=23 // pred_check_branch
        %130 = sbr.rel (%p128) target = $region28
      $region27: #{_lambda_.15} parent=23 // pred_region
        %p131 = scmp.lt.s32.totalorder %s9, 1
        %s132 = scalar_select %p131, %s9, 1
        %s133 = smul.addr %s132, 10
        %s134 = smul.addr %s133, 4
        %s135 = scalar_lea.vmem %s0, %s134
      $region28: #{_lambda_.15} parent=23 // pred_fallthru
        _
    $region24: #{_lambda_.15} parent=5 // pred_fallthru
      _
    %p136 = scmp.le.s32.totalorder 1, %s9
    %p137 = scmp.lt.s32.totalorder %s9, 3
    %p138 = pnand %p136, %p137
    %p139 = pneg %p138
    // Predicated region
    $region29: #{_lambda_.15} parent=5 // pred_check
      _
    $region30: #{_lambda_.15} parent=5 // pred_check_branch
      %141 = sbr.rel (%p138) target = $region32
    $region31: #{_lambda_.15} parent=5 // pred_region
      %s142 = ssub.s32 %s9, 1
      %p143 = scmp.lt.s32.totalorder %s14, 1
      %s144 = scalar_select %p143, %s14, 1
      %s145 = smul.addr %s144, 10
      %s146 = smul.addr %s145, 4
      %s147 = scalar_lea.vmem %s0, %s146
      %p148 = pneg %p35
      %p149 = pneg %p32
      %p150 = pneg %p56
      %p151 = pneg %p53
      %p152 = pneg %p77
      %p153 = pneg %p74
      %p154 = pneg %p103
      %p155 = pneg %p100
      %p156 = scmp.lt.s32.totalorder %s14, 1
      %s157 = scalar_select %p156, %s14, 1
      %s158 = smul.addr %s157, 2
      %s159 = smul.addr %s158, 8
      %s160 = scalar_lea.vmem %s3, %s159
      %p161 = scmp.lt.s32.totalorder %s14, 1
      %s162 = scalar_select %p161, %s14, 1
      %s163 = smul.addr %s162, 10
      %s164 = smul.addr %s163, 4
      %s165 = scalar_lea.vmem %s0, %s164
      %p166 = scmp.lt.s32.totalorder %s14, 1
      %s167 = scalar_select %p166, %s14, 1
      %s168 = smul.addr %s167, 2
      %s169 = smul.addr %s168, 8
      %s170 = scalar_lea.vmem %s3, %s169
      %v172 = vld [vmem:[%s165] sm:$0xff]
      %v173 = vld [vmem:[%s165 + $0x8] sm:$0xff]
      %v174 = vld [vmem:[%s1] sm:$0xf]
      %v175 = vld [vmem:[%s1 + $0x4] sm:$0xf]
      %v176 = vld [vmem:[%s1 + $0x8] sm:$0xf]
      %v177 = vld [vmem:[%s1 + $0xc] sm:$0xf]
      %v178 = vld [vmem:[%s1 + $0x10] sm:$0xf]
      %v179 = vld [vmem:[%s1 + $0x14] sm:$0xf]
      %v180 = vld [vmem:[%s1 + $0x18] sm:$0xf]
      %v181 = vld [vmem:[%s1 + $0x1c] sm:$0xf]
      %v182 = vld [vmem:[%s1 + $0x20] sm:$0xf]
      %v183 = vld [vmem:[%s1 + $0x24] sm:$0xf]
      %v184 = vld [vmem:[%s1 + $0x28] sm:$0xf]
      %v185 = vld [vmem:[%s1 + $0x2c] sm:$0xf]
      %v186 = vld [vmem:[%s1 + $0x30] sm:$0xf]
      %v187 = vld [vmem:[%s1 + $0x34] sm:$0xf]
      %v188 = vld [vmem:[%s1 + $0x38] sm:$0xf]
      %v189 = vld [vmem:[%s1 + $0x3c] sm:$0xf]
      %v190 = vld [vmem:[%s1 + $0x40] sm:$0xf]
      %v191 = vld [vmem:[%s1 + $0x44] sm:$0xf]
      %v192 = vld [vmem:[%s1 + $0x48] sm:$0xf]
      %v193 = vld [vmem:[%s1 + $0x4c] sm:$0xf]
      %v194 = vld [vmem:[%s1 + $0x50] sm:$0xf]
      %v195 = vld [vmem:[%s1 + $0x54] sm:$0xf]
      %v196 = vld [vmem:[%s1 + $0x58] sm:$0xf]
      %v197 = vld [vmem:[%s1 + $0x5c] sm:$0xf]
      %v198 = vld [vmem:[%s1 + $0x60] sm:$0xf]
      %v199 = vld [vmem:[%s1 + $0x64] sm:$0xf]
      %v200 = vld [vmem:[%s1 + $0x68] sm:$0xf]
      %v201 = vld [vmem:[%s1 + $0x6c] sm:$0xf]
      %v202 = vld [vmem:[%s1 + $0x70] sm:$0xf]
      %v203 = vld [vmem:[%s1 + $0x74] sm:$0xf]
      %v204 = vld [vmem:[%s1 + $0x78] sm:$0xf]
      %v205 = vld [vmem:[%s1 + $0x7c] sm:$0xf]
      %v206 = vld [vmem:[%s165 + $0x10] sm:$0xff]
      %s207 = scalar_lea.vmem %s1, 128
      %v208 = vld [vmem:[%s207] sm:$0xf]
      %v209 = vld [vmem:[%s207 + $0x4] sm:$0xf]
      %v210 = vld [vmem:[%s207 + $0x8] sm:$0xf]
      %v211 = vld [vmem:[%s207 + $0xc] sm:$0xf]
      %v212 = vld [vmem:[%s207 + $0x10] sm:$0xf]
      %v213 = vld [vmem:[%s207 + $0x14] sm:$0xf]
      %v214 = vld [vmem:[%s207 + $0x18] sm:$0xf]
      %v215 = vld [vmem:[%s207 + $0x1c] sm:$0xf]
      %v216 = vld [vmem:[%s207 + $0x20] sm:$0xf]
      %v217 = vld [vmem:[%s207 + $0x24] sm:$0xf]
      %v218 = vld [vmem:[%s207 + $0x28] sm:$0xf]
      %v219 = vld [vmem:[%s207 + $0x2c] sm:$0xf]
      %v220 = vld [vmem:[%s207 + $0x30] sm:$0xf]
      %v221 = vld [vmem:[%s207 + $0x34] sm:$0xf]
      %v222 = vld [vmem:[%s207 + $0x38] sm:$0xf]
      %v223 = vld [vmem:[%s207 + $0x3c] sm:$0xf]
      %v224 = vld [vmem:[%s207 + $0x40] sm:$0xf]
      %v225 = vld [vmem:[%s207 + $0x44] sm:$0xf]
      %v226 = vld [vmem:[%s207 + $0x48] sm:$0xf]
      %v227 = vld [vmem:[%s207 + $0x4c] sm:$0xf]
      %v228 = vld [vmem:[%s207 + $0x50] sm:$0xf]
      %v229 = vld [vmem:[%s207 + $0x54] sm:$0xf]
      %v230 = vld [vmem:[%s207 + $0x58] sm:$0xf]
      %v231 = vld [vmem:[%s207 + $0x5c] sm:$0xf]
      %v232 = vld [vmem:[%s207 + $0x60] sm:$0xf]
      %v233 = vld [vmem:[%s207 + $0x64] sm:$0xf]
      %v234 = vld [vmem:[%s207 + $0x68] sm:$0xf]
      %v235 = vld [vmem:[%s207 + $0x6c] sm:$0xf]
      %v236 = vld [vmem:[%s207 + $0x70] sm:$0xf]
      %v237 = vld [vmem:[%s207 + $0x74] sm:$0xf]
      %v238 = vld [vmem:[%s207 + $0x78] sm:$0xf]
      %v239 = vld [vmem:[%s207 + $0x7c] sm:$0xf]
      %v242 = vunpack.c.l.b16 %v173
      %v243 = vunpack.c.h.b16 %v173
      %v244 = vunpack.c.l.b16 %v206
      %v245 = vunpack.c.h.b16 %v206
      %v246 = vpack.c.b16 %v244, %v242
      %v247 = vpack.c.b16 %v245, %v243
      %v282 = vunpack.c.l.b16 %v208
      %v283 = vunpack.c.l.b16 %v209
      %v284 = vunpack.c.l.b16 %v210
      %v285 = vunpack.c.l.b16 %v211
      %v286 = vunpack.c.l.b16 %v212
      %v287 = vunpack.c.l.b16 %v213
      %v288 = vunpack.c.l.b16 %v214
      %v289 = vunpack.c.l.b16 %v215
      %v290 = vunpack.c.l.b16 %v216
      %v291 = vunpack.c.l.b16 %v217
      %v292 = vunpack.c.l.b16 %v218
      %v293 = vunpack.c.l.b16 %v219
      %v294 = vunpack.c.l.b16 %v220
      %v295 = vunpack.c.l.b16 %v221
      %v296 = vunpack.c.l.b16 %v222
      %v297 = vunpack.c.l.b16 %v223
      %v298 = vunpack.c.l.b16 %v224
      %v299 = vunpack.c.l.b16 %v225
      %v300 = vunpack.c.l.b16 %v226
      %v301 = vunpack.c.l.b16 %v227
      %v302 = vunpack.c.l.b16 %v228
      %v303 = vunpack.c.l.b16 %v229
      %v304 = vunpack.c.l.b16 %v230
      %v305 = vunpack.c.l.b16 %v231
      %v306 = vunpack.c.l.b16 %v232
      %v307 = vunpack.c.l.b16 %v233
      %v308 = vunpack.c.l.b16 %v234
      %v309 = vunpack.c.l.b16 %v235
      %v310 = vunpack.c.l.b16 %v236
      %v311 = vunpack.c.l.b16 %v237
      %v312 = vunpack.c.l.b16 %v238
      %v313 = vunpack.c.l.b16 %v239
      %v314 = vpack.c.b16 %v283, %v282
      %v315 = vpack.c.b16 %v285, %v284
      %v316 = vpack.c.b16 %v287, %v286
      %v317 = vpack.c.b16 %v289, %v288
      %v318 = vpack.c.b16 %v291, %v290
      %v319 = vpack.c.b16 %v293, %v292
      %v320 = vpack.c.b16 %v295, %v294
      %v321 = vpack.c.b16 %v297, %v296
      %v322 = vpack.c.b16 %v299, %v298
      %v323 = vpack.c.b16 %v301, %v300
      %v324 = vpack.c.b16 %v303, %v302
      %v325 = vpack.c.b16 %v305, %v304
      %v326 = vpack.c.b16 %v307, %v306
      %v327 = vpack.c.b16 %v309, %v308
      %v328 = vpack.c.b16 %v311, %v310
      %v329 = vpack.c.b16 %v313, %v312
      %346 = vmatprep.subr.bf16.mxu0 0
      %347 = vmatpush1.bf16.msra.mxu0 %v321
      %348 = vmatprep.subr.bf16.mxu0 0
      %349 = vmatpush1.bf16.msra.mxu0 %v320
      %350 = vmatprep.subr.bf16.mxu0 0
      %351 = vmatpush1.bf16.msra.mxu0 %v319
      %352 = vmatprep.subr.bf16.mxu0 0
      %353 = vmatpush1.bf16.msra.mxu0 %v318
      %354 = vmatprep.subr.bf16.mxu0 0
      %355 = vmatpush1.bf16.msra.mxu0 %v317
      %356 = vmatprep.subr.bf16.mxu0 0
      %357 = vmatpush1.bf16.msra.mxu0 %v316
      %358 = vmatprep.subr.bf16.mxu0 0
      %359 = vmatpush1.bf16.msra.mxu0 %v315
      %360 = vmatprep.subr.bf16.mxu0 0
      %361 = vmatpush1.bf16.msra.mxu0 %v314
      %362 = vmatprep.subr.bf16.mxu0 0
      %363 = vmatpush2.bf16.msra.mxu0 %v329
      %364 = vmatprep.subr.bf16.mxu0 0
      %365 = vmatpush2.bf16.msra.mxu0 %v328
      %366 = vmatprep.subr.bf16.mxu0 0
      %367 = vmatpush2.bf16.msra.mxu0 %v327
      %368 = vmatprep.subr.bf16.mxu0 0
      %369 = vmatpush2.bf16.msra.mxu0 %v326
      %370 = vmatprep.subr.bf16.mxu0 0
      %371 = vmatpush2.bf16.msra.mxu0 %v325
      %372 = vmatprep.subr.bf16.mxu0 0
      %373 = vmatpush2.bf16.msra.mxu0 %v324
      %374 = vmatprep.subr.bf16.mxu0 0
      %375 = vmatpush2.bf16.msra.mxu0 %v323
      %376 = vmatprep.subr.bf16.mxu0 0
      %377 = vmatpush2.bf16.msra.mxu0 %v322
      %378 = vmatprep.mubr.bf16.mxu0 %v247
      %379 = vmatmul.mubr.bf16.gmra.mxu0 %v246
      %v380 = vpop.f32.mrf.mxu0
      %v381 = vadd.f32 0.0, %v380
      %v382 = vpop.f32.mrf.mxu0
      %v383 = vpop.f32.mrf.mxu0
      %v384 = vadd.f32 0.0, %v383
      %v385 = vpop.f32.mrf.mxu0
      %386 = vdwg.mxu0
      %v388 = vunpack.c.l.b16 %v172
      %v389 = vunpack.c.h.b16 %v172
      %v390 = vpack.c.b16 %v242, %v388
      %v391 = vpack.c.b16 %v243, %v389
      %v426 = vunpack.c.l.b16 %v174
      %v427 = vunpack.c.l.b16 %v175
      %v428 = vunpack.c.l.b16 %v176
      %v429 = vunpack.c.l.b16 %v177
      %v430 = vunpack.c.l.b16 %v178
      %v431 = vunpack.c.l.b16 %v179
      %v432 = vunpack.c.l.b16 %v180
      %v433 = vunpack.c.l.b16 %v181
      %v434 = vunpack.c.l.b16 %v182
      %v435 = vunpack.c.l.b16 %v183
      %v436 = vunpack.c.l.b16 %v184
      %v437 = vunpack.c.l.b16 %v185
      %v438 = vunpack.c.l.b16 %v186
      %v439 = vunpack.c.l.b16 %v187
      %v440 = vunpack.c.l.b16 %v188
      %v441 = vunpack.c.l.b16 %v189
      %v442 = vunpack.c.l.b16 %v190
      %v443 = vunpack.c.l.b16 %v191
      %v444 = vunpack.c.l.b16 %v192
      %v445 = vunpack.c.l.b16 %v193
      %v446 = vunpack.c.l.b16 %v194
      %v447 = vunpack.c.l.b16 %v195
      %v448 = vunpack.c.l.b16 %v196
      %v449 = vunpack.c.l.b16 %v197
      %v450 = vunpack.c.l.b16 %v198
      %v451 = vunpack.c.l.b16 %v199
      %v452 = vunpack.c.l.b16 %v200
      %v453 = vunpack.c.l.b16 %v201
      %v454 = vunpack.c.l.b16 %v202
      %v455 = vunpack.c.l.b16 %v203
      %v456 = vunpack.c.l.b16 %v204
      %v457 = vunpack.c.l.b16 %v205
      %v458 = vpack.c.b16 %v427, %v426
      %v459 = vpack.c.b16 %v429, %v428
      %v460 = vpack.c.b16 %v431, %v430
      %v461 = vpack.c.b16 %v433, %v432
      %v462 = vpack.c.b16 %v435, %v434
      %v463 = vpack.c.b16 %v437, %v436
      %v464 = vpack.c.b16 %v439, %v438
      %v465 = vpack.c.b16 %v441, %v440
      %v466 = vpack.c.b16 %v443, %v442
      %v467 = vpack.c.b16 %v445, %v444
      %v468 = vpack.c.b16 %v447, %v446
      %v469 = vpack.c.b16 %v449, %v448
      %v470 = vpack.c.b16 %v451, %v450
      %v471 = vpack.c.b16 %v453, %v452
      %v472 = vpack.c.b16 %v455, %v454
      %v473 = vpack.c.b16 %v457, %v456
      %490 = vmatprep.subr.bf16.mxu0 0
      %491 = vmatpush1.bf16.msra.mxu0 %v465
      %492 = vmatprep.subr.bf16.mxu0 0
      %493 = vmatpush1.bf16.msra.mxu0 %v464
      %494 = vmatprep.subr.bf16.mxu0 0
      %495 = vmatpush1.bf16.msra.mxu0 %v463
      %496 = vmatprep.subr.bf16.mxu0 0
      %497 = vmatpush1.bf16.msra.mxu0 %v462
      %498 = vmatprep.subr.bf16.mxu0 0
      %499 = vmatpush1.bf16.msra.mxu0 %v461
      %500 = vmatprep.subr.bf16.mxu0 0
      %501 = vmatpush1.bf16.msra.mxu0 %v460
      %502 = vmatprep.subr.bf16.mxu0 0
      %503 = vmatpush1.bf16.msra.mxu0 %v459
      %504 = vmatprep.subr.bf16.mxu0 0
      %505 = vmatpush1.bf16.msra.mxu0 %v458
      %506 = vmatprep.subr.bf16.mxu0 0
      %507 = vmatpush2.bf16.msra.mxu0 %v473
      %508 = vmatprep.subr.bf16.mxu0 0
      %509 = vmatpush2.bf16.msra.mxu0 %v472
      %510 = vmatprep.subr.bf16.mxu0 0
      %511 = vmatpush2.bf16.msra.mxu0 %v471
      %512 = vmatprep.subr.bf16.mxu0 0
      %513 = vmatpush2.bf16.msra.mxu0 %v470
      %514 = vmatprep.subr.bf16.mxu0 0
      %515 = vmatpush2.bf16.msra.mxu0 %v469
      %516 = vmatprep.subr.bf16.mxu0 0
      %517 = vmatpush2.bf16.msra.mxu0 %v468
      %518 = vmatprep.subr.bf16.mxu0 0
      %519 = vmatpush2.bf16.msra.mxu0 %v467
      %520 = vmatprep.subr.bf16.mxu0 0
      %521 = vmatpush2.bf16.msra.mxu0 %v466
      %522 = vmatprep.mubr.bf16.mxu0 %v391
      %523 = vmatmul.mubr.bf16.gmra.mxu0 %v390
      %v524 = vpop.f32.mrf.mxu0
      %v525 = vadd.f32 %v381, %v524
      %v526 = vpop.f32.mrf.mxu0
      %v527 = vpop.f32.mrf.mxu0
      %v528 = vadd.f32 %v384, %v527
      %v529 = vpop.f32.mrf.mxu0
      %530 = vdwg.mxu0
      %v531 = vld [vmem:[%s165 + $0x10] sm:$0xff]
      %v532 = vld [vmem:[%s165 + $0x18] sm:$0xff]
      %s533 = scalar_lea.vmem %s1, 256
      %v534 = vld [vmem:[%s533] sm:$0xf]
      %v535 = vld [vmem:[%s533 + $0x4] sm:$0xf]
      %v536 = vld [vmem:[%s533 + $0x8] sm:$0xf]
      %v537 = vld [vmem:[%s533 + $0xc] sm:$0xf]
      %v538 = vld [vmem:[%s533 + $0x10] sm:$0xf]
      %v539 = vld [vmem:[%s533 + $0x14] sm:$0xf]
      %v540 = vld [vmem:[%s533 + $0x18] sm:$0xf]
      %v541 = vld [vmem:[%s533 + $0x1c] sm:$0xf]
      %v542 = vld [vmem:[%s533 + $0x20] sm:$0xf]
      %v543 = vld [vmem:[%s533 + $0x24] sm:$0xf]
      %v544 = vld [vmem:[%s533 + $0x28] sm:$0xf]
      %v545 = vld [vmem:[%s533 + $0x2c] sm:$0xf]
      %v546 = vld [vmem:[%s533 + $0x30] sm:$0xf]
      %v547 = vld [vmem:[%s533 + $0x34] sm:$0xf]
      %v548 = vld [vmem:[%s533 + $0x38] sm:$0xf]
      %v549 = vld [vmem:[%s533 + $0x3c] sm:$0xf]
      %v550 = vld [vmem:[%s533 + $0x40] sm:$0xf]
      %v551 = vld [vmem:[%s533 + $0x44] sm:$0xf]
      %v552 = vld [vmem:[%s533 + $0x48] sm:$0xf]
      %v553 = vld [vmem:[%s533 + $0x4c] sm:$0xf]
      %v554 = vld [vmem:[%s533 + $0x50] sm:$0xf]
      %v555 = vld [vmem:[%s533 + $0x54] sm:$0xf]
      %v556 = vld [vmem:[%s533 + $0x58] sm:$0xf]
      %v557 = vld [vmem:[%s533 + $0x5c] sm:$0xf]
      %v558 = vld [vmem:[%s533 + $0x60] sm:$0xf]
      %v559 = vld [vmem:[%s533 + $0x64] sm:$0xf]
      %v560 = vld [vmem:[%s533 + $0x68] sm:$0xf]
      %v561 = vld [vmem:[%s533 + $0x6c] sm:$0xf]
      %v562 = vld [vmem:[%s533 + $0x70] sm:$0xf]
      %v563 = vld [vmem:[%s533 + $0x74] sm:$0xf]
      %v564 = vld [vmem:[%s533 + $0x78] sm:$0xf]
      %v565 = vld [vmem:[%s533 + $0x7c] sm:$0xf]
      %v568 = vunpack.c.l.b16 %v531
      %v569 = vunpack.c.h.b16 %v531
      %v570 = vunpack.c.l.b16 %v532
      %v571 = vunpack.c.h.b16 %v532
      %v572 = vpack.c.b16 %v570, %v568
      %v573 = vpack.c.b16 %v571, %v569
      %v608 = vunpack.c.l.b16 %v534
      %v609 = vunpack.c.l.b16 %v535
      %v610 = vunpack.c.l.b16 %v536
      %v611 = vunpack.c.l.b16 %v537
      %v612 = vunpack.c.l.b16 %v538
      %v613 = vunpack.c.l.b16 %v539
      %v614 = vunpack.c.l.b16 %v540
      %v615 = vunpack.c.l.b16 %v541
      %v616 = vunpack.c.l.b16 %v542
      %v617 = vunpack.c.l.b16 %v543
      %v618 = vunpack.c.l.b16 %v544
      %v619 = vunpack.c.l.b16 %v545
      %v620 = vunpack.c.l.b16 %v546
      %v621 = vunpack.c.l.b16 %v547
      %v622 = vunpack.c.l.b16 %v548
      %v623 = vunpack.c.l.b16 %v549
      %v624 = vunpack.c.l.b16 %v550
      %v625 = vunpack.c.l.b16 %v551
      %v626 = vunpack.c.l.b16 %v552
      %v627 = vunpack.c.l.b16 %v553
      %v628 = vunpack.c.l.b16 %v554
      %v629 = vunpack.c.l.b16 %v555
      %v630 = vunpack.c.l.b16 %v556
      %v631 = vunpack.c.l.b16 %v557
      %v632 = vunpack.c.l.b16 %v558
      %v633 = vunpack.c.l.b16 %v559
      %v634 = vunpack.c.l.b16 %v560
      %v635 = vunpack.c.l.b16 %v561
      %v636 = vunpack.c.l.b16 %v562
      %v637 = vunpack.c.l.b16 %v563
      %v638 = vunpack.c.l.b16 %v564
      %v639 = vunpack.c.l.b16 %v565
      %v640 = vpack.c.b16 %v609, %v608
      %v641 = vpack.c.b16 %v611, %v610
      %v642 = vpack.c.b16 %v613, %v612
      %v643 = vpack.c.b16 %v615, %v614
      %v644 = vpack.c.b16 %v617, %v616
      %v645 = vpack.c.b16 %v619, %v618
      %v646 = vpack.c.b16 %v621, %v620
      %v647 = vpack.c.b16 %v623, %v622
      %v648 = vpack.c.b16 %v625, %v624
      %v649 = vpack.c.b16 %v627, %v626
      %v650 = vpack.c.b16 %v629, %v628
      %v651 = vpack.c.b16 %v631, %v630
      %v652 = vpack.c.b16 %v633, %v632
      %v653 = vpack.c.b16 %v635, %v634
      %v654 = vpack.c.b16 %v637, %v636
      %v655 = vpack.c.b16 %v639, %v638
      %672 = vmatprep.subr.bf16.mxu0 0
      %673 = vmatpush1.bf16.msra.mxu0 %v647
      %674 = vmatprep.subr.bf16.mxu0 0
      %675 = vmatpush1.bf16.msra.mxu0 %v646
      %676 = vmatprep.subr.bf16.mxu0 0
      %677 = vmatpush1.bf16.msra.mxu0 %v645
      %678 = vmatprep.subr.bf16.mxu0 0
      %679 = vmatpush1.bf16.msra.mxu0 %v644
      %680 = vmatprep.subr.bf16.mxu0 0
      %681 = vmatpush1.bf16.msra.mxu0 %v643
      %682 = vmatprep.subr.bf16.mxu0 0
      %683 = vmatpush1.bf16.msra.mxu0 %v642
      %684 = vmatprep.subr.bf16.mxu0 0
      %685 = vmatpush1.bf16.msra.mxu0 %v641
      %686 = vmatprep.subr.bf16.mxu0 0
      %687 = vmatpush1.bf16.msra.mxu0 %v640
      %688 = vmatprep.subr.bf16.mxu0 0
      %689 = vmatpush2.bf16.msra.mxu0 %v655
      %690 = vmatprep.subr.bf16.mxu0 0
      %691 = vmatpush2.bf16.msra.mxu0 %v654
      %692 = vmatprep.subr.bf16.mxu0 0
      %693 = vmatpush2.bf16.msra.mxu0 %v653
      %694 = vmatprep.subr.bf16.mxu0 0
      %695 = vmatpush2.bf16.msra.mxu0 %v652
      %696 = vmatprep.subr.bf16.mxu0 0
      %697 = vmatpush2.bf16.msra.mxu0 %v651
      %698 = vmatprep.subr.bf16.mxu0 0
      %699 = vmatpush2.bf16.msra.mxu0 %v650
      %700 = vmatprep.subr.bf16.mxu0 0
      %701 = vmatpush2.bf16.msra.mxu0 %v649
      %702 = vmatprep.subr.bf16.mxu0 0
      %703 = vmatpush2.bf16.msra.mxu0 %v648
      %704 = vmatprep.mubr.bf16.mxu0 %v573
      %705 = vmatmul.mubr.bf16.gmra.mxu0 %v572
      %v706 = vpop.f32.mrf.mxu0
      %v707 = vadd.f32 0.0, %v706
      %v708 = vpop.f32.mrf.mxu0
      %v709 = vpop.f32.mrf.mxu0
      %v710 = vadd.f32 0.0, %v709
      %v711 = vpop.f32.mrf.mxu0
      %712 = vdwg.mxu0
      %v713 = vadd.f32 %v525, %v707
      %v714 = vadd.f32 %v528, %v710
      %v715 = vld [vmem:[%s165 + $0x18] sm:$0xff]
      %v716 = vld [vmem:[%s165 + $0x20] sm:$0xff]
      %s717 = scalar_lea.vmem %s1, 384
      %v718 = vld [vmem:[%s717] sm:$0xf]
      %v719 = vld [vmem:[%s717 + $0x4] sm:$0xf]
      %v720 = vld [vmem:[%s717 + $0x8] sm:$0xf]
      %v721 = vld [vmem:[%s717 + $0xc] sm:$0xf]
      %v722 = vld [vmem:[%s717 + $0x10] sm:$0xf]
      %v723 = vld [vmem:[%s717 + $0x14] sm:$0xf]
      %v724 = vld [vmem:[%s717 + $0x18] sm:$0xf]
      %v725 = vld [vmem:[%s717 + $0x1c] sm:$0xf]
      %v726 = vld [vmem:[%s717 + $0x20] sm:$0xf]
      %v727 = vld [vmem:[%s717 + $0x24] sm:$0xf]
      %v728 = vld [vmem:[%s717 + $0x28] sm:$0xf]
      %v729 = vld [vmem:[%s717 + $0x2c] sm:$0xf]
      %v730 = vld [vmem:[%s717 + $0x30] sm:$0xf]
      %v731 = vld [vmem:[%s717 + $0x34] sm:$0xf]
      %v732 = vld [vmem:[%s717 + $0x38] sm:$0xf]
      %v733 = vld [vmem:[%s717 + $0x3c] sm:$0xf]
      %v734 = vld [vmem:[%s717 + $0x40] sm:$0xf]
      %v735 = vld [vmem:[%s717 + $0x44] sm:$0xf]
      %v736 = vld [vmem:[%s717 + $0x48] sm:$0xf]
      %v737 = vld [vmem:[%s717 + $0x4c] sm:$0xf]
      %v738 = vld [vmem:[%s717 + $0x50] sm:$0xf]
      %v739 = vld [vmem:[%s717 + $0x54] sm:$0xf]
      %v740 = vld [vmem:[%s717 + $0x58] sm:$0xf]
      %v741 = vld [vmem:[%s717 + $0x5c] sm:$0xf]
      %v742 = vld [vmem:[%s717 + $0x60] sm:$0xf]
      %v743 = vld [vmem:[%s717 + $0x64] sm:$0xf]
      %v744 = vld [vmem:[%s717 + $0x68] sm:$0xf]
      %v745 = vld [vmem:[%s717 + $0x6c] sm:$0xf]
      %v746 = vld [vmem:[%s717 + $0x70] sm:$0xf]
      %v747 = vld [vmem:[%s717 + $0x74] sm:$0xf]
      %v748 = vld [vmem:[%s717 + $0x78] sm:$0xf]
      %v749 = vld [vmem:[%s717 + $0x7c] sm:$0xf]
      %v752 = vunpack.c.l.b16 %v715
      %v753 = vunpack.c.h.b16 %v715
      %v754 = vunpack.c.l.b16 %v716
      %v755 = vunpack.c.h.b16 %v716
      %v756 = vpack.c.b16 %v754, %v752
      %v757 = vpack.c.b16 %v755, %v753
      %v792 = vunpack.c.l.b16 %v718
      %v793 = vunpack.c.l.b16 %v719
      %v794 = vunpack.c.l.b16 %v720
      %v795 = vunpack.c.l.b16 %v721
      %v796 = vunpack.c.l.b16 %v722
      %v797 = vunpack.c.l.b16 %v723
      %v798 = vunpack.c.l.b16 %v724
      %v799 = vunpack.c.l.b16 %v725
      %v800 = vunpack.c.l.b16 %v726
      %v801 = vunpack.c.l.b16 %v727
      %v802 = vunpack.c.l.b16 %v728
      %v803 = vunpack.c.l.b16 %v729
      %v804 = vunpack.c.l.b16 %v730
      %v805 = vunpack.c.l.b16 %v731
      %v806 = vunpack.c.l.b16 %v732
      %v807 = vunpack.c.l.b16 %v733
      %v808 = vunpack.c.l.b16 %v734
      %v809 = vunpack.c.l.b16 %v735
      %v810 = vunpack.c.l.b16 %v736
      %v811 = vunpack.c.l.b16 %v737
      %v812 = vunpack.c.l.b16 %v738
      %v813 = vunpack.c.l.b16 %v739
      %v814 = vunpack.c.l.b16 %v740
      %v815 = vunpack.c.l.b16 %v741
      %v816 = vunpack.c.l.b16 %v742
      %v817 = vunpack.c.l.b16 %v743
      %v818 = vunpack.c.l.b16 %v744
      %v819 = vunpack.c.l.b16 %v745
      %v820 = vunpack.c.l.b16 %v746
      %v821 = vunpack.c.l.b16 %v747
      %v822 = vunpack.c.l.b16 %v748
      %v823 = vunpack.c.l.b16 %v749
      %v824 = vpack.c.b16 %v793, %v792
      %v825 = vpack.c.b16 %v795, %v794
      %v826 = vpack.c.b16 %v797, %v796
      %v827 = vpack.c.b16 %v799, %v798
      %v828 = vpack.c.b16 %v801, %v800
      %v829 = vpack.c.b16 %v803, %v802
      %v830 = vpack.c.b16 %v805, %v804
      %v831 = vpack.c.b16 %v807, %v806
      %v832 = vpack.c.b16 %v809, %v808
      %v833 = vpack.c.b16 %v811, %v810
      %v834 = vpack.c.b16 %v813, %v812
      %v835 = vpack.c.b16 %v815, %v814
      %v836 = vpack.c.b16 %v817, %v816
      %v837 = vpack.c.b16 %v819, %v818
      %v838 = vpack.c.b16 %v821, %v820
      %v839 = vpack.c.b16 %v823, %v822
      %856 = vmatprep.subr.bf16.mxu0 0
      %857 = vmatpush1.bf16.msra.mxu0 %v831
      %858 = vmatprep.subr.bf16.mxu0 0
      %859 = vmatpush1.bf16.msra.mxu0 %v830
      %860 = vmatprep.subr.bf16.mxu0 0
      %861 = vmatpush1.bf16.msra.mxu0 %v829
      %862 = vmatprep.subr.bf16.mxu0 0
      %863 = vmatpush1.bf16.msra.mxu0 %v828
      %864 = vmatprep.subr.bf16.mxu0 0
      %865 = vmatpush1.bf16.msra.mxu0 %v827
      %866 = vmatprep.subr.bf16.mxu0 0
      %867 = vmatpush1.bf16.msra.mxu0 %v826
      %868 = vmatprep.subr.bf16.mxu0 0
      %869 = vmatpush1.bf16.msra.mxu0 %v825
      %870 = vmatprep.subr.bf16.mxu0 0
      %871 = vmatpush1.bf16.msra.mxu0 %v824
      %872 = vmatprep.subr.bf16.mxu0 0
      %873 = vmatpush2.bf16.msra.mxu0 %v839
      %874 = vmatprep.subr.bf16.mxu0 0
      %875 = vmatpush2.bf16.msra.mxu0 %v838
      %876 = vmatprep.subr.bf16.mxu0 0
      %877 = vmatpush2.bf16.msra.mxu0 %v837
      %878 = vmatprep.subr.bf16.mxu0 0
      %879 = vmatpush2.bf16.msra.mxu0 %v836
      %880 = vmatprep.subr.bf16.mxu0 0
      %881 = vmatpush2.bf16.msra.mxu0 %v835
      %882 = vmatprep.subr.bf16.mxu0 0
      %883 = vmatpush2.bf16.msra.mxu0 %v834
      %884 = vmatprep.subr.bf16.mxu0 0
      %885 = vmatpush2.bf16.msra.mxu0 %v833
      %886 = vmatprep.subr.bf16.mxu0 0
      %887 = vmatpush2.bf16.msra.mxu0 %v832
      %888 = vmatprep.mubr.bf16.mxu0 %v757
      %889 = vmatmul.mubr.bf16.gmra.mxu0 %v756
      %v890 = vpop.f32.mrf.mxu0
      %v891 = vadd.f32 0.0, %v890
      %v892 = vpop.f32.mrf.mxu0
      %v893 = vpop.f32.mrf.mxu0
      %v894 = vadd.f32 0.0, %v893
      %v895 = vpop.f32.mrf.mxu0
      %896 = vdwg.mxu0
      %v897 = vadd.f32 %v713, %v891
      %v898 = vadd.f32 %v714, %v894
      %v899 = vld [vmem:[%s2] sm:$0x1]
      %v901 = vlaneseq
      %v902 = vshrl.u32 %v901, 7
      %v903 = vsub.s32 0, %v902
      %v904 = vrot.slane %v899, %v903
      %v906 = vadd.f32 %v897, %v904
      %v907 = vadd.f32 %v898, %v904
      %908 = vst [vmem:[%s170] sm:$0xff] %v906
      %909 = vst [vmem:[%s170 + $0x8] sm:$0xff] %v907
      %p910 = scmp.lt.s32.totalorder %s14, 1
      %s911 = scalar_select %p910, %s14, 1
      %s912 = smul.addr %s911, 2
      %s913 = smul.addr %s912, 8
      %s914 = scalar_lea.vmem %s3, %s913
      // Predicated region
      $region33: #{_lambda_.15} parent=31 // pred_check
        %p915 = pneg %p100
      $region34: #{_lambda_.15} parent=31 // pred_check_branch
        %917 = sbr.rel (%p915) target = $region36
      $region35: #{_lambda_.15} parent=31 // pred_region
        _
      $region36: #{_lambda_.15} parent=31 // pred_fallthru
        _
    $region32: #{_lambda_.15} parent=5 // pred_fallthru
      _
    %p918 = scmp.le.s32.totalorder 2, %s9
    // Predicated region
    $region37: #{_lambda_.15} parent=5 // pred_check
      %p919 = pneg %p918
    $region38: #{_lambda_.15} parent=5 // pred_check_branch
      %921 = sbr.rel (%p919) target = $region40
    $region39: #{_lambda_.15} parent=5 // pred_region
      %s922 = ssub.s32 %s9, 2
      // Predicated region
      $region41: #{_lambda_.15} parent=39 // pred_check
        %p923 = pneg %p106
      $region42: #{_lambda_.15} parent=39 // pred_check_branch
        %925 = sbr.rel (%p923) target = $region44
      $region43: #{_lambda_.15} parent=39 // pred_region
        %p926 = scmp.lt.s32.totalorder %s15, 1
        %s927 = scalar_select %p926, %s15, 1
        %s928 = smul.addr %s927, 2
        %s929 = smul.addr %s928, 8
        %s930 = scalar_lea.vmem %s3, %s929
      $region44: #{_lambda_.15} parent=39 // pred_fallthru
        _
    $region40: #{_lambda_.15} parent=5 // pred_fallthru
      _
  $region6: #{_lambda_.15} parent=0 // loop_footer
    %s13 = sadd.s32 1, %s9
  $region7: #{_lambda_.15} parent=0 // loop_footer_branch
    %8 = sbr.rel target = $region3
  $region8: #{_lambda_.15} parent=0 // loop_exit
    _

</llo_original>
